<compile_context>
chip_gen: v7x
topology: tpu7x:2x2x1
jax: 0.10.0
libtpu: 0.0.40
codegen_flags: <defaults>
</compile_context>

<pallas_src>
import functools

import jax
import jax.numpy as jnp
from jax.experimental import pallas as pl
from jax.experimental.pallas import tpu as pltpu


# ---------------------------------------------------------------------------
# Fused 4-layer encoder kernel (one grid step == one block of `bb` samples).
# ---------------------------------------------------------------------------
def _encoder_fused_kernel(p0_ref, w0_ref, b0_ref,
                          w1_ref, b1_ref, w2_ref, b2_ref, w3_ref, b3_ref,
                          out_ref, a1_ref, a2_ref, a3_ref, vt_ref,
                          *, dims, bb):
    (oh0, ow0), (oh1, ow1), (oh2, ow2), (oh3, ow3) = dims
    S = ow0                              # row stride shared by every plane
    co = out_ref.shape[1]                # 32
    L1 = (oh1 - 1) * S + ow1             # plane extents (wrap cols never needed
    L2 = (oh2 - 1) * S + ow2             #  by valid downstream positions)
    L3 = (oh3 - 1) * S + ow3
    P = oh3 * ow3
    P8 = vt_ref.shape[0]                 # P rounded up to a multiple of 8

    def shift_gemm_relu(src_ref, w_ref, b_ref, L):
        # Full-plane shift-GEMM: nine (L, ci) @ (ci, co) MXU dots, f32 accumulate,
        # bias-add + ReLU in f32.  src_ref holds a bf16 flat plane of row stride S.
        acc = None
        for kh in range(3):
            for kw in range(3):
                t = kh * 3 + kw
                x = src_ref[pl.ds(kh * S + kw, L), :]          # (L, ci)  bf16
                w_t = w_ref[pl.ds(t * co, co), :]              # (ci, co) bf16
                d = jnp.dot(x, w_t, preferred_element_type=jnp.float32)
                acc = d if acc is None else acc + d
        return jnp.maximum(acc + b_ref[...], 0.0)              # (L, co) f32

    # Zero the (tiny) repack scratch once so its padding rows are defined.
    vt_ref[...] = jnp.zeros_like(vt_ref)

    for b in range(bb):
        # ---- layer 0 (stride 2): one MXU GEMM over pre-gathered patches ----
        # (obs/255 - 0.5 is already folded into w0/b0.)
        y0 = jnp.dot(p0_ref[b], w0_ref[...], preferred_element_type=jnp.float32)
        a1_ref[...] = jnp.maximum(y0 + b0_ref[...], 0.0).astype(a1_ref.dtype)

        # ---- layers 1..3 (stride 1): full-plane shift-GEMMs ----------------
        a2_ref[...] = shift_gemm_relu(a1_ref, w1_ref, b1_ref, L1).astype(a2_ref.dtype)
        a3_ref[...] = shift_gemm_relu(a2_ref, w2_ref, b2_ref, L2).astype(a3_ref.dtype)
        p3 = shift_gemm_relu(a3_ref, w3_ref, b3_ref, L3)        # (L3, co) f32

        # ---- drop wrap columns, transpose once -> channel-major output ----
        for i in range(oh3):
            vt_ref[pl.ds(i * ow3, ow3), :] = p3[i * S:i * S + ow3, :]
        out_cm = vt_ref[...].T                                   # (co, P8)
        out_ref[b, :, :] = out_cm[:, :P].astype(out_ref.dtype)


# ---------------------------------------------------------------------------
# Plain-JAX glue (gather / transpose only, no math).
# ---------------------------------------------------------------------------
def _torch_w_to_matrix(w_oihw):
    """(CO, CI, KH, KW) -> (KH*KW*CI, CO).

    Doubles as (a) the im2col weight matrix for layer 0 and (b) the tap-major
    weight slab for layers 1-3 (rows [t*CI, (t+1)*CI) hold tap t's (ci, co))."""
    co = w_oihw.shape[0]
    return jnp.transpose(w_oihw, (2, 3, 1, 0)).reshape(-1, co)


def _im2col_stride2(x_nhwc, k=3, stride=2):
    n, h, w, c = x_nhwc.shape
    oh = (h - k) // stride + 1
    ow = (w - k) // stride + 1
    cols = []
    for kh in range(k):
        for kw in range(k):
            cols.append(x_nhwc[:, kh:kh + stride * (oh - 1) + 1:stride,
                                  kw:kw + stride * (ow - 1) + 1:stride, :])
    patches = jnp.concatenate(cols, axis=-1)                    # (N, OH, OW, 9*C)
    return patches.reshape(n, oh * ow, k * k * c), oh, ow


# ---------------------------------------------------------------------------
# Encoder forward: obs/255 - 0.5 -> 4x (conv3x3 + ReLU) -> flatten (NCHW order)
# ---------------------------------------------------------------------------
def encoder_forward(obs_nchw, params, *, block_b=None):
    (w0, b0), (w1, b1), (w2, b2), (w3, b3) = params
    n = obs_nchw.shape[0]
    co = w0.shape[0]

    x = jnp.transpose(obs_nchw, (0, 2, 3, 1))                   # NCHW -> NHWC
    patches0, oh0, ow0 = _im2col_stride2(x)                     # (N, oh0*ow0, 9*C)
    patches0 = patches0.astype(jnp.bfloat16)                    # narrow HBM stream
    oh1, ow1 = oh0 - 2, ow0 - 2
    oh2, ow2 = oh1 - 2, ow1 - 2
    oh3, ow3 = oh2 - 2, ow2 - 2
    k0 = patches0.shape[-1]

    # Fold obs/255 - 0.5 into layer-0 weights / bias (exact identity).
    w0m = _torch_w_to_matrix(w0)                                # (9*C, CO) f32
    w0f = (w0m * (1.0 / 255.0)).astype(jnp.bfloat16)
    b0f = (b0 - 0.5 * jnp.sum(w0m, axis=0)).reshape(1, co).astype(jnp.float32)

    # Layers 1-3: single lane/sublane-friendly bf16 weight slab per layer.
    w1s = _torch_w_to_matrix(w1).astype(jnp.bfloat16)           # (9*32, 32)
    w2s = _torch_w_to_matrix(w2).astype(jnp.bfloat16)
    w3s = _torch_w_to_matrix(w3).astype(jnp.bfloat16)
    b1r = b1.reshape(1, co).astype(jnp.float32)
    b2r = b2.reshape(1, co).astype(jnp.float32)
    b3r = b3.reshape(1, co).astype(jnp.float32)

    # Batch block: amortize per-grid-step overhead, but keep >= 2 grid steps
    # so both TensorCores (v7x) / megacore get work when possible.
    if block_b is None:
        block_b = 1
        for cand in (8, 4, 2):
            if n % cand == 0 and n // cand >= 2:
                block_b = cand
                break
    assert n % block_b == 0

    S = ow0
    L1 = (oh1 - 1) * S + ow1
    L2 = (oh2 - 1) * S + ow2
    P = oh3 * ow3
    P8 = -(-P // 8) * 8

    dims = ((oh0, ow0), (oh1, ow1), (oh2, ow2), (oh3, ow3))
    kernel = functools.partial(_encoder_fused_kernel, dims=dims, bb=block_b)

    out = pl.pallas_call(
        kernel,
        out_shape=jax.ShapeDtypeStruct((n, co, P), jnp.float32),
        grid_spec=pltpu.PrefetchScalarGridSpec(
            num_scalar_prefetch=0,
            grid=(n // block_b,),
            in_specs=[
                pl.BlockSpec((block_b, oh0 * ow0, k0), lambda i: (i, 0, 0)),  # patches
                pl.BlockSpec((k0, co), lambda i: (0, 0)),                     # W0 (folded, bf16)
                pl.BlockSpec((1, co), lambda i: (0, 0)),                      # b0 (folded, f32)
                pl.BlockSpec((9 * co, co), lambda i: (0, 0)),                 # W1 slab (bf16)
                pl.BlockSpec((1, co), lambda i: (0, 0)),                      # b1
                pl.BlockSpec((9 * co, co), lambda i: (0, 0)),                 # W2 slab
                pl.BlockSpec((1, co), lambda i: (0, 0)),                      # b2
                pl.BlockSpec((9 * co, co), lambda i: (0, 0)),                 # W3 slab
                pl.BlockSpec((1, co), lambda i: (0, 0)),                      # b3
            ],
            out_specs=pl.BlockSpec((block_b, co, P), lambda i: (i, 0, 0)),    # channel-major
            scratch_shapes=[
                pltpu.VMEM((oh0 * ow0, co), jnp.bfloat16),   # plane after layer 0
                pltpu.VMEM((L1, co), jnp.bfloat16),          # plane after layer 1
                pltpu.VMEM((L2, co), jnp.bfloat16),          # plane after layer 2
                pltpu.VMEM((P8, co), jnp.float32),           # valid-row repack buffer
            ],
        ),
        compiler_params=pltpu.CompilerParams(
            dimension_semantics=("parallel",),
            vmem_limit_bytes=32 * 1024 * 1024,
        ),
    )(patches0, w0f, b0f, w1s, b1r, w2s, b2r, w3s, b3r)

    # Output is already channel-major per sample -> torch's h.view(N, -1) is free.
    return out.reshape(n, co * P)


# ---------------------------------------------------------------------------
# Pure-JAX reference (for a correctness sanity check) and param init.
# ---------------------------------------------------------------------------
def encoder_reference(obs_nchw, params):
    x = obs_nchw / 255.0 - 0.5
    strides = ((2, 2), (1, 1), (1, 1), (1, 1))
    for (wl, bl), s in zip(params, strides):
        x = jax.lax.conv_general_dilated(
            x, wl, window_strides=s, padding="VALID",
            dimension_numbers=("NCHW", "OIHW", "NCHW"))
        x = jnp.maximum(x + bl[None, :, None, None], 0.0)
    return x.reshape(x.shape[0], -1)


def init_encoder_params(key, in_channels, num_filters=32):
    # TODO(synk): module uses orthogonal weight_init; deterministic normal
    # init is used here since this is not a checkpoint load.
    params = []
    cin = in_channels
    for _ in range(4):
        key, kw_key, kb_key = jax.random.split(key, 3)
        wl = 0.05 * jax.random.normal(kw_key, (num_filters, cin, 3, 3), jnp.float32)
        bl = 0.01 * jax.random.normal(kb_key, (num_filters,), jnp.float32)
        params.append((wl, bl))
        cin = num_filters
    return params


if __name__ == "__main__":
    key = jax.random.PRNGKey(0)
    k_obs, k_par = jax.random.split(key)

    # NCHW obs, 3x3 convs, strides (2,1,1,1): spatial 24 -> 11 -> 9 -> 7 -> 5.
    N, C, H, W = 2, 4, 24, 24
    obs = jax.random.uniform(k_obs, (N, C, H, W), jnp.float32, 0.0, 255.0)
    params = init_encoder_params(k_par, C)

    fwd = jax.jit(encoder_forward)
    h = fwd(obs, params)
    jax.block_until_ready(h)

    assert h.shape == (N, 32 * 5 * 5), h.shape

    # Sanity check vs pure-JAX f32 reference (loose tol: bf16 weights/acts).
    h_ref = encoder_reference(obs, params)
    err = float(jnp.max(jnp.abs(h - h_ref)))
    assert err < 5e-2, f"max abs err {err}"

    print("KERNEL_OK")
</pallas_src>

<mosaic_0001>
module attributes {stable_mosaic.version = 11 : i64} {
  func.func @_encoder_fused_kernel(%arg0: i32, %arg1: memref<1x121x36xbf16, #tpu.memory_space<vmem>>, %arg2: memref<36x32xbf16, #tpu.memory_space<vmem>>, %arg3: memref<1x32xf32, #tpu.memory_space<vmem>>, %arg4: memref<288x32xbf16, #tpu.memory_space<vmem>>, %arg5: memref<1x32xf32, #tpu.memory_space<vmem>>, %arg6: memref<288x32xbf16, #tpu.memory_space<vmem>>, %arg7: memref<1x32xf32, #tpu.memory_space<vmem>>, %arg8: memref<288x32xbf16, #tpu.memory_space<vmem>>, %arg9: memref<1x32xf32, #tpu.memory_space<vmem>>, %arg10: memref<1x32x25xf32, #tpu.memory_space<vmem>>, %arg11: memref<121x32xbf16, #tpu.memory_space<vmem>>, %arg12: memref<97x32xbf16, #tpu.memory_space<vmem>>, %arg13: memref<73x32xbf16, #tpu.memory_space<vmem>>, %arg14: memref<32x32xf32, #tpu.memory_space<vmem>>) attributes {dimension_semantics = [#tpu.dimension_semantics<parallel>], iteration_bounds = array<i64: 2>, scalar_prefetch = 0 : i64, scratch_operands = 4 : i64, tpu.core_type = #tpu.core_type<tc>, window_params = [{transform_indices = @transform_0, window_bounds = array<i64: 1, 121, 36>}, {pipeline_mode = #tpu.pipeline_mode<synchronous>, transform_indices = @transform_1, window_bounds = array<i64: 36, 32>}, {pipeline_mode = #tpu.pipeline_mode<synchronous>, transform_indices = @transform_2, window_bounds = array<i64: 1, 32>}, {pipeline_mode = #tpu.pipeline_mode<synchronous>, transform_indices = @transform_3, window_bounds = array<i64: 288, 32>}, {pipeline_mode = #tpu.pipeline_mode<synchronous>, transform_indices = @transform_4, window_bounds = array<i64: 1, 32>}, {pipeline_mode = #tpu.pipeline_mode<synchronous>, transform_indices = @transform_5, window_bounds = array<i64: 288, 32>}, {pipeline_mode = #tpu.pipeline_mode<synchronous>, transform_indices = @transform_6, window_bounds = array<i64: 1, 32>}, {pipeline_mode = #tpu.pipeline_mode<synchronous>, transform_indices = @transform_7, window_bounds = array<i64: 288, 32>}, {pipeline_mode = #tpu.pipeline_mode<synchronous>, transform_indices = @transform_8, window_bounds = array<i64: 1, 32>}, {transform_indices = @transform_9, window_bounds = array<i64: 1, 32, 25>}]} {
    %cst = arith.constant 0.000000e+00 : f32
    %0 = vector.broadcast %cst : f32 to vector<32x32xf32>
    %c0 = arith.constant 0 : index
    %c0_0 = arith.constant 0 : index
    %1 = vector.load %arg14[%c0, %c0_0] : memref<32x32xf32, #tpu.memory_space<vmem>>, vector<32x32xf32>
    tpu.vector_store %arg14[%c0, %c0_0], %0 {strides = array<i32>} : memref<32x32xf32, #tpu.memory_space<vmem>>, vector<32x32xf32>,
    %c0_1 = arith.constant 0 : index
    %c0_2 = arith.constant 0 : index
    %c0_3 = arith.constant 0 : index
    %2 = vector.load %arg1[%c0_1, %c0_2, %c0_3] : memref<1x121x36xbf16, #tpu.memory_space<vmem>>, vector<1x121x36xbf16>
    %3 = vector.shape_cast %2 : vector<1x121x36xbf16> to vector<121x36xbf16>
    %c0_4 = arith.constant 0 : index
    %c0_5 = arith.constant 0 : index
    %4 = vector.load %arg2[%c0_4, %c0_5] : memref<36x32xbf16, #tpu.memory_space<vmem>>, vector<36x32xbf16>
    %cst_6 = arith.constant dense<0.000000e+00> : vector<121x32xf32>
    %5 = tpu.matmul %3, %4, %cst_6 {dimension_numbers = #tpu.dot_dimension_numbers<[1], [0], [0], [1], [0, 0, 1, 1], [], []>} : vector<121x36xbf16>, vector<36x32xbf16>, vector<121x32xf32> -> vector<121x32xf32>
    %c0_7 = arith.constant 0 : index
    %c0_8 = arith.constant 0 : index
    %6 = vector.load %arg3[%c0_7, %c0_8] : memref<1x32xf32, #tpu.memory_space<vmem>>, vector<1x32xf32>
    %7 = vector.broadcast %6 : vector<1x32xf32> to vector<121x32xf32>
    %8 = arith.addf %5, %7 : vector<121x32xf32>
    %cst_9 = arith.constant 0.000000e+00 : f32
    %9 = vector.broadcast %cst_9 : f32 to vector<121x32xf32>
    %10 = arith.maximumf %8, %9 : vector<121x32xf32>
    %11 = arith.truncf %10 : vector<121x32xf32> to vector<121x32xbf16>
    %c0_10 = arith.constant 0 : index
    %c0_11 = arith.constant 0 : index
    %12 = vector.load %arg11[%c0_10, %c0_11] : memref<121x32xbf16, #tpu.memory_space<vmem>>, vector<121x32xbf16>
    tpu.vector_store %arg11[%c0_10, %c0_11], %11 {strides = array<i32>} : memref<121x32xbf16, #tpu.memory_space<vmem>>, vector<121x32xbf16>,
    %c0_12 = arith.constant 0 : index
    %c0_13 = arith.constant 0 : index
    %13 = vector.load %arg11[%c0_12, %c0_13] : memref<121x32xbf16, #tpu.memory_space<vmem>>, vector<97x32xbf16>
    %c0_14 = arith.constant 0 : index
    %c0_15 = arith.constant 0 : index
    %14 = vector.load %arg4[%c0_14, %c0_15] : memref<288x32xbf16, #tpu.memory_space<vmem>>, vector<32x32xbf16>
    %cst_16 = arith.constant dense<0.000000e+00> : vector<97x32xf32>
    %15 = tpu.matmul %13, %14, %cst_16 {dimension_numbers = #tpu.dot_dimension_numbers<[1], [0], [0], [1], [0, 0, 1, 1], [], []>} : vector<97x32xbf16>, vector<32x32xbf16>, vector<97x32xf32> -> vector<97x32xf32>
    %c1 = arith.constant 1 : index
    %c0_17 = arith.constant 0 : index
    %16 = vector.load %arg11[%c1, %c0_17] : memref<121x32xbf16, #tpu.memory_space<vmem>>, vector<97x32xbf16>
    %c32 = arith.constant 32 : index
    %c0_18 = arith.constant 0 : index
    %17 = vector.load %arg4[%c32, %c0_18] : memref<288x32xbf16, #tpu.memory_space<vmem>>, vector<32x32xbf16>
    %cst_19 = arith.constant dense<0.000000e+00> : vector<97x32xf32>
    %18 = tpu.matmul %16, %17, %cst_19 {dimension_numbers = #tpu.dot_dimension_numbers<[1], [0], [0], [1], [0, 0, 1, 1], [], []>} : vector<97x32xbf16>, vector<32x32xbf16>, vector<97x32xf32> -> vector<97x32xf32>
    %19 = arith.addf %15, %18 : vector<97x32xf32>
    %c2 = arith.constant 2 : index
    %c0_20 = arith.constant 0 : index
    %20 = vector.load %arg11[%c2, %c0_20] : memref<121x32xbf16, #tpu.memory_space<vmem>>, vector<97x32xbf16>
    %c64 = arith.constant 64 : index
    %c0_21 = arith.constant 0 : index
    %21 = vector.load %arg4[%c64, %c0_21] : memref<288x32xbf16, #tpu.memory_space<vmem>>, vector<32x32xbf16>
    %cst_22 = arith.constant dense<0.000000e+00> : vector<97x32xf32>
    %22 = tpu.matmul %20, %21, %cst_22 {dimension_numbers = #tpu.dot_dimension_numbers<[1], [0], [0], [1], [0, 0, 1, 1], [], []>} : vector<97x32xbf16>, vector<32x32xbf16>, vector<97x32xf32> -> vector<97x32xf32>
    %23 = arith.addf %19, %22 : vector<97x32xf32>
    %c11 = arith.constant 11 : index
    %c0_23 = arith.constant 0 : index
    %24 = vector.load %arg11[%c11, %c0_23] : memref<121x32xbf16, #tpu.memory_space<vmem>>, vector<97x32xbf16>
    %c96 = arith.constant 96 : index
    %c0_24 = arith.constant 0 : index
    %25 = vector.load %arg4[%c96, %c0_24] : memref<288x32xbf16, #tpu.memory_space<vmem>>, vector<32x32xbf16>
    %cst_25 = arith.constant dense<0.000000e+00> : vector<97x32xf32>
    %26 = tpu.matmul %24, %25, %cst_25 {dimension_numbers = #tpu.dot_dimension_numbers<[1], [0], [0], [1], [0, 0, 1, 1], [], []>} : vector<97x32xbf16>, vector<32x32xbf16>, vector<97x32xf32> -> vector<97x32xf32>
    %27 = arith.addf %23, %26 : vector<97x32xf32>
    %c12 = arith.constant 12 : index
    %c0_26 = arith.constant 0 : index
    %28 = vector.load %arg11[%c12, %c0_26] : memref<121x32xbf16, #tpu.memory_space<vmem>>, vector<97x32xbf16>
    %c128 = arith.constant 128 : index
    %c0_27 = arith.constant 0 : index
    %29 = vector.load %arg4[%c128, %c0_27] : memref<288x32xbf16, #tpu.memory_space<vmem>>, vector<32x32xbf16>
    %cst_28 = arith.constant dense<0.000000e+00> : vector<97x32xf32>
    %30 = tpu.matmul %28, %29, %cst_28 {dimension_numbers = #tpu.dot_dimension_numbers<[1], [0], [0], [1], [0, 0, 1, 1], [], []>} : vector<97x32xbf16>, vector<32x32xbf16>, vector<97x32xf32> -> vector<97x32xf32>
    %31 = arith.addf %27, %30 : vector<97x32xf32>
    %c13 = arith.constant 13 : index
    %c0_29 = arith.constant 0 : index
    %32 = vector.load %arg11[%c13, %c0_29] : memref<121x32xbf16, #tpu.memory_space<vmem>>, vector<97x32xbf16>
    %c160 = arith.constant 160 : index
    %c0_30 = arith.constant 0 : index
    %33 = vector.load %arg4[%c160, %c0_30] : memref<288x32xbf16, #tpu.memory_space<vmem>>, vector<32x32xbf16>
    %cst_31 = arith.constant dense<0.000000e+00> : vector<97x32xf32>
    %34 = tpu.matmul %32, %33, %cst_31 {dimension_numbers = #tpu.dot_dimension_numbers<[1], [0], [0], [1], [0, 0, 1, 1], [], []>} : vector<97x32xbf16>, vector<32x32xbf16>, vector<97x32xf32> -> vector<97x32xf32>
    %35 = arith.addf %31, %34 : vector<97x32xf32>
    %c22 = arith.constant 22 : index
    %c0_32 = arith.constant 0 : index
    %36 = vector.load %arg11[%c22, %c0_32] : memref<121x32xbf16, #tpu.memory_space<vmem>>, vector<97x32xbf16>
    %c192 = arith.constant 192 : index
    %c0_33 = arith.constant 0 : index
    %37 = vector.load %arg4[%c192, %c0_33] : memref<288x32xbf16, #tpu.memory_space<vmem>>, vector<32x32xbf16>
    %cst_34 = arith.constant dense<0.000000e+00> : vector<97x32xf32>
    %38 = tpu.matmul %36, %37, %cst_34 {dimension_numbers = #tpu.dot_dimension_numbers<[1], [0], [0], [1], [0, 0, 1, 1], [], []>} : vector<97x32xbf16>, vector<32x32xbf16>, vector<97x32xf32> -> vector<97x32xf32>
    %39 = arith.addf %35, %38 : vector<97x32xf32>
    %c23 = arith.constant 23 : index
    %c0_35 = arith.constant 0 : index
    %40 = vector.load %arg11[%c23, %c0_35] : memref<121x32xbf16, #tpu.memory_space<vmem>>, vector<97x32xbf16>
    %c224 = arith.constant 224 : index
    %c0_36 = arith.constant 0 : index
    %41 = vector.load %arg4[%c224, %c0_36] : memref<288x32xbf16, #tpu.memory_space<vmem>>, vector<32x32xbf16>
    %cst_37 = arith.constant dense<0.000000e+00> : vector<97x32xf32>
    %42 = tpu.matmul %40, %41, %cst_37 {dimension_numbers = #tpu.dot_dimension_numbers<[1], [0], [0], [1], [0, 0, 1, 1], [], []>} : vector<97x32xbf16>, vector<32x32xbf16>, vector<97x32xf32> -> vector<97x32xf32>
    %43 = arith.addf %39, %42 : vector<97x32xf32>
    %c24 = arith.constant 24 : index
    %c0_38 = arith.constant 0 : index
    %44 = vector.load %arg11[%c24, %c0_38] : memref<121x32xbf16, #tpu.memory_space<vmem>>, vector<97x32xbf16>
    %c256 = arith.constant 256 : index
    %c0_39 = arith.constant 0 : index
    %45 = vector.load %arg4[%c256, %c0_39] : memref<288x32xbf16, #tpu.memory_space<vmem>>, vector<32x32xbf16>
    %cst_40 = arith.constant dense<0.000000e+00> : vector<97x32xf32>
    %46 = tpu.matmul %44, %45, %cst_40 {dimension_numbers = #tpu.dot_dimension_numbers<[1], [0], [0], [1], [0, 0, 1, 1], [], []>} : vector<97x32xbf16>, vector<32x32xbf16>, vector<97x32xf32> -> vector<97x32xf32>
    %47 = arith.addf %43, %46 : vector<97x32xf32>
    %c0_41 = arith.constant 0 : index
    %c0_42 = arith.constant 0 : index
    %48 = vector.load %arg5[%c0_41, %c0_42] : memref<1x32xf32, #tpu.memory_space<vmem>>, vector<1x32xf32>
    %49 = vector.broadcast %48 : vector<1x32xf32> to vector<97x32xf32>
    %50 = arith.addf %47, %49 : vector<97x32xf32>
    %cst_43 = arith.constant 0.000000e+00 : f32
    %51 = vector.broadcast %cst_43 : f32 to vector<97x32xf32>
    %52 = arith.maximumf %50, %51 : vector<97x32xf32>
    %53 = arith.truncf %52 : vector<97x32xf32> to vector<97x32xbf16>
    %c0_44 = arith.constant 0 : index
    %c0_45 = arith.constant 0 : index
    %54 = vector.load %arg12[%c0_44, %c0_45] : memref<97x32xbf16, #tpu.memory_space<vmem>>, vector<97x32xbf16>
    tpu.vector_store %arg12[%c0_44, %c0_45], %53 {strides = array<i32>} : memref<97x32xbf16, #tpu.memory_space<vmem>>, vector<97x32xbf16>,
    %c0_46 = arith.constant 0 : index
    %c0_47 = arith.constant 0 : index
    %55 = vector.load %arg12[%c0_46, %c0_47] : memref<97x32xbf16, #tpu.memory_space<vmem>>, vector<73x32xbf16>
    %c0_48 = arith.constant 0 : index
    %c0_49 = arith.constant 0 : index
    %56 = vector.load %arg6[%c0_48, %c0_49] : memref<288x32xbf16, #tpu.memory_space<vmem>>, vector<32x32xbf16>
    %cst_50 = arith.constant dense<0.000000e+00> : vector<73x32xf32>
    %57 = tpu.matmul %55, %56, %cst_50 {dimension_numbers = #tpu.dot_dimension_numbers<[1], [0], [0], [1], [0, 0, 1, 1], [], []>} : vector<73x32xbf16>, vector<32x32xbf16>, vector<73x32xf32> -> vector<73x32xf32>
    %c1_51 = arith.constant 1 : index
    %c0_52 = arith.constant 0 : index
    %58 = vector.load %arg12[%c1_51, %c0_52] : memref<97x32xbf16, #tpu.memory_space<vmem>>, vector<73x32xbf16>
    %c32_53 = arith.constant 32 : index
    %c0_54 = arith.constant 0 : index
    %59 = vector.load %arg6[%c32_53, %c0_54] : memref<288x32xbf16, #tpu.memory_space<vmem>>, vector<32x32xbf16>
    %cst_55 = arith.constant dense<0.000000e+00> : vector<73x32xf32>
    %60 = tpu.matmul %58, %59, %cst_55 {dimension_numbers = #tpu.dot_dimension_numbers<[1], [0], [0], [1], [0, 0, 1, 1], [], []>} : vector<73x32xbf16>, vector<32x32xbf16>, vector<73x32xf32> -> vector<73x32xf32>
    %61 = arith.addf %57, %60 : vector<73x32xf32>
    %c2_56 = arith.constant 2 : index
    %c0_57 = arith.constant 0 : index
    %62 = vector.load %arg12[%c2_56, %c0_57] : memref<97x32xbf16, #tpu.memory_space<vmem>>, vector<73x32xbf16>
    %c64_58 = arith.constant 64 : index
    %c0_59 = arith.constant 0 : index
    %63 = vector.load %arg6[%c64_58, %c0_59] : memref<288x32xbf16, #tpu.memory_space<vmem>>, vector<32x32xbf16>
    %cst_60 = arith.constant dense<0.000000e+00> : vector<73x32xf32>
    %64 = tpu.matmul %62, %63, %cst_60 {dimension_numbers = #tpu.dot_dimension_numbers<[1], [0], [0], [1], [0, 0, 1, 1], [], []>} : vector<73x32xbf16>, vector<32x32xbf16>, vector<73x32xf32> -> vector<73x32xf32>
    %65 = arith.addf %61, %64 : vector<73x32xf32>
    %c11_61 = arith.constant 11 : index
    %c0_62 = arith.constant 0 : index
    %66 = vector.load %arg12[%c11_61, %c0_62] : memref<97x32xbf16, #tpu.memory_space<vmem>>, vector<73x32xbf16>
    %c96_63 = arith.constant 96 : index
    %c0_64 = arith.constant 0 : index
    %67 = vector.load %arg6[%c96_63, %c0_64] : memref<288x32xbf16, #tpu.memory_space<vmem>>, vector<32x32xbf16>
    %cst_65 = arith.constant dense<0.000000e+00> : vector<73x32xf32>
    %68 = tpu.matmul %66, %67, %cst_65 {dimension_numbers = #tpu.dot_dimension_numbers<[1], [0], [0], [1], [0, 0, 1, 1], [], []>} : vector<73x32xbf16>, vector<32x32xbf16>, vector<73x32xf32> -> vector<73x32xf32>
    %69 = arith.addf %65, %68 : vector<73x32xf32>
    %c12_66 = arith.constant 12 : index
    %c0_67 = arith.constant 0 : index
    %70 = vector.load %arg12[%c12_66, %c0_67] : memref<97x32xbf16, #tpu.memory_space<vmem>>, vector<73x32xbf16>
    %c128_68 = arith.constant 128 : index
    %c0_69 = arith.constant 0 : index
    %71 = vector.load %arg6[%c128_68, %c0_69] : memref<288x32xbf16, #tpu.memory_space<vmem>>, vector<32x32xbf16>
    %cst_70 = arith.constant dense<0.000000e+00> : vector<73x32xf32>
    %72 = tpu.matmul %70, %71, %cst_70 {dimension_numbers = #tpu.dot_dimension_numbers<[1], [0], [0], [1], [0, 0, 1, 1], [], []>} : vector<73x32xbf16>, vector<32x32xbf16>, vector<73x32xf32> -> vector<73x32xf32>
    %73 = arith.addf %69, %72 : vector<73x32xf32>
    %c13_71 = arith.constant 13 : index
    %c0_72 = arith.constant 0 : index
    %74 = vector.load %arg12[%c13_71, %c0_72] : memref<97x32xbf16, #tpu.memory_space<vmem>>, vector<73x32xbf16>
    %c160_73 = arith.constant 160 : index
    %c0_74 = arith.constant 0 : index
    %75 = vector.load %arg6[%c160_73, %c0_74] : memref<288x32xbf16, #tpu.memory_space<vmem>>, vector<32x32xbf16>
    %cst_75 = arith.constant dense<0.000000e+00> : vector<73x32xf32>
    %76 = tpu.matmul %74, %75, %cst_75 {dimension_numbers = #tpu.dot_dimension_numbers<[1], [0], [0], [1], [0, 0, 1, 1], [], []>} : vector<73x32xbf16>, vector<32x32xbf16>, vector<73x32xf32> -> vector<73x32xf32>
    %77 = arith.addf %73, %76 : vector<73x32xf32>
    %c22_76 = arith.constant 22 : index
    %c0_77 = arith.constant 0 : index
    %78 = vector.load %arg12[%c22_76, %c0_77] : memref<97x32xbf16, #tpu.memory_space<vmem>>, vector<73x32xbf16>
    %c192_78 = arith.constant 192 : index
    %c0_79 = arith.constant 0 : index
    %79 = vector.load %arg6[%c192_78, %c0_79] : memref<288x32xbf16, #tpu.memory_space<vmem>>, vector<32x32xbf16>
    %cst_80 = arith.constant dense<0.000000e+00> : vector<73x32xf32>
    %80 = tpu.matmul %78, %79, %cst_80 {dimension_numbers = #tpu.dot_dimension_numbers<[1], [0], [0], [1], [0, 0, 1, 1], [], []>} : vector<73x32xbf16>, vector<32x32xbf16>, vector<73x32xf32> -> vector<73x32xf32>
    %81 = arith.addf %77, %80 : vector<73x32xf32>
    %c23_81 = arith.constant 23 : index
    %c0_82 = arith.constant 0 : index
    %82 = vector.load %arg12[%c23_81, %c0_82] : memref<97x32xbf16, #tpu.memory_space<vmem>>, vector<73x32xbf16>
    %c224_83 = arith.constant 224 : index
    %c0_84 = arith.constant 0 : index
    %83 = vector.load %arg6[%c224_83, %c0_84] : memref<288x32xbf16, #tpu.memory_space<vmem>>, vector<32x32xbf16>
    %cst_85 = arith.constant dense<0.000000e+00> : vector<73x32xf32>
    %84 = tpu.matmul %82, %83, %cst_85 {dimension_numbers = #tpu.dot_dimension_numbers<[1], [0], [0], [1], [0, 0, 1, 1], [], []>} : vector<73x32xbf16>, vector<32x32xbf16>, vector<73x32xf32> -> vector<73x32xf32>
    %85 = arith.addf %81, %84 : vector<73x32xf32>
    %c24_86 = arith.constant 24 : index
    %c0_87 = arith.constant 0 : index
    %86 = vector.load %arg12[%c24_86, %c0_87] : memref<97x32xbf16, #tpu.memory_space<vmem>>, vector<73x32xbf16>
    %c256_88 = arith.constant 256 : index
    %c0_89 = arith.constant 0 : index
    %87 = vector.load %arg6[%c256_88, %c0_89] : memref<288x32xbf16, #tpu.memory_space<vmem>>, vector<32x32xbf16>
    %cst_90 = arith.constant dense<0.000000e+00> : vector<73x32xf32>
    %88 = tpu.matmul %86, %87, %cst_90 {dimension_numbers = #tpu.dot_dimension_numbers<[1], [0], [0], [1], [0, 0, 1, 1], [], []>} : vector<73x32xbf16>, vector<32x32xbf16>, vector<73x32xf32> -> vector<73x32xf32>
    %89 = arith.addf %85, %88 : vector<73x32xf32>
    %c0_91 = arith.constant 0 : index
    %c0_92 = arith.constant 0 : index
    %90 = vector.load %arg7[%c0_91, %c0_92] : memref<1x32xf32, #tpu.memory_space<vmem>>, vector<1x32xf32>
    %91 = vector.broadcast %90 : vector<1x32xf32> to vector<73x32xf32>
    %92 = arith.addf %89, %91 : vector<73x32xf32>
    %cst_93 = arith.constant 0.000000e+00 : f32
    %93 = vector.broadcast %cst_93 : f32 to vector<73x32xf32>
    %94 = arith.maximumf %92, %93 : vector<73x32xf32>
    %95 = arith.truncf %94 : vector<73x32xf32> to vector<73x32xbf16>
    %c0_94 = arith.constant 0 : index
    %c0_95 = arith.constant 0 : index
    %96 = vector.load %arg13[%c0_94, %c0_95] : memref<73x32xbf16, #tpu.memory_space<vmem>>, vector<73x32xbf16>
    tpu.vector_store %arg13[%c0_94, %c0_95], %95 {strides = array<i32>} : memref<73x32xbf16, #tpu.memory_space<vmem>>, vector<73x32xbf16>,
    %c0_96 = arith.constant 0 : index
    %c0_97 = arith.constant 0 : index
    %97 = vector.load %arg13[%c0_96, %c0_97] : memref<73x32xbf16, #tpu.memory_space<vmem>>, vector<49x32xbf16>
    %c0_98 = arith.constant 0 : index
    %c0_99 = arith.constant 0 : index
    %98 = vector.load %arg8[%c0_98, %c0_99] : memref<288x32xbf16, #tpu.memory_space<vmem>>, vector<32x32xbf16>
    %cst_100 = arith.constant dense<0.000000e+00> : vector<49x32xf32>
    %99 = tpu.matmul %97, %98, %cst_100 {dimension_numbers = #tpu.dot_dimension_numbers<[1], [0], [0], [1], [0, 0, 1, 1], [], []>} : vector<49x32xbf16>, vector<32x32xbf16>, vector<49x32xf32> -> vector<49x32xf32>
    %c1_101 = arith.constant 1 : index
    %c0_102 = arith.constant 0 : index
    %100 = vector.load %arg13[%c1_101, %c0_102] : memref<73x32xbf16, #tpu.memory_space<vmem>>, vector<49x32xbf16>
    %c32_103 = arith.constant 32 : index
    %c0_104 = arith.constant 0 : index
    %101 = vector.load %arg8[%c32_103, %c0_104] : memref<288x32xbf16, #tpu.memory_space<vmem>>, vector<32x32xbf16>
    %cst_105 = arith.constant dense<0.000000e+00> : vector<49x32xf32>
    %102 = tpu.matmul %100, %101, %cst_105 {dimension_numbers = #tpu.dot_dimension_numbers<[1], [0], [0], [1], [0, 0, 1, 1], [], []>} : vector<49x32xbf16>, vector<32x32xbf16>, vector<49x32xf32> -> vector<49x32xf32>
    %103 = arith.addf %99, %102 : vector<49x32xf32>
    %c2_106 = arith.constant 2 : index
    %c0_107 = arith.constant 0 : index
    %104 = vector.load %arg13[%c2_106, %c0_107] : memref<73x32xbf16, #tpu.memory_space<vmem>>, vector<49x32xbf16>
    %c64_108 = arith.constant 64 : index
    %c0_109 = arith.constant 0 : index
    %105 = vector.load %arg8[%c64_108, %c0_109] : memref<288x32xbf16, #tpu.memory_space<vmem>>, vector<32x32xbf16>
    %cst_110 = arith.constant dense<0.000000e+00> : vector<49x32xf32>
    %106 = tpu.matmul %104, %105, %cst_110 {dimension_numbers = #tpu.dot_dimension_numbers<[1], [0], [0], [1], [0, 0, 1, 1], [], []>} : vector<49x32xbf16>, vector<32x32xbf16>, vector<49x32xf32> -> vector<49x32xf32>
    %107 = arith.addf %103, %106 : vector<49x32xf32>
    %c11_111 = arith.constant 11 : index
    %c0_112 = arith.constant 0 : index
    %108 = vector.load %arg13[%c11_111, %c0_112] : memref<73x32xbf16, #tpu.memory_space<vmem>>, vector<49x32xbf16>
    %c96_113 = arith.constant 96 : index
    %c0_114 = arith.constant 0 : index
    %109 = vector.load %arg8[%c96_113, %c0_114] : memref<288x32xbf16, #tpu.memory_space<vmem>>, vector<32x32xbf16>
    %cst_115 = arith.constant dense<0.000000e+00> : vector<49x32xf32>
    %110 = tpu.matmul %108, %109, %cst_115 {dimension_numbers = #tpu.dot_dimension_numbers<[1], [0], [0], [1], [0, 0, 1, 1], [], []>} : vector<49x32xbf16>, vector<32x32xbf16>, vector<49x32xf32> -> vector<49x32xf32>
    %111 = arith.addf %107, %110 : vector<49x32xf32>
    %c12_116 = arith.constant 12 : index
    %c0_117 = arith.constant 0 : index
    %112 = vector.load %arg13[%c12_116, %c0_117] : memref<73x32xbf16, #tpu.memory_space<vmem>>, vector<49x32xbf16>
    %c128_118 = arith.constant 128 : index
    %c0_119 = arith.constant 0 : index
    %113 = vector.load %arg8[%c128_118, %c0_119] : memref<288x32xbf16, #tpu.memory_space<vmem>>, vector<32x32xbf16>
    %cst_120 = arith.constant dense<0.000000e+00> : vector<49x32xf32>
    %114 = tpu.matmul %112, %113, %cst_120 {dimension_numbers = #tpu.dot_dimension_numbers<[1], [0], [0], [1], [0, 0, 1, 1], [], []>} : vector<49x32xbf16>, vector<32x32xbf16>, vector<49x32xf32> -> vector<49x32xf32>
    %115 = arith.addf %111, %114 : vector<49x32xf32>
    %c13_121 = arith.constant 13 : index
    %c0_122 = arith.constant 0 : index
    %116 = vector.load %arg13[%c13_121, %c0_122] : memref<73x32xbf16, #tpu.memory_space<vmem>>, vector<49x32xbf16>
    %c160_123 = arith.constant 160 : index
    %c0_124 = arith.constant 0 : index
    %117 = vector.load %arg8[%c160_123, %c0_124] : memref<288x32xbf16, #tpu.memory_space<vmem>>, vector<32x32xbf16>
    %cst_125 = arith.constant dense<0.000000e+00> : vector<49x32xf32>
    %118 = tpu.matmul %116, %117, %cst_125 {dimension_numbers = #tpu.dot_dimension_numbers<[1], [0], [0], [1], [0, 0, 1, 1], [], []>} : vector<49x32xbf16>, vector<32x32xbf16>, vector<49x32xf32> -> vector<49x32xf32>
    %119 = arith.addf %115, %118 : vector<49x32xf32>
    %c22_126 = arith.constant 22 : index
    %c0_127 = arith.constant 0 : index
    %120 = vector.load %arg13[%c22_126, %c0_127] : memref<73x32xbf16, #tpu.memory_space<vmem>>, vector<49x32xbf16>
    %c192_128 = arith.constant 192 : index
    %c0_129 = arith.constant 0 : index
    %121 = vector.load %arg8[%c192_128, %c0_129] : memref<288x32xbf16, #tpu.memory_space<vmem>>, vector<32x32xbf16>
    %cst_130 = arith.constant dense<0.000000e+00> : vector<49x32xf32>
    %122 = tpu.matmul %120, %121, %cst_130 {dimension_numbers = #tpu.dot_dimension_numbers<[1], [0], [0], [1], [0, 0, 1, 1], [], []>} : vector<49x32xbf16>, vector<32x32xbf16>, vector<49x32xf32> -> vector<49x32xf32>
    %123 = arith.addf %119, %122 : vector<49x32xf32>
    %c23_131 = arith.constant 23 : index
    %c0_132 = arith.constant 0 : index
    %124 = vector.load %arg13[%c23_131, %c0_132] : memref<73x32xbf16, #tpu.memory_space<vmem>>, vector<49x32xbf16>
    %c224_133 = arith.constant 224 : index
    %c0_134 = arith.constant 0 : index
    %125 = vector.load %arg8[%c224_133, %c0_134] : memref<288x32xbf16, #tpu.memory_space<vmem>>, vector<32x32xbf16>
    %cst_135 = arith.constant dense<0.000000e+00> : vector<49x32xf32>
    %126 = tpu.matmul %124, %125, %cst_135 {dimension_numbers = #tpu.dot_dimension_numbers<[1], [0], [0], [1], [0, 0, 1, 1], [], []>} : vector<49x32xbf16>, vector<32x32xbf16>, vector<49x32xf32> -> vector<49x32xf32>
    %127 = arith.addf %123, %126 : vector<49x32xf32>
    %c24_136 = arith.constant 24 : index
    %c0_137 = arith.constant 0 : index
    %128 = vector.load %arg13[%c24_136, %c0_137] : memref<73x32xbf16, #tpu.memory_space<vmem>>, vector<49x32xbf16>
    %c256_138 = arith.constant 256 : index
    %c0_139 = arith.constant 0 : index
    %129 = vector.load %arg8[%c256_138, %c0_139] : memref<288x32xbf16, #tpu.memory_space<vmem>>, vector<32x32xbf16>
    %cst_140 = arith.constant dense<0.000000e+00> : vector<49x32xf32>
    %130 = tpu.matmul %128, %129, %cst_140 {dimension_numbers = #tpu.dot_dimension_numbers<[1], [0], [0], [1], [0, 0, 1, 1], [], []>} : vector<49x32xbf16>, vector<32x32xbf16>, vector<49x32xf32> -> vector<49x32xf32>
    %131 = arith.addf %127, %130 : vector<49x32xf32>
    %c0_141 = arith.constant 0 : index
    %c0_142 = arith.constant 0 : index
    %132 = vector.load %arg9[%c0_141, %c0_142] : memref<1x32xf32, #tpu.memory_space<vmem>>, vector<1x32xf32>
    %133 = vector.broadcast %132 : vector<1x32xf32> to vector<49x32xf32>
    %134 = arith.addf %131, %133 : vector<49x32xf32>
    %cst_143 = arith.constant 0.000000e+00 : f32
    %135 = vector.broadcast %cst_143 : f32 to vector<49x32xf32>
    %136 = arith.maximumf %134, %135 : vector<49x32xf32>
    %137 = vector.extract_strided_slice %136 {offsets = [0, 0], sizes = [5, 32], strides = [1, 1]} : vector<49x32xf32> to vector<5x32xf32>
    %c0_144 = arith.constant 0 : index
    %c0_145 = arith.constant 0 : index
    %138 = vector.load %arg14[%c0_144, %c0_145] : memref<32x32xf32, #tpu.memory_space<vmem>>, vector<5x32xf32>
    tpu.vector_store %arg14[%c0_144, %c0_145], %137 {strides = array<i32>} : memref<32x32xf32, #tpu.memory_space<vmem>>, vector<5x32xf32>,
    %139 = vector.extract_strided_slice %136 {offsets = [11, 0], sizes = [5, 32], strides = [1, 1]} : vector<49x32xf32> to vector<5x32xf32>
    %c5 = arith.constant 5 : index
    %c0_146 = arith.constant 0 : index
    %140 = vector.load %arg14[%c5, %c0_146] : memref<32x32xf32, #tpu.memory_space<vmem>>, vector<5x32xf32>
    tpu.vector_store %arg14[%c5, %c0_146], %139 {strides = array<i32>} : memref<32x32xf32, #tpu.memory_space<vmem>>, vector<5x32xf32>,
    %141 = vector.extract_strided_slice %136 {offsets = [22, 0], sizes = [5, 32], strides = [1, 1]} : vector<49x32xf32> to vector<5x32xf32>
    %c10 = arith.constant 10 : index
    %c0_147 = arith.constant 0 : index
    %142 = vector.load %arg14[%c10, %c0_147] : memref<32x32xf32, #tpu.memory_space<vmem>>, vector<5x32xf32>
    tpu.vector_store %arg14[%c10, %c0_147], %141 {strides = array<i32>} : memref<32x32xf32, #tpu.memory_space<vmem>>, vector<5x32xf32>,
    %143 = vector.extract_strided_slice %136 {offsets = [33, 0], sizes = [5, 32], strides = [1, 1]} : vector<49x32xf32> to vector<5x32xf32>
    %c15 = arith.constant 15 : index
    %c0_148 = arith.constant 0 : index
    %144 = vector.load %arg14[%c15, %c0_148] : memref<32x32xf32, #tpu.memory_space<vmem>>, vector<5x32xf32>
    tpu.vector_store %arg14[%c15, %c0_148], %143 {strides = array<i32>} : memref<32x32xf32, #tpu.memory_space<vmem>>, vector<5x32xf32>,
    %145 = vector.extract_strided_slice %136 {offsets = [44, 0], sizes = [5, 32], strides = [1, 1]} : vector<49x32xf32> to vector<5x32xf32>
    %c20 = arith.constant 20 : index
    %c0_149 = arith.constant 0 : index
    %146 = vector.load %arg14[%c20, %c0_149] : memref<32x32xf32, #tpu.memory_space<vmem>>, vector<5x32xf32>
    tpu.vector_store %arg14[%c20, %c0_149], %145 {strides = array<i32>} : memref<32x32xf32, #tpu.memory_space<vmem>>, vector<5x32xf32>,
    %c0_150 = arith.constant 0 : index
    %c0_151 = arith.constant 0 : index
    %147 = vector.load %arg14[%c0_150, %c0_151] : memref<32x32xf32, #tpu.memory_space<vmem>>, vector<32x32xf32>
    %148 = tpu.transpose %147, [1, 0] : vector<32x32xf32> -> vector<32x32xf32>
    %149 = vector.extract_strided_slice %148 {offsets = [0, 0], sizes = [32, 25], strides = [1, 1]} : vector<32x32xf32> to vector<32x25xf32>
    %c0_152 = arith.constant 0 : index
    %c0_153 = arith.constant 0 : index
    %c0_154 = arith.constant 0 : index
    %150 = vector.load %arg10[%c0_152, %c0_153, %c0_154] : memref<1x32x25xf32, #tpu.memory_space<vmem>>, vector<1x32x25xf32>
    %151 = vector.shape_cast %150 : vector<1x32x25xf32> to vector<32x25xf32>
    %152 = vector.shape_cast %149 : vector<32x25xf32> to vector<1x32x25xf32>
    tpu.vector_store %arg10[%c0_152, %c0_153, %c0_154], %152 {strides = array<i32>} : memref<1x32x25xf32, #tpu.memory_space<vmem>>, vector<1x32x25xf32>,
    return
  }
  func.func @transform_0(%arg0: i32) -> (i32, i32, i32) {
    %c0_i32 = arith.constant 0 : i32
    %c0_i32_0 = arith.constant 0 : i32
    %c0_i32_1 = arith.constant 0 : i32
    return %arg0, %c0_i32, %c0_i32_0 : i32, i32, i32
  }
  func.func @transform_1(%arg0: i32) -> (i32, i32) {
    %c0_i32 = arith.constant 0 : i32
    %c0_i32_0 = arith.constant 0 : i32
    %c0_i32_1 = arith.constant 0 : i32
    return %c0_i32, %c0_i32_0 : i32, i32
  }
  func.func @transform_2(%arg0: i32) -> (i32, i32) {
    %c0_i32 = arith.constant 0 : i32
    %c0_i32_0 = arith.constant 0 : i32
    %c0_i32_1 = arith.constant 0 : i32
    return %c0_i32, %c0_i32_0 : i32, i32
  }
  func.func @transform_3(%arg0: i32) -> (i32, i32) {
    %c0_i32 = arith.constant 0 : i32
    %c0_i32_0 = arith.constant 0 : i32
    %c0_i32_1 = arith.constant 0 : i32
    return %c0_i32, %c0_i32_0 : i32, i32
  }
  func.func @transform_4(%arg0: i32) -> (i32, i32) {
    %c0_i32 = arith.constant 0 : i32
    %c0_i32_0 = arith.constant 0 : i32
    %c0_i32_1 = arith.constant 0 : i32
    return %c0_i32, %c0_i32_0 : i32, i32
  }
  func.func @transform_5(%arg0: i32) -> (i32, i32) {
    %c0_i32 = arith.constant 0 : i32
    %c0_i32_0 = arith.constant 0 : i32
    %c0_i32_1 = arith.constant 0 : i32
    return %c0_i32, %c0_i32_0 : i32, i32
  }
  func.func @transform_6(%arg0: i32) -> (i32, i32) {
    %c0_i32 = arith.constant 0 : i32
    %c0_i32_0 = arith.constant 0 : i32
    %c0_i32_1 = arith.constant 0 : i32
    return %c0_i32, %c0_i32_0 : i32, i32
  }
  func.func @transform_7(%arg0: i32) -> (i32, i32) {
    %c0_i32 = arith.constant 0 : i32
    %c0_i32_0 = arith.constant 0 : i32
    %c0_i32_1 = arith.constant 0 : i32
    return %c0_i32, %c0_i32_0 : i32, i32
  }
  func.func @transform_8(%arg0: i32) -> (i32, i32) {
    %c0_i32 = arith.constant 0 : i32
    %c0_i32_0 = arith.constant 0 : i32
    %c0_i32_1 = arith.constant 0 : i32
    return %c0_i32, %c0_i32_0 : i32, i32
  }
  func.func @transform_9(%arg0: i32) -> (i32, i32, i32) {
    %c0_i32 = arith.constant 0 : i32
    %c0_i32_0 = arith.constant 0 : i32
    %c0_i32_1 = arith.constant 0 : i32
    return %arg0, %c0_i32, %c0_i32_0 : i32, i32, i32
  }
}

</mosaic_0001>

<llo_original>
// kernel: encoder_forward.1
$region0: #{encoder_forward.1}
  #allocation0 [shape = 'u32[]', space=smem, size = 0x4, offset = 0x4, fixed_abs, tag = 'smem constant byte address 0x4 - core index']
  #allocation1 [shape = 'u32[144,128]{1,0:T(1,128)}', space=vmem, size = 0x12000, scoped, tag = 'internal scratch']
  #allocation2 [shape = 'bf16[121,32]{1,0:T(8,128)(2,1)}', space=vmem, size = 0x8000, scoped, tag = 'scratch operand']
  #allocation3 [shape = 'bf16[97,32]{1,0:T(8,128)(2,1)}', space=vmem, size = 0x6800, scoped, tag = 'scratch operand']
  #allocation4 [shape = 'bf16[73,32]{1,0:T(8,128)(2,1)}', space=vmem, size = 0x5000, scoped, tag = 'scratch operand']
  #allocation5 [shape = 'f32[32,32]{1,0:T(8,128)}', space=vmem, size = 0x4000, scoped, tag = 'scratch operand']
  %s0 = inlined_call_operand.vmem [shape: bf16[2,121,36], index: 0, kind: input, shape index: {}]
  %s1 = inlined_call_operand.vmem [shape: bf16[36,32], index: 1, kind: input, shape index: {}]
  %s2 = inlined_call_operand.vmem [shape: f32[1,32], index: 2, kind: input, shape index: {}]
  %s3 = inlined_call_operand.vmem [shape: bf16[288,32], index: 3, kind: input, shape index: {}]
  %s4 = inlined_call_operand.vmem [shape: f32[1,32], index: 4, kind: input, shape index: {}]
  %s5 = inlined_call_operand.vmem [shape: bf16[288,32], index: 5, kind: input, shape index: {}]
  %s6 = inlined_call_operand.vmem [shape: f32[1,32], index: 6, kind: input, shape index: {}]
  %s7 = inlined_call_operand.vmem [shape: bf16[288,32], index: 7, kind: input, shape index: {}]
  %s8 = inlined_call_operand.vmem [shape: f32[1,32], index: 8, kind: input, shape index: {}]
  %s9 = inlined_call_operand.vmem [shape: f32[2,32,25], index: 9, kind: output, shape index: {}]
  %s10 = sld [smem:[#allocation0]]
  $region69: #{encoder_forward.1} parent=0
    _
  %s12 = ssub.s32 1, %s10
  %s13 = scalar_select 0, %s12, %s10
  loop: start=0, step=1, limit=4
  $region2: #{encoder_forward.1} parent=0 // loop_pre_header
    _
  $region3: #{encoder_forward.1} parent=0 // loop_header
    %s15 = sphi 0, %s19
    %p16 = scmp.ge.s32.totalorder %s15, 4
    %s25 = sphi 0, %s27
    %s28 = sphi 0, %s25
    %s29 = sphi 0, %s28
    %s45 = sphi 0, %s29
    %s49 = sphi 0, %s49
    %s51 = sphi 0, %s49
    %s52 = sphi 0, %s51
    %s66 = sphi 0, %s52
    %s70 = sphi 0, %s70
    %s72 = sphi 0, %s70
    %s73 = sphi 0, %s72
    %s87 = sphi 0, %s73
    %s91 = sphi 0, %s91
    %s93 = sphi 0, %s91
    %s94 = sphi 0, %s93
    %s108 = sphi 0, %s94
    %s112 = sphi 0, %s112
    %s114 = sphi 0, %s112
    %s115 = sphi 0, %s114
    %s129 = sphi 0, %s115
    %s133 = sphi 0, %s133
    %s135 = sphi 0, %s133
    %s136 = sphi 0, %s135
    %s150 = sphi 0, %s136
    %s154 = sphi 0, %s154
    %s156 = sphi 0, %s154
    %s157 = sphi 0, %s156
    %s171 = sphi 0, %s157
    %s175 = sphi 0, %s175
    %s177 = sphi 0, %s175
    %s178 = sphi 0, %s177
    %s192 = sphi 0, %s178
    %s196 = sphi 0, %s196
    %s198 = sphi 0, %s196
    %s199 = sphi 0, %s198
    %s213 = sphi 0, %s199
    %s219 = sphi 0, %s221
    %s222 = sphi 0, %s219
    %s223 = sphi 0, %s222
    %s239 = sphi 0, %s223
  $region4: #{encoder_forward.1} parent=0 // loop_header_branch
    %18 = sbr.rel (%p16) target = $region8
  $region5: #{encoder_forward.1} parent=0 // loop_body
    %s20 = ssub.s32 %s15, 1
    %s21 = ssub.s32 %s15, 2
    %s22 = sadd.s32 %s15, 1
    %s23 = ssub.s32 %s15, %s22
    %p24 = scmp.eq.s32.totalorder %s23, 0
    %s26 = sadd.s32 %s25, 1
    %s27 = scalar_select %p24, %s25, %s26
    %p30 = pneg %p24
    %p31 = scmp.eq.s32.totalorder %s15, 1
    %p32 = por %p30, %p31
    %p33 = scmp.ne.s32.totalorder %s25, %s28
    %p34 = scmp.eq.s32.totalorder %s15, 0
    %p35 = por %p33, %p34
    %p36 = scmp.ne.s32.totalorder %s25, %s28
    %p37 = scmp.eq.s32.totalorder %s20, 1
    %p38 = por %p36, %p37
    %p39 = scmp.ne.s32.totalorder %s28, %s29
    %p40 = scmp.eq.s32.totalorder %s20, 0
    %p41 = por %p39, %p40
    %p42 = scmp.ne.s32.totalorder %s28, %s29
    %p43 = scmp.eq.s32.totalorder %s21, 1
    %p44 = por %p42, %p43
    %p46 = scmp.ne.s32.totalorder %s29, %s45
    %p47 = scmp.eq.s32.totalorder %s21, 0
    %p48 = por %p46, %p47
    %s50 = sadd.s32 %s49, 1
    %p53 = scmp.eq.s32.totalorder %s15, 1
    %p54 = scmp.ne.s32.totalorder %s49, %s51
    %p55 = scmp.eq.s32.totalorder %s15, 0
    %p56 = por %p54, %p55
    %p57 = scmp.ne.s32.totalorder %s49, %s51
    %p58 = scmp.eq.s32.totalorder %s20, 1
    %p59 = por %p57, %p58
    %p60 = scmp.ne.s32.totalorder %s51, %s52
    %p61 = scmp.eq.s32.totalorder %s20, 0
    %p62 = por %p60, %p61
    %p63 = scmp.ne.s32.totalorder %s51, %s52
    %p64 = scmp.eq.s32.totalorder %s21, 1
    %p65 = por %p63, %p64
    %p67 = scmp.ne.s32.totalorder %s52, %s66
    %p68 = scmp.eq.s32.totalorder %s21, 0
    %p69 = por %p67, %p68
    %s71 = sadd.s32 %s70, 1
    %p74 = scmp.eq.s32.totalorder %s15, 1
    %p75 = scmp.ne.s32.totalorder %s70, %s72
    %p76 = scmp.eq.s32.totalorder %s15, 0
    %p77 = por %p75, %p76
    %p78 = scmp.ne.s32.totalorder %s70, %s72
    %p79 = scmp.eq.s32.totalorder %s20, 1
    %p80 = por %p78, %p79
    %p81 = scmp.ne.s32.totalorder %s72, %s73
    %p82 = scmp.eq.s32.totalorder %s20, 0
    %p83 = por %p81, %p82
    %p84 = scmp.ne.s32.totalorder %s72, %s73
    %p85 = scmp.eq.s32.totalorder %s21, 1
    %p86 = por %p84, %p85
    %p88 = scmp.ne.s32.totalorder %s73, %s87
    %p89 = scmp.eq.s32.totalorder %s21, 0
    %p90 = por %p88, %p89
    %s92 = sadd.s32 %s91, 1
    %p95 = scmp.eq.s32.totalorder %s15, 1
    %p96 = scmp.ne.s32.totalorder %s91, %s93
    %p97 = scmp.eq.s32.totalorder %s15, 0
    %p98 = por %p96, %p97
    %p99 = scmp.ne.s32.totalorder %s91, %s93
    %p100 = scmp.eq.s32.totalorder %s20, 1
    %p101 = por %p99, %p100
    %p102 = scmp.ne.s32.totalorder %s93, %s94
    %p103 = scmp.eq.s32.totalorder %s20, 0
    %p104 = por %p102, %p103
    %p105 = scmp.ne.s32.totalorder %s93, %s94
    %p106 = scmp.eq.s32.totalorder %s21, 1
    %p107 = por %p105, %p106
    %p109 = scmp.ne.s32.totalorder %s94, %s108
    %p110 = scmp.eq.s32.totalorder %s21, 0
    %p111 = por %p109, %p110
    %s113 = sadd.s32 %s112, 1
    %p116 = scmp.eq.s32.totalorder %s15, 1
    %p117 = scmp.ne.s32.totalorder %s112, %s114
    %p118 = scmp.eq.s32.totalorder %s15, 0
    %p119 = por %p117, %p118
    %p120 = scmp.ne.s32.totalorder %s112, %s114
    %p121 = scmp.eq.s32.totalorder %s20, 1
    %p122 = por %p120, %p121
    %p123 = scmp.ne.s32.totalorder %s114, %s115
    %p124 = scmp.eq.s32.totalorder %s20, 0
    %p125 = por %p123, %p124
    %p126 = scmp.ne.s32.totalorder %s114, %s115
    %p127 = scmp.eq.s32.totalorder %s21, 1
    %p128 = por %p126, %p127
    %p130 = scmp.ne.s32.totalorder %s115, %s129
    %p131 = scmp.eq.s32.totalorder %s21, 0
    %p132 = por %p130, %p131
    %s134 = sadd.s32 %s133, 1
    %p137 = scmp.eq.s32.totalorder %s15, 1
    %p138 = scmp.ne.s32.totalorder %s133, %s135
    %p139 = scmp.eq.s32.totalorder %s15, 0
    %p140 = por %p138, %p139
    %p141 = scmp.ne.s32.totalorder %s133, %s135
    %p142 = scmp.eq.s32.totalorder %s20, 1
    %p143 = por %p141, %p142
    %p144 = scmp.ne.s32.totalorder %s135, %s136
    %p145 = scmp.eq.s32.totalorder %s20, 0
    %p146 = por %p144, %p145
    %p147 = scmp.ne.s32.totalorder %s135, %s136
    %p148 = scmp.eq.s32.totalorder %s21, 1
    %p149 = por %p147, %p148
    %p151 = scmp.ne.s32.totalorder %s136, %s150
    %p152 = scmp.eq.s32.totalorder %s21, 0
    %p153 = por %p151, %p152
    %s155 = sadd.s32 %s154, 1
    %p158 = scmp.eq.s32.totalorder %s15, 1
    %p159 = scmp.ne.s32.totalorder %s154, %s156
    %p160 = scmp.eq.s32.totalorder %s15, 0
    %p161 = por %p159, %p160
    %p162 = scmp.ne.s32.totalorder %s154, %s156
    %p163 = scmp.eq.s32.totalorder %s20, 1
    %p164 = por %p162, %p163
    %p165 = scmp.ne.s32.totalorder %s156, %s157
    %p166 = scmp.eq.s32.totalorder %s20, 0
    %p167 = por %p165, %p166
    %p168 = scmp.ne.s32.totalorder %s156, %s157
    %p169 = scmp.eq.s32.totalorder %s21, 1
    %p170 = por %p168, %p169
    %p172 = scmp.ne.s32.totalorder %s157, %s171
    %p173 = scmp.eq.s32.totalorder %s21, 0
    %p174 = por %p172, %p173
    %s176 = sadd.s32 %s175, 1
    %p179 = scmp.eq.s32.totalorder %s15, 1
    %p180 = scmp.ne.s32.totalorder %s175, %s177
    %p181 = scmp.eq.s32.totalorder %s15, 0
    %p182 = por %p180, %p181
    %p183 = scmp.ne.s32.totalorder %s175, %s177
    %p184 = scmp.eq.s32.totalorder %s20, 1
    %p185 = por %p183, %p184
    %p186 = scmp.ne.s32.totalorder %s177, %s178
    %p187 = scmp.eq.s32.totalorder %s20, 0
    %p188 = por %p186, %p187
    %p189 = scmp.ne.s32.totalorder %s177, %s178
    %p190 = scmp.eq.s32.totalorder %s21, 1
    %p191 = por %p189, %p190
    %p193 = scmp.ne.s32.totalorder %s178, %s192
    %p194 = scmp.eq.s32.totalorder %s21, 0
    %p195 = por %p193, %p194
    %s197 = sadd.s32 %s196, 1
    %p200 = scmp.eq.s32.totalorder %s15, 1
    %p201 = scmp.ne.s32.totalorder %s196, %s198
    %p202 = scmp.eq.s32.totalorder %s15, 0
    %p203 = por %p201, %p202
    %p204 = scmp.ne.s32.totalorder %s196, %s198
    %p205 = scmp.eq.s32.totalorder %s20, 1
    %p206 = por %p204, %p205
    %p207 = scmp.ne.s32.totalorder %s198, %s199
    %p208 = scmp.eq.s32.totalorder %s20, 0
    %p209 = por %p207, %p208
    %p210 = scmp.ne.s32.totalorder %s198, %s199
    %p211 = scmp.eq.s32.totalorder %s21, 1
    %p212 = por %p210, %p211
    %p214 = scmp.ne.s32.totalorder %s199, %s213
    %p215 = scmp.eq.s32.totalorder %s21, 0
    %p216 = por %p214, %p215
    %s217 = ssub.s32 %s15, %s22
    %p218 = scmp.eq.s32.totalorder %s217, 0
    %s220 = sadd.s32 %s219, 1
    %s221 = scalar_select %p218, %s219, %s220
    %p224 = pneg %p218
    %p225 = scmp.eq.s32.totalorder %s15, 1
    %p226 = por %p224, %p225
    %p227 = scmp.ne.s32.totalorder %s219, %s222
    %p228 = scmp.eq.s32.totalorder %s15, 0
    %p229 = por %p227, %p228
    %p230 = scmp.ne.s32.totalorder %s219, %s222
    %p231 = scmp.eq.s32.totalorder %s20, 1
    %p232 = por %p230, %p231
    %p233 = scmp.ne.s32.totalorder %s222, %s223
    %p234 = scmp.eq.s32.totalorder %s20, 0
    %p235 = por %p233, %p234
    %p236 = scmp.ne.s32.totalorder %s222, %s223
    %p237 = scmp.eq.s32.totalorder %s21, 1
    %p238 = por %p236, %p237
    %p240 = scmp.ne.s32.totalorder %s223, %s239
    %p241 = scmp.eq.s32.totalorder %s21, 0
    %p242 = por %p240, %p241
    %p243 = scmp.le.s32.totalorder 1, %s15
    %p244 = scmp.lt.s32.totalorder %s15, 3
    %p245 = pnand %p243, %p244
    %p246 = pneg %p245
    // Predicated region
    $region9: #{encoder_forward.1} parent=5 // pred_check
      _
    $region10: #{encoder_forward.1} parent=5 // pred_check_branch
      %248 = sbr.rel (%p245) target = $region12
    $region11: #{encoder_forward.1} parent=5 // pred_region
      %s249 = ssub.s32 %s15, 1
      // Predicated region
      $region13: #{encoder_forward.1} parent=11 // pred_check
        %p250 = pneg %p62
      $region14: #{encoder_forward.1} parent=11 // pred_check_branch
        %252 = sbr.rel (%p250) target = $region16
      $region15: #{encoder_forward.1} parent=11 // pred_region
        _
      $region16: #{encoder_forward.1} parent=11 // pred_fallthru
        _
      // Predicated region
      $region17: #{encoder_forward.1} parent=11 // pred_check
        %p253 = pneg %p83
      $region18: #{encoder_forward.1} parent=11 // pred_check_branch
        %255 = sbr.rel (%p253) target = $region20
      $region19: #{encoder_forward.1} parent=11 // pred_region
        _
      $region20: #{encoder_forward.1} parent=11 // pred_fallthru
        _
      // Predicated region
      $region21: #{encoder_forward.1} parent=11 // pred_check
        %p256 = pneg %p104
      $region22: #{encoder_forward.1} parent=11 // pred_check_branch
        %258 = sbr.rel (%p256) target = $region24
      $region23: #{encoder_forward.1} parent=11 // pred_region
        _
      $region24: #{encoder_forward.1} parent=11 // pred_fallthru
        _
      // Predicated region
      $region25: #{encoder_forward.1} parent=11 // pred_check
        %p259 = pneg %p125
      $region26: #{encoder_forward.1} parent=11 // pred_check_branch
        %261 = sbr.rel (%p259) target = $region28
      $region27: #{encoder_forward.1} parent=11 // pred_region
        _
      $region28: #{encoder_forward.1} parent=11 // pred_fallthru
        _
      // Predicated region
      $region29: #{encoder_forward.1} parent=11 // pred_check
        %p262 = pneg %p146
      $region30: #{encoder_forward.1} parent=11 // pred_check_branch
        %264 = sbr.rel (%p262) target = $region32
      $region31: #{encoder_forward.1} parent=11 // pred_region
        _
      $region32: #{encoder_forward.1} parent=11 // pred_fallthru
        _
      // Predicated region
      $region33: #{encoder_forward.1} parent=11 // pred_check
        %p265 = pneg %p167
      $region34: #{encoder_forward.1} parent=11 // pred_check_branch
        %267 = sbr.rel (%p265) target = $region36
      $region35: #{encoder_forward.1} parent=11 // pred_region
        _
      $region36: #{encoder_forward.1} parent=11 // pred_fallthru
        _
      // Predicated region
      $region37: #{encoder_forward.1} parent=11 // pred_check
        %p268 = pneg %p188
      $region38: #{encoder_forward.1} parent=11 // pred_check_branch
        %270 = sbr.rel (%p268) target = $region40
      $region39: #{encoder_forward.1} parent=11 // pred_region
        _
      $region40: #{encoder_forward.1} parent=11 // pred_fallthru
        _
      // Predicated region
      $region41: #{encoder_forward.1} parent=11 // pred_check
        %p271 = pneg %p209
      $region42: #{encoder_forward.1} parent=11 // pred_check_branch
        %273 = sbr.rel (%p271) target = $region44
      $region43: #{encoder_forward.1} parent=11 // pred_region
        _
      $region44: #{encoder_forward.1} parent=11 // pred_fallthru
        _
    $region12: #{encoder_forward.1} parent=5 // pred_fallthru
      _
    %p274 = scmp.lt.s32.totalorder %s15, 2
    // Predicated region
    $region45: #{encoder_forward.1} parent=5 // pred_check
      %p275 = pneg %p274
    $region46: #{encoder_forward.1} parent=5 // pred_check_branch
      %277 = sbr.rel (%p275) target = $region48
    $region47: #{encoder_forward.1} parent=5 // pred_region
      // Predicated region
      $region49: #{encoder_forward.1} parent=47 // pred_check
        %p278 = pneg %p35
      $region50: #{encoder_forward.1} parent=47 // pred_check_branch
        %280 = sbr.rel (%p278) target = $region52
      $region51: #{encoder_forward.1} parent=47 // pred_region
        %p281 = scmp.lt.s32.totalorder %s15, 1
        %s282 = scalar_select %p281, %s15, 1
        %s283 = smul.addr %s282, 16
        %s284 = smul.addr %s283, 4
        %s285 = scalar_lea.vmem %s0, %s284
      $region52: #{encoder_forward.1} parent=47 // pred_fallthru
        _
    $region48: #{encoder_forward.1} parent=5 // pred_fallthru
      _
    %p286 = scmp.le.s32.totalorder 1, %s15
    %p287 = scmp.lt.s32.totalorder %s15, 3
    %p288 = pnand %p286, %p287
    %p289 = pneg %p288
    // Predicated region
    $region53: #{encoder_forward.1} parent=5 // pred_check
      _
    $region54: #{encoder_forward.1} parent=5 // pred_check_branch
      %291 = sbr.rel (%p288) target = $region56
    $region55: #{encoder_forward.1} parent=5 // pred_region
      %s292 = ssub.s32 %s15, 1
      %p293 = scmp.lt.s32.totalorder %s20, 1
      %s294 = scalar_select %p293, %s20, 1
      %s295 = smul.addr %s294, 16
      %s296 = smul.addr %s295, 4
      %s297 = scalar_lea.vmem %s0, %s296
      %p298 = pneg %p41
      %p299 = pneg %p38
      %p300 = pneg %p62
      %p301 = pneg %p59
      %p302 = pneg %p83
      %p303 = pneg %p80
      %p304 = pneg %p104
      %p305 = pneg %p101
      %p306 = pneg %p125
      %p307 = pneg %p122
      %p308 = pneg %p146
      %p309 = pneg %p143
      %p310 = pneg %p167
      %p311 = pneg %p164
      %p312 = pneg %p188
      %p313 = pneg %p185
      %p314 = pneg %p209
      %p315 = pneg %p206
      %p316 = pneg %p235
      %p317 = pneg %p232
      %p318 = scmp.lt.s32.totalorder %s20, 1
      %s319 = scalar_select %p318, %s20, 1
      %s320 = smul.addr %s319, 4
      %s321 = smul.addr %s320, 8
      %s322 = scalar_lea.vmem %s9, %s321
      %p323 = scmp.lt.s32.totalorder %s20, 1
      %s324 = scalar_select %p323, %s20, 1
      %s325 = smul.addr %s324, 16
      %s326 = smul.addr %s325, 4
      %s327 = scalar_lea.vmem %s0, %s326
      %p328 = scmp.lt.s32.totalorder %s20, 1
      %s329 = scalar_select %p328, %s20, 1
      %s330 = smul.addr %s329, 4
      %s331 = smul.addr %s330, 8
      %s332 = scalar_lea.vmem %s9, %s331
      %vm334 = vcmask 261120
      %335 = vst.msk [vmem:[#allocation5] sm:$0xff] %vm334, 0.0
      %336 = vst.msk [vmem:[#allocation5 + $0x8] sm:$0xff] %vm334, 0.0
      %337 = vst.msk [vmem:[#allocation5 + $0x10] sm:$0xff] %vm334, 0.0
      %338 = vst.msk [vmem:[#allocation5 + $0x18] sm:$0xff] %vm334, 0.0
      %v339 = vld [vmem:[%s327] sm:$0xf]
      %v340 = vld [vmem:[%s327 + $0x4] sm:$0xf]
      %v341 = vld [vmem:[%s327 + $0x8] sm:$0xf]
      %v342 = vld [vmem:[%s327 + $0xc] sm:$0xf]
      %v343 = vld [vmem:[%s327 + $0x10] sm:$0xf]
      %v344 = vld [vmem:[%s327 + $0x14] sm:$0xf]
      %v345 = vld [vmem:[%s327 + $0x18] sm:$0xf]
      %v346 = vld [vmem:[%s327 + $0x1c] sm:$0xf]
      %v347 = vld [vmem:[%s327 + $0x20] sm:$0xf]
      %v348 = vld [vmem:[%s327 + $0x24] sm:$0xf]
      %v349 = vld [vmem:[%s327 + $0x28] sm:$0xf]
      %v350 = vld [vmem:[%s327 + $0x2c] sm:$0xf]
      %v351 = vld [vmem:[%s327 + $0x30] sm:$0xf]
      %v352 = vld [vmem:[%s327 + $0x34] sm:$0xf]
      %v353 = vld [vmem:[%s327 + $0x38] sm:$0xf]
      %v354 = vld [vmem:[%s327 + $0x3c] sm:$0x1]
      %v355 = vld [vmem:[%s1] sm:$0xf]
      %v356 = vld [vmem:[%s1 + $0x4] sm:$0xf]
      %v357 = vld [vmem:[%s1 + $0x8] sm:$0xf]
      %v358 = vld [vmem:[%s1 + $0xc] sm:$0xf]
      %v359 = vld [vmem:[%s1 + $0x10] sm:$0x3]
      %v360 = vld [vmem:[%s2] sm:$0x1]
      %v362 = vlaneseq
      %v363 = vshrl.u32 %v362, 7
      %v364 = vsub.s32 0, %v363
      %v365 = vrot.slane %v360, %v364
      %v383 = vunpack.c.l.b16 %v339
      %v384 = vunpack.c.l.b16 %v340
      %v385 = vunpack.c.l.b16 %v341
      %v386 = vunpack.c.l.b16 %v342
      %v387 = vunpack.c.l.b16 %v343
      %v388 = vunpack.c.l.b16 %v344
      %v389 = vunpack.c.l.b16 %v345
      %v390 = vunpack.c.l.b16 %v346
      %v391 = vunpack.c.l.b16 %v347
      %v392 = vunpack.c.l.b16 %v348
      %v393 = vunpack.c.l.b16 %v349
      %v394 = vunpack.c.l.b16 %v350
      %v395 = vunpack.c.l.b16 %v351
      %v396 = vunpack.c.l.b16 %v352
      %v397 = vunpack.c.l.b16 %v353
      %v398 = vunpack.c.l.b16 %v354
      %v399 = vpack.c.b16 %v384, %v383
      %v400 = vpack.c.b16 %v386, %v385
      %v401 = vpack.c.b16 %v388, %v387
      %v402 = vpack.c.b16 %v390, %v389
      %v403 = vpack.c.b16 %v392, %v391
      %v404 = vpack.c.b16 %v394, %v393
      %v405 = vpack.c.b16 %v396, %v395
      %v406 = vpack.c.b16 %v398, %v397
      %v412 = vunpack.c.l.b16 %v355
      %v413 = vunpack.c.l.b16 %v356
      %v414 = vunpack.c.l.b16 %v357
      %v415 = vunpack.c.l.b16 %v358
      %v416 = vunpack.c.l.b16 %v359
      %v417 = vpack.c.b16 %v413, %v412
      %v418 = vpack.c.b16 %v415, %v414
      %v419 = vpack.c.b16 %v416, %v416
      %vm422 = vcmask 293888
      %v424 = vsel %vm422, %v399, 0
      %v427 = vsel %vm422, %v400, 0
      %v430 = vsel %vm422, %v401, 0
      %v433 = vsel %vm422, %v402, 0
      %v436 = vsel %vm422, %v403, 0
      %v439 = vsel %vm422, %v404, 0
      %v442 = vsel %vm422, %v405, 0
      %v445 = vsel %vm422, %v406, 0
      %vm447 = vcmask 1041408
      %v449 = vsel %vm447, %v419, 0
      %451 = vmatprep.subr.bf16.mxu0 0
      %452 = vmatpush1.bf16.msra.mxu0 %v417
      %453 = vmatprep.subr.bf16.mxu0 0
      %454 = vmatpush1.bf16.msra.mxu0 %v418
      %455 = vmatprep.subr.bf16.mxu0 0
      %456 = vmatpush1.bf16.msra.mxu0 %v449
      %457 = vmatprep.subr.bf16.mxu0 0
      %458 = vmatpush1.bf16.msra.mxu0 0
      %459 = vmatprep.subr.bf16.mxu0 0
      %460 = vmatpush1.bf16.msra.mxu0 0
      %461 = vmatprep.subr.bf16.mxu0 0
      %462 = vmatpush1.bf16.msra.mxu0 0
      %463 = vmatprep.subr.bf16.mxu0 0
      %464 = vmatpush1.bf16.msra.mxu0 0
      %465 = vmatprep.subr.bf16.mxu0 0
      %466 = vmatpush1.bf16.msra.mxu0 0
      %467 = vmatprep.subr.bf16.mxu0 0
      %468 = vmatpush1.bf16.msra.mxu0 0
      %469 = vmatprep.subr.bf16.mxu0 0
      %470 = vmatpush1.bf16.msra.mxu0 0
      %471 = vmatprep.subr.bf16.mxu0 0
      %472 = vmatpush1.bf16.msra.mxu0 0
      %473 = vmatprep.subr.bf16.mxu0 0
      %474 = vmatpush1.bf16.msra.mxu0 0
      %475 = vmatprep.subr.bf16.mxu0 0
      %476 = vmatpush1.bf16.msra.mxu0 0
      %477 = vmatprep.subr.bf16.mxu0 0
      %478 = vmatpush1.bf16.msra.mxu0 0
      %479 = vmatprep.subr.bf16.mxu0 0
      %480 = vmatpush1.bf16.msra.mxu0 0
      %481 = vmatprep.subr.bf16.mxu0 0
      %482 = vmatpush1.bf16.msra.mxu0 0
      %483 = vmatprep.mubr.bf16.mxu0 0
      %484 = vmatmul.mubr.bf16.gmra.mrb[0].mxu0 %v424
      %v485 = vpop.f32.mrb[0].mxu0
      %v486 = vadd.f32 %v365, %v485
      %v487 = vpop.f32.mrb[0].mxu0
      %v488 = vpop.f32.mrb[0].mxu0
      %v489 = vadd.f32 %v365, %v488
      %v490 = vpop.f32.mrb[0].mxu0
      %491 = vmatprep.mubr.bf16.mxu0 0
      %492 = vmatmul.mubr.bf16.gmra.mrb[0].mxu0 %v427
      %v493 = vpop.f32.mrb[0].mxu0
      %v494 = vadd.f32 %v365, %v493
      %v495 = vpop.f32.mrb[0].mxu0
      %v496 = vpop.f32.mrb[0].mxu0
      %v497 = vadd.f32 %v365, %v496
      %v498 = vpop.f32.mrb[0].mxu0
      %499 = vmatprep.mubr.bf16.mxu0 0
      %500 = vmatmul.mubr.bf16.gmra.mrb[0].mxu0 %v430
      %v501 = vpop.f32.mrb[0].mxu0
      %v502 = vadd.f32 %v365, %v501
      %v503 = vpop.f32.mrb[0].mxu0
      %v504 = vpop.f32.mrb[0].mxu0
      %v505 = vadd.f32 %v365, %v504
      %v506 = vpop.f32.mrb[0].mxu0
      %507 = vmatprep.mubr.bf16.mxu0 0
      %508 = vmatmul.mubr.bf16.gmra.mrb[0].mxu0 %v433
      %v509 = vpop.f32.mrb[0].mxu0
      %v510 = vadd.f32 %v365, %v509
      %v511 = vpop.f32.mrb[0].mxu0
      %v512 = vpop.f32.mrb[0].mxu0
      %v513 = vadd.f32 %v365, %v512
      %v514 = vpop.f32.mrb[0].mxu0
      %515 = vmatprep.mubr.bf16.mxu0 0
      %516 = vmatmul.mubr.bf16.gmra.mrb[0].mxu0 %v436
      %v517 = vpop.f32.mrb[0].mxu0
      %v518 = vadd.f32 %v365, %v517
      %v519 = vpop.f32.mrb[0].mxu0
      %v520 = vpop.f32.mrb[0].mxu0
      %v521 = vadd.f32 %v365, %v520
      %v522 = vpop.f32.mrb[0].mxu0
      %523 = vmatprep.mubr.bf16.mxu0 0
      %524 = vmatmul.mubr.bf16.gmra.mrb[0].mxu0 %v439
      %v525 = vpop.f32.mrb[0].mxu0
      %v526 = vadd.f32 %v365, %v525
      %v527 = vpop.f32.mrb[0].mxu0
      %v528 = vpop.f32.mrb[0].mxu0
      %v529 = vadd.f32 %v365, %v528
      %v530 = vpop.f32.mrb[0].mxu0
      %531 = vmatprep.mubr.bf16.mxu0 0
      %532 = vmatmul.mubr.bf16.gmra.mrb[0].mxu0 %v442
      %v533 = vpop.f32.mrb[0].mxu0
      %v534 = vadd.f32 %v365, %v533
      %v535 = vpop.f32.mrb[0].mxu0
      %v536 = vpop.f32.mrb[0].mxu0
      %v537 = vadd.f32 %v365, %v536
      %v538 = vpop.f32.mrb[0].mxu0
      %539 = vmatprep.mubr.bf16.mxu0 0
      %540 = vmatmul.mubr.bf16.gmra.mrb[0].mxu0 %v445
      %v541 = vpop.f32.mrb[0].mxu0
      %v542 = vadd.f32 %v365, %v541
      %v543 = vpop.f32.mrb[0].mxu0
      %v544 = vpop.f32.mrb[0].mxu0
      %v545 = vadd.f32 %v365, %v544
      %v546 = vpop.f32.mrb[0].mxu0
      %547 = vdwg.mxu0
      %v548 = vmax.f32 %v486, 0.0
      %v549 = vmax.f32 %v489, 0.0
      %v550 = vmax.f32 %v494, 0.0
      %v551 = vmax.f32 %v497, 0.0
      %v552 = vmax.f32 %v502, 0.0
      %v553 = vmax.f32 %v505, 0.0
      %v554 = vmax.f32 %v510, 0.0
      %v555 = vmax.f32 %v513, 0.0
      %v556 = vmax.f32 %v518, 0.0
      %v557 = vmax.f32 %v521, 0.0
      %v558 = vmax.f32 %v526, 0.0
      %v559 = vmax.f32 %v529, 0.0
      %v560 = vmax.f32 %v534, 0.0
      %v561 = vmax.f32 %v537, 0.0
      %v562 = vmax.f32 %v542, 0.0
      %v563 = vmax.f32 %v545, 0.0
      %v564 = vpack.c.bf16 %v549, %v548
      %v565 = vpack.c.bf16 %v551, %v550
      %v566 = vpack.c.bf16 %v553, %v552
      %v567 = vpack.c.bf16 %v555, %v554
      %v568 = vpack.c.bf16 %v557, %v556
      %v569 = vpack.c.bf16 %v559, %v558
      %v570 = vpack.c.bf16 %v561, %v560
      %v571 = vpack.c.bf16 %v563, %v562
      %v580 = vunpack.c.l.b16 %v564
      %v581 = vunpack.c.h.b16 %v564
      %v582 = vunpack.c.l.b16 %v565
      %v583 = vunpack.c.h.b16 %v565
      %v584 = vunpack.c.l.b16 %v566
      %v585 = vunpack.c.h.b16 %v566
      %v586 = vunpack.c.l.b16 %v567
      %v587 = vunpack.c.h.b16 %v567
      %v588 = vunpack.c.l.b16 %v568
      %v589 = vunpack.c.h.b16 %v568
      %v590 = vunpack.c.l.b16 %v569
      %v591 = vunpack.c.h.b16 %v569
      %v592 = vunpack.c.l.b16 %v570
      %v593 = vunpack.c.h.b16 %v570
      %v594 = vunpack.c.l.b16 %v571
      %v595 = vunpack.c.h.b16 %v571
      %v596 = vpack.c.b16 %v580, %v580
      %v597 = vpack.c.b16 %v581, %v581
      %v598 = vpack.c.b16 %v582, %v582
      %v599 = vpack.c.b16 %v583, %v583
      %v600 = vpack.c.b16 %v584, %v584
      %v601 = vpack.c.b16 %v585, %v585
      %v602 = vpack.c.b16 %v586, %v586
      %v603 = vpack.c.b16 %v587, %v587
      %v604 = vpack.c.b16 %v588, %v588
      %v605 = vpack.c.b16 %v589, %v589
      %v606 = vpack.c.b16 %v590, %v590
      %v607 = vpack.c.b16 %v591, %v591
      %v608 = vpack.c.b16 %v592, %v592
      %v609 = vpack.c.b16 %v593, %v593
      %v610 = vpack.c.b16 %v594, %v594
      %v611 = vpack.c.b16 %v595, %v595
      %vm628 = vcmask 257024
      %629 = vst.msk [vmem:[#allocation2] sm:$0xf] %vm628, %v596
      %630 = vst.msk [vmem:[#allocation2 + $0x4] sm:$0xf] %vm628, %v597
      %631 = vst.msk [vmem:[#allocation2 + $0x8] sm:$0xf] %vm628, %v598
      %632 = vst.msk [vmem:[#allocation2 + $0xc] sm:$0xf] %vm628, %v599
      %633 = vst.msk [vmem:[#allocation2 + $0x10] sm:$0xf] %vm628, %v600
      %634 = vst.msk [vmem:[#allocation2 + $0x14] sm:$0xf] %vm628, %v601
      %635 = vst.msk [vmem:[#allocation2 + $0x18] sm:$0xf] %vm628, %v602
      %636 = vst.msk [vmem:[#allocation2 + $0x1c] sm:$0xf] %vm628, %v603
      %637 = vst.msk [vmem:[#allocation2 + $0x20] sm:$0xf] %vm628, %v604
      %638 = vst.msk [vmem:[#allocation2 + $0x24] sm:$0xf] %vm628, %v605
      %639 = vst.msk [vmem:[#allocation2 + $0x28] sm:$0xf] %vm628, %v606
      %640 = vst.msk [vmem:[#allocation2 + $0x2c] sm:$0xf] %vm628, %v607
      %641 = vst.msk [vmem:[#allocation2 + $0x30] sm:$0xf] %vm628, %v608
      %642 = vst.msk [vmem:[#allocation2 + $0x34] sm:$0xf] %vm628, %v609
      %643 = vst.msk [vmem:[#allocation2 + $0x38] sm:$0xf] %vm628, %v610
      %vm644 = vcmask 253952
      %vm645 = vsmask.f32 256
      %vm646 = vmand %vm644, %vm645
      %v647 = vld [vmem:[#allocation2 + $0x3c] sm:$0x1]
      %v648 = vsel %vm646, %v611, %v647
      %649 = vst [vmem:[#allocation2 + $0x3c] sm:$0x1] %v648
      %v650 = vld [vmem:[#allocation2] sm:$0xf]
      %v651 = vld [vmem:[#allocation2 + $0x4] sm:$0xf]
      %v652 = vld [vmem:[#allocation2 + $0x8] sm:$0xf]
      %v653 = vld [vmem:[#allocation2 + $0xc] sm:$0xf]
      %v654 = vld [vmem:[#allocation2 + $0x10] sm:$0xf]
      %v655 = vld [vmem:[#allocation2 + $0x14] sm:$0xf]
      %v656 = vld [vmem:[#allocation2 + $0x18] sm:$0xf]
      %v657 = vld [vmem:[#allocation2 + $0x1c] sm:$0xf]
      %v658 = vld [vmem:[#allocation2 + $0x20] sm:$0xf]
      %v659 = vld [vmem:[#allocation2 + $0x24] sm:$0xf]
      %v660 = vld [vmem:[#allocation2 + $0x28] sm:$0xf]
      %v661 = vld [vmem:[#allocation2 + $0x2c] sm:$0xf]
      %v662 = vld [vmem:[#allocation2 + $0x30] sm:$0x1]
      %v663 = vld [vmem:[%s3] sm:$0xf]
      %v664 = vld [vmem:[%s3 + $0x4] sm:$0xf]
      %v665 = vld [vmem:[%s3 + $0x8] sm:$0xf]
      %v666 = vld [vmem:[%s3 + $0xc] sm:$0xf]
      %v667 = vld [vmem:[%s3 + $0x10] sm:$0xf]
      %v668 = vld [vmem:[%s3 + $0x14] sm:$0xf]
      %v669 = vld [vmem:[%s3 + $0x18] sm:$0xf]
      %v670 = vld [vmem:[%s3 + $0x1c] sm:$0xf]
      %v684 = vunpack.c.l.b16 %v650
      %v685 = vunpack.c.l.b16 %v651
      %v686 = vunpack.c.l.b16 %v652
      %v687 = vunpack.c.l.b16 %v653
      %v688 = vunpack.c.l.b16 %v654
      %v689 = vunpack.c.l.b16 %v655
      %v690 = vunpack.c.l.b16 %v656
      %v691 = vunpack.c.l.b16 %v657
      %v692 = vunpack.c.l.b16 %v658
      %v693 = vunpack.c.l.b16 %v659
      %v694 = vunpack.c.l.b16 %v660
      %v695 = vunpack.c.l.b16 %v661
      %v696 = vunpack.c.l.b16 %v662
      %v697 = vpack.c.b16 %v685, %v684
      %v698 = vpack.c.b16 %v687, %v686
      %v699 = vpack.c.b16 %v689, %v688
      %v700 = vpack.c.b16 %v691, %v690
      %v701 = vpack.c.b16 %v693, %v692
      %v702 = vpack.c.b16 %v695, %v694
      %v703 = vpack.c.b16 %v696, %v696
      %vm704 = vsmask.f32 7424
      %v706 = vshrl.u32 %v697, 16
      %v708 = vshll.u32 %v697, 16
      %v710 = vrot.slane %v708, 1
      %v711 = vor.u32 %v706, %v710
      %v713 = vshll.u32 %v698, 16
      %v715 = vrot.slane %v713, 1
      %v716 = vsel %vm704, %v711, %v715
      %v717 = vshrl.u32 %v698, 16
      %v719 = vor.u32 %v717, %v715
      %v721 = vshll.u32 %v699, 16
      %v723 = vrot.slane %v721, 1
      %v724 = vsel %vm704, %v719, %v723
      %v725 = vshrl.u32 %v699, 16
      %v727 = vor.u32 %v725, %v723
      %v729 = vshll.u32 %v700, 16
      %v731 = vrot.slane %v729, 1
      %v732 = vsel %vm704, %v727, %v731
      %v733 = vshrl.u32 %v700, 16
      %v735 = vor.u32 %v733, %v731
      %v737 = vshll.u32 %v701, 16
      %v739 = vrot.slane %v737, 1
      %v740 = vsel %vm704, %v735, %v739
      %v741 = vshrl.u32 %v701, 16
      %v743 = vor.u32 %v741, %v739
      %v745 = vshll.u32 %v702, 16
      %v747 = vrot.slane %v745, 1
      %v748 = vsel %vm704, %v743, %v747
      %v749 = vshrl.u32 %v702, 16
      %v751 = vor.u32 %v749, %v747
      %v753 = vshll.u32 %v703, 16
      %v755 = vrot.slane %v753, 1
      %v756 = vsel %vm704, %v751, %v755
      %v757 = vshrl.u32 %v703, 16
      %v763 = vunpack.c.l.b16 %v667
      %v764 = vunpack.c.l.b16 %v668
      %v765 = vunpack.c.l.b16 %v669
      %v766 = vunpack.c.l.b16 %v670
      %v767 = vpack.c.b16 %v764, %v763
      %v768 = vpack.c.b16 %v766, %v765
      %v772 = vsel %vm334, %v716, 0
      %v775 = vsel %vm334, %v724, 0
      %v778 = vsel %vm334, %v732, 0
      %v781 = vsel %vm334, %v740, 0
      %v784 = vsel %vm334, %v748, 0
      %v787 = vsel %vm334, %v756, 0
      %v790 = vsel %vm334, %v757, 0
      %792 = vmatprep.subr.bf16.mxu0 0
      %793 = vmatpush1.bf16.msra.mxu0 %v767
      %794 = vmatprep.subr.bf16.mxu0 0
      %795 = vmatpush1.bf16.msra.mxu0 %v768
      %796 = vmatprep.subr.bf16.mxu0 0
      %797 = vmatpush1.bf16.msra.mxu0 0
      %798 = vmatprep.subr.bf16.mxu0 0
      %799 = vmatpush1.bf16.msra.mxu0 0
      %800 = vmatprep.subr.bf16.mxu0 0
      %801 = vmatpush1.bf16.msra.mxu0 0
      %802 = vmatprep.subr.bf16.mxu0 0
      %803 = vmatpush1.bf16.msra.mxu0 0
      %804 = vmatprep.subr.bf16.mxu0 0
      %805 = vmatpush1.bf16.msra.mxu0 0
      %806 = vmatprep.subr.bf16.mxu0 0
      %807 = vmatpush1.bf16.msra.mxu0 0
      %808 = vmatprep.subr.bf16.mxu0 0
      %809 = vmatpush1.bf16.msra.mxu0 0
      %810 = vmatprep.subr.bf16.mxu0 0
      %811 = vmatpush1.bf16.msra.mxu0 0
      %812 = vmatprep.subr.bf16.mxu0 0
      %813 = vmatpush1.bf16.msra.mxu0 0
      %814 = vmatprep.subr.bf16.mxu0 0
      %815 = vmatpush1.bf16.msra.mxu0 0
      %816 = vmatprep.subr.bf16.mxu0 0
      %817 = vmatpush1.bf16.msra.mxu0 0
      %818 = vmatprep.subr.bf16.mxu0 0
      %819 = vmatpush1.bf16.msra.mxu0 0
      %820 = vmatprep.subr.bf16.mxu0 0
      %821 = vmatpush1.bf16.msra.mxu0 0
      %822 = vmatprep.subr.bf16.mxu0 0
      %823 = vmatpush1.bf16.msra.mxu0 0
      %824 = vmatprep.mubr.bf16.mxu0 0
      %825 = vmatmul.mubr.bf16.gmra.mrb[0].mxu0 %v772
      %v826 = vpop.f32.mrb[0].mxu0
      %v827 = vadd.f32 0.0, %v826
      %v828 = vpop.f32.mrb[0].mxu0
      %v829 = vpop.f32.mrb[0].mxu0
      %v830 = vadd.f32 0.0, %v829
      %v831 = vpop.f32.mrb[0].mxu0
      %832 = vmatprep.mubr.bf16.mxu0 0
      %833 = vmatmul.mubr.bf16.gmra.mrb[0].mxu0 %v775
      %v834 = vpop.f32.mrb[0].mxu0
      %v835 = vadd.f32 0.0, %v834
      %v836 = vpop.f32.mrb[0].mxu0
      %v837 = vpop.f32.mrb[0].mxu0
      %v838 = vadd.f32 0.0, %v837
      %v839 = vpop.f32.mrb[0].mxu0
      %840 = vmatprep.mubr.bf16.mxu0 0
      %841 = vmatmul.mubr.bf16.gmra.mrb[0].mxu0 %v778
      %v842 = vpop.f32.mrb[0].mxu0
      %v843 = vadd.f32 0.0, %v842
      %v844 = vpop.f32.mrb[0].mxu0
      %v845 = vpop.f32.mrb[0].mxu0
      %v846 = vadd.f32 0.0, %v845
      %v847 = vpop.f32.mrb[0].mxu0
      %848 = vmatprep.mubr.bf16.mxu0 0
      %849 = vmatmul.mubr.bf16.gmra.mrb[0].mxu0 %v781
      %v850 = vpop.f32.mrb[0].mxu0
      %v851 = vadd.f32 0.0, %v850
      %v852 = vpop.f32.mrb[0].mxu0
      %v853 = vpop.f32.mrb[0].mxu0
      %v854 = vadd.f32 0.0, %v853
      %v855 = vpop.f32.mrb[0].mxu0
      %856 = vmatprep.mubr.bf16.mxu0 0
      %857 = vmatmul.mubr.bf16.gmra.mrb[0].mxu0 %v784
      %v858 = vpop.f32.mrb[0].mxu0
      %v859 = vadd.f32 0.0, %v858
      %v860 = vpop.f32.mrb[0].mxu0
      %v861 = vpop.f32.mrb[0].mxu0
      %v862 = vadd.f32 0.0, %v861
      %v863 = vpop.f32.mrb[0].mxu0
      %864 = vmatprep.mubr.bf16.mxu0 0
      %865 = vmatmul.mubr.bf16.gmra.mrb[0].mxu0 %v787
      %v866 = vpop.f32.mrb[0].mxu0
      %v867 = vadd.f32 0.0, %v866
      %v868 = vpop.f32.mrb[0].mxu0
      %v869 = vpop.f32.mrb[0].mxu0
      %v870 = vadd.f32 0.0, %v869
      %v871 = vpop.f32.mrb[0].mxu0
      %872 = vmatprep.mubr.bf16.mxu0 0
      %873 = vmatmul.mubr.bf16.gmra.mrb[0].mxu0 %v790
      %v874 = vpop.f32.mrb[0].mxu0
      %v875 = vadd.f32 0.0, %v874
      %v876 = vpop.f32.mrb[0].mxu0
      %v877 = vpop.f32.mrb[0].mxu0
      %v878 = vpop.f32.mrb[0].mxu0
      %879 = vdwg.mxu0
      %v884 = vunpack.c.l.b16 %v663
      %v885 = vunpack.c.l.b16 %v664
      %v886 = vunpack.c.l.b16 %v665
      %v887 = vunpack.c.l.b16 %v666
      %v888 = vpack.c.b16 %v885, %v884
      %v889 = vpack.c.b16 %v887, %v886
      %v892 = vsel %vm334, %v697, 0
      %v894 = vsel %vm334, %v698, 0
      %v896 = vsel %vm334, %v699, 0
      %v898 = vsel %vm334, %v700, 0
      %v900 = vsel %vm334, %v701, 0
      %v902 = vsel %vm334, %v702, 0
      %v904 = vsel %vm334, %v703, 0
      %906 = vmatprep.subr.bf16.mxu0 0
      %907 = vmatpush1.bf16.msra.mxu0 %v888
      %908 = vmatprep.subr.bf16.mxu0 0
      %909 = vmatpush1.bf16.msra.mxu0 %v889
      %910 = vmatprep.subr.bf16.mxu0 0
      %911 = vmatpush1.bf16.msra.mxu0 0
      %912 = vmatprep.subr.bf16.mxu0 0
      %913 = vmatpush1.bf16.msra.mxu0 0
      %914 = vmatprep.subr.bf16.mxu0 0
      %915 = vmatpush1.bf16.msra.mxu0 0
      %916 = vmatprep.subr.bf16.mxu0 0
      %917 = vmatpush1.bf16.msra.mxu0 0
      %918 = vmatprep.subr.bf16.mxu0 0
      %919 = vmatpush1.bf16.msra.mxu0 0
      %920 = vmatprep.subr.bf16.mxu0 0
      %921 = vmatpush1.bf16.msra.mxu0 0
      %922 = vmatprep.subr.bf16.mxu0 0
      %923 = vmatpush1.bf16.msra.mxu0 0
      %924 = vmatprep.subr.bf16.mxu0 0
      %925 = vmatpush1.bf16.msra.mxu0 0
      %926 = vmatprep.subr.bf16.mxu0 0
      %927 = vmatpush1.bf16.msra.mxu0 0
      %928 = vmatprep.subr.bf16.mxu0 0
      %929 = vmatpush1.bf16.msra.mxu0 0
      %930 = vmatprep.subr.bf16.mxu0 0
      %931 = vmatpush1.bf16.msra.mxu0 0
      %932 = vmatprep.subr.bf16.mxu0 0
      %933 = vmatpush1.bf16.msra.mxu0 0
      %934 = vmatprep.subr.bf16.mxu0 0
      %935 = vmatpush1.bf16.msra.mxu0 0
      %936 = vmatprep.subr.bf16.mxu0 0
      %937 = vmatpush1.bf16.msra.mxu0 0
      %938 = vmatprep.mubr.bf16.mxu0 0
      %939 = vmatmul.mubr.bf16.gmra.mrb[0].mxu0 %v892
      %v940 = vpop.f32.mrb[0].mxu0
      %v941 = vadd.f32 %v827, %v940
      %v942 = vpop.f32.mrb[0].mxu0
      %v943 = vpop.f32.mrb[0].mxu0
      %v944 = vadd.f32 %v830, %v943
      %v945 = vpop.f32.mrb[0].mxu0
      %946 = vmatprep.mubr.bf16.mxu0 0
      %947 = vmatmul.mubr.bf16.gmra.mrb[0].mxu0 %v894
      %v948 = vpop.f32.mrb[0].mxu0
      %v949 = vadd.f32 %v835, %v948
      %v950 = vpop.f32.mrb[0].mxu0
      %v951 = vpop.f32.mrb[0].mxu0
      %v952 = vadd.f32 %v838, %v951
      %v953 = vpop.f32.mrb[0].mxu0
      %954 = vmatprep.mubr.bf16.mxu0 0
      %955 = vmatmul.mubr.bf16.gmra.mrb[0].mxu0 %v896
      %v956 = vpop.f32.mrb[0].mxu0
      %v957 = vadd.f32 %v843, %v956
      %v958 = vpop.f32.mrb[0].mxu0
      %v959 = vpop.f32.mrb[0].mxu0
      %v960 = vadd.f32 %v846, %v959
      %v961 = vpop.f32.mrb[0].mxu0
      %962 = vmatprep.mubr.bf16.mxu0 0
      %963 = vmatmul.mubr.bf16.gmra.mrb[0].mxu0 %v898
      %v964 = vpop.f32.mrb[0].mxu0
      %v965 = vadd.f32 %v851, %v964
      %v966 = vpop.f32.mrb[0].mxu0
      %v967 = vpop.f32.mrb[0].mxu0
      %v968 = vadd.f32 %v854, %v967
      %v969 = vpop.f32.mrb[0].mxu0
      %970 = vmatprep.mubr.bf16.mxu0 0
      %971 = vmatmul.mubr.bf16.gmra.mrb[0].mxu0 %v900
      %v972 = vpop.f32.mrb[0].mxu0
      %v973 = vadd.f32 %v859, %v972
      %v974 = vpop.f32.mrb[0].mxu0
      %v975 = vpop.f32.mrb[0].mxu0
      %v976 = vadd.f32 %v862, %v975
      %v977 = vpop.f32.mrb[0].mxu0
      %978 = vmatprep.mubr.bf16.mxu0 0
      %979 = vmatmul.mubr.bf16.gmra.mrb[0].mxu0 %v902
      %v980 = vpop.f32.mrb[0].mxu0
      %v981 = vadd.f32 %v867, %v980
      %v982 = vpop.f32.mrb[0].mxu0
      %v983 = vpop.f32.mrb[0].mxu0
      %v984 = vadd.f32 %v870, %v983
      %v985 = vpop.f32.mrb[0].mxu0
      %986 = vmatprep.mubr.bf16.mxu0 0
      %987 = vmatmul.mubr.bf16.gmra.mrb[0].mxu0 %v904
      %v988 = vpop.f32.mrb[0].mxu0
      %v989 = vadd.f32 %v875, %v988
      %v990 = vpop.f32.mrb[0].mxu0
      %v991 = vpop.f32.mrb[0].mxu0
      %v992 = vpop.f32.mrb[0].mxu0
      %993 = vdwg.mxu0
      %v994 = vld [vmem:[#allocation2] sm:$0xe]
      %v995 = vld [vmem:[#allocation2 + $0x30] sm:$0x3]
      %v996 = vld [vmem:[%s3 + $0x20] sm:$0xf]
      %v997 = vld [vmem:[%s3 + $0x24] sm:$0xf]
      %v998 = vld [vmem:[%s3 + $0x28] sm:$0xf]
      %v999 = vld [vmem:[%s3 + $0x2c] sm:$0xf]
      %v1002 = vunpack.c.l.b16 %v994
      %v1003 = vunpack.c.l.b16 %v995
      %v1004 = vpack.c.b16 %v685, %v1002
      %v1005 = vpack.c.b16 %v1003, %v1003
      %vm1006 = vcmask 1046528
      %v1007 = vrot.slane %v1004, 1
      %v1008 = vrot.slane %v698, 1
      %v1009 = vsel %vm1006, %v1007, %v1008
      %v1010 = vrot.slane %v699, 1
      %v1011 = vsel %vm1006, %v1008, %v1010
      %v1012 = vrot.slane %v700, 1
      %v1013 = vsel %vm1006, %v1010, %v1012
      %v1014 = vrot.slane %v701, 1
      %v1015 = vsel %vm1006, %v1012, %v1014
      %v1016 = vrot.slane %v702, 1
      %v1017 = vsel %vm1006, %v1014, %v1016
      %v1018 = vrot.slane %v1005, 1
      %v1019 = vsel %vm1006, %v1016, %v1018
      %v1024 = vunpack.c.l.b16 %v996
      %v1025 = vunpack.c.l.b16 %v997
      %v1026 = vunpack.c.l.b16 %v998
      %v1027 = vunpack.c.l.b16 %v999
      %v1028 = vpack.c.b16 %v1025, %v1024
      %v1029 = vpack.c.b16 %v1027, %v1026
      %v1033 = vsel %vm334, %v1009, 0
      %v1036 = vsel %vm334, %v1011, 0
      %v1039 = vsel %vm334, %v1013, 0
      %v1042 = vsel %vm334, %v1015, 0
      %v1045 = vsel %vm334, %v1017, 0
      %v1048 = vsel %vm334, %v1019, 0
      %v1051 = vsel %vm334, %v1018, 0
      %1053 = vmatprep.subr.bf16.mxu0 0
      %1054 = vmatpush1.bf16.msra.mxu0 %v1028
      %1055 = vmatprep.subr.bf16.mxu0 0
      %1056 = vmatpush1.bf16.msra.mxu0 %v1029
      %1057 = vmatprep.subr.bf16.mxu0 0
      %1058 = vmatpush1.bf16.msra.mxu0 0
      %1059 = vmatprep.subr.bf16.mxu0 0
      %1060 = vmatpush1.bf16.msra.mxu0 0
      %1061 = vmatprep.subr.bf16.mxu0 0
      %1062 = vmatpush1.bf16.msra.mxu0 0
      %1063 = vmatprep.subr.bf16.mxu0 0
      %1064 = vmatpush1.bf16.msra.mxu0 0
      %1065 = vmatprep.subr.bf16.mxu0 0
      %1066 = vmatpush1.bf16.msra.mxu0 0
      %1067 = vmatprep.subr.bf16.mxu0 0
      %1068 = vmatpush1.bf16.msra.mxu0 0
      %1069 = vmatprep.subr.bf16.mxu0 0
      %1070 = vmatpush1.bf16.msra.mxu0 0
      %1071 = vmatprep.subr.bf16.mxu0 0
      %1072 = vmatpush1.bf16.msra.mxu0 0
      %1073 = vmatprep.subr.bf16.mxu0 0
      %1074 = vmatpush1.bf16.msra.mxu0 0
      %1075 = vmatprep.subr.bf16.mxu0 0
      %1076 = vmatpush1.bf16.msra.mxu0 0
      %1077 = vmatprep.subr.bf16.mxu0 0
      %1078 = vmatpush1.bf16.msra.mxu0 0
      %1079 = vmatprep.subr.bf16.mxu0 0
      %1080 = vmatpush1.bf16.msra.mxu0 0
      %1081 = vmatprep.subr.bf16.mxu0 0
      %1082 = vmatpush1.bf16.msra.mxu0 0
      %1083 = vmatprep.subr.bf16.mxu0 0
      %1084 = vmatpush1.bf16.msra.mxu0 0
      %1085 = vmatprep.mubr.bf16.mxu0 0
      %1086 = vmatmul.mubr.bf16.gmra.mrb[0].mxu0 %v1033
      %v1087 = vpop.f32.mrb[0].mxu0
      %v1088 = vadd.f32 0.0, %v1087
      %v1089 = vpop.f32.mrb[0].mxu0
      %v1090 = vpop.f32.mrb[0].mxu0
      %v1091 = vadd.f32 0.0, %v1090
      %v1092 = vpop.f32.mrb[0].mxu0
      %1093 = vmatprep.mubr.bf16.mxu0 0
      %1094 = vmatmul.mubr.bf16.gmra.mrb[0].mxu0 %v1036
      %v1095 = vpop.f32.mrb[0].mxu0
      %v1096 = vadd.f32 0.0, %v1095
      %v1097 = vpop.f32.mrb[0].mxu0
      %v1098 = vpop.f32.mrb[0].mxu0
      %v1099 = vadd.f32 0.0, %v1098
      %v1100 = vpop.f32.mrb[0].mxu0
      %1101 = vmatprep.mubr.bf16.mxu0 0
      %1102 = vmatmul.mubr.bf16.gmra.mrb[0].mxu0 %v1039
      %v1103 = vpop.f32.mrb[0].mxu0
      %v1104 = vadd.f32 0.0, %v1103
      %v1105 = vpop.f32.mrb[0].mxu0
      %v1106 = vpop.f32.mrb[0].mxu0
      %v1107 = vadd.f32 0.0, %v1106
      %v1108 = vpop.f32.mrb[0].mxu0
      %1109 = vmatprep.mubr.bf16.mxu0 0
      %1110 = vmatmul.mubr.bf16.gmra.mrb[0].mxu0 %v1042
      %v1111 = vpop.f32.mrb[0].mxu0
      %v1112 = vadd.f32 0.0, %v1111
      %v1113 = vpop.f32.mrb[0].mxu0
      %v1114 = vpop.f32.mrb[0].mxu0
      %v1115 = vadd.f32 0.0, %v1114
      %v1116 = vpop.f32.mrb[0].mxu0
      %1117 = vmatprep.mubr.bf16.mxu0 0
      %1118 = vmatmul.mubr.bf16.gmra.mrb[0].mxu0 %v1045
      %v1119 = vpop.f32.mrb[0].mxu0
      %v1120 = vadd.f32 0.0, %v1119
      %v1121 = vpop.f32.mrb[0].mxu0
      %v1122 = vpop.f32.mrb[0].mxu0
      %v1123 = vadd.f32 0.0, %v1122
      %v1124 = vpop.f32.mrb[0].mxu0
      %1125 = vmatprep.mubr.bf16.mxu0 0
      %1126 = vmatmul.mubr.bf16.gmra.mrb[0].mxu0 %v1048
      %v1127 = vpop.f32.mrb[0].mxu0
      %v1128 = vadd.f32 0.0, %v1127
      %v1129 = vpop.f32.mrb[0].mxu0
      %v1130 = vpop.f32.mrb[0].mxu0
      %v1131 = vadd.f32 0.0, %v1130
      %v1132 = vpop.f32.mrb[0].mxu0
      %1133 = vmatprep.mubr.bf16.mxu0 0
      %1134 = vmatmul.mubr.bf16.gmra.mrb[0].mxu0 %v1051
      %v1135 = vpop.f32.mrb[0].mxu0
      %v1136 = vadd.f32 0.0, %v1135
      %v1137 = vpop.f32.mrb[0].mxu0
      %v1138 = vpop.f32.mrb[0].mxu0
      %v1139 = vpop.f32.mrb[0].mxu0
      %1140 = vdwg.mxu0
      %v1141 = vadd.f32 %v941, %v1088
      %v1142 = vadd.f32 %v944, %v1091
      %v1143 = vadd.f32 %v949, %v1096
      %v1144 = vadd.f32 %v952, %v1099
      %v1145 = vadd.f32 %v957, %v1104
      %v1146 = vadd.f32 %v960, %v1107
      %v1147 = vadd.f32 %v965, %v1112
      %v1148 = vadd.f32 %v968, %v1115
      %v1149 = vadd.f32 %v973, %v1120
      %v1150 = vadd.f32 %v976, %v1123
      %v1151 = vadd.f32 %v981, %v1128
      %v1152 = vadd.f32 %v984, %v1131
      %v1153 = vadd.f32 %v989, %v1136
      %v1154 = vld [vmem:[#allocation2 + $0x4] sm:$0xe]
      %v1155 = vld [vmem:[#allocation2 + $0x8] sm:$0xf]
      %v1156 = vld [vmem:[#allocation2 + $0xc] sm:$0xf]
      %v1157 = vld [vmem:[#allocation2 + $0x10] sm:$0xf]
      %v1158 = vld [vmem:[#allocation2 + $0x14] sm:$0xf]
      %v1159 = vld [vmem:[#allocation2 + $0x18] sm:$0xf]
      %v1160 = vld [vmem:[#allocation2 + $0x1c] sm:$0xf]
      %v1161 = vld [vmem:[#allocation2 + $0x20] sm:$0xf]
      %v1162 = vld [vmem:[#allocation2 + $0x24] sm:$0xf]
      %v1163 = vld [vmem:[#allocation2 + $0x28] sm:$0xf]
      %v1164 = vld [vmem:[#allocation2 + $0x2c] sm:$0xf]
      %v1165 = vld [vmem:[#allocation2 + $0x30] sm:$0xf]
      %v1166 = vld [vmem:[#allocation2 + $0x34] sm:$0x3]
      %v1167 = vld [vmem:[%s3 + $0x30] sm:$0xf]
      %v1168 = vld [vmem:[%s3 + $0x34] sm:$0xf]
      %v1169 = vld [vmem:[%s3 + $0x38] sm:$0xf]
      %v1170 = vld [vmem:[%s3 + $0x3c] sm:$0xf]
      %v1184 = vunpack.c.l.b16 %v1154
      %v1185 = vunpack.c.l.b16 %v1155
      %v1186 = vunpack.c.l.b16 %v1156
      %v1187 = vunpack.c.l.b16 %v1157
      %v1188 = vunpack.c.l.b16 %v1158
      %v1189 = vunpack.c.l.b16 %v1159
      %v1190 = vunpack.c.l.b16 %v1160
      %v1191 = vunpack.c.l.b16 %v1161
      %v1192 = vunpack.c.l.b16 %v1162
      %v1193 = vunpack.c.l.b16 %v1163
      %v1194 = vunpack.c.l.b16 %v1164
      %v1195 = vunpack.c.l.b16 %v1165
      %v1196 = vunpack.c.l.b16 %v1166
      %v1197 = vpack.c.b16 %v1185, %v1184
      %v1198 = vpack.c.b16 %v1187, %v1186
      %v1199 = vpack.c.b16 %v1189, %v1188
      %v1200 = vpack.c.b16 %v1191, %v1190
      %v1201 = vpack.c.b16 %v1193, %v1192
      %v1202 = vpack.c.b16 %v1195, %v1194
      %v1203 = vpack.c.b16 %v1196, %v1196
      %vm1204 = vsmask.f32 6400
      %v1206 = vshrl.u32 %v1197, 16
      %v1208 = vrot.slane %v1206, 1
      %v1209 = vshll.u32 %v1197, 16
      %v1211 = vrot.slane %v1209, 2
      %v1212 = vor.u32 %v1208, %v1211
      %v1214 = vshrl.u32 %v1198, 16
      %v1216 = vrot.slane %v1214, 1
      %v1217 = vshll.u32 %v1198, 16
      %v1219 = vrot.slane %v1217, 2
      %v1220 = vor.u32 %v1216, %v1219
      %v1221 = vsel %vm1204, %v1212, %v1220
      %v1223 = vshrl.u32 %v1199, 16
      %v1225 = vrot.slane %v1223, 1
      %v1226 = vshll.u32 %v1199, 16
      %v1228 = vrot.slane %v1226, 2
      %v1229 = vor.u32 %v1225, %v1228
      %v1230 = vsel %vm1204, %v1220, %v1229
      %v1232 = vshrl.u32 %v1200, 16
      %v1234 = vrot.slane %v1232, 1
      %v1235 = vshll.u32 %v1200, 16
      %v1237 = vrot.slane %v1235, 2
      %v1238 = vor.u32 %v1234, %v1237
      %v1239 = vsel %vm1204, %v1229, %v1238
      %v1241 = vshrl.u32 %v1201, 16
      %v1243 = vrot.slane %v1241, 1
      %v1244 = vshll.u32 %v1201, 16
      %v1246 = vrot.slane %v1244, 2
      %v1247 = vor.u32 %v1243, %v1246
      %v1248 = vsel %vm1204, %v1238, %v1247
      %v1250 = vshrl.u32 %v1202, 16
      %v1252 = vrot.slane %v1250, 1
      %v1253 = vshll.u32 %v1202, 16
      %v1255 = vrot.slane %v1253, 2
      %v1256 = vor.u32 %v1252, %v1255
      %v1257 = vsel %vm1204, %v1247, %v1256
      %v1259 = vshrl.u32 %v1203, 16
      %v1261 = vrot.slane %v1259, 1
      %v1262 = vshll.u32 %v1203, 16
      %v1264 = vrot.slane %v1262, 2
      %v1265 = vor.u32 %v1261, %v1264
      %v1266 = vsel %vm1204, %v1256, %v1265
      %v1271 = vunpack.c.l.b16 %v1167
      %v1272 = vunpack.c.l.b16 %v1168
      %v1273 = vunpack.c.l.b16 %v1169
      %v1274 = vunpack.c.l.b16 %v1170
      %v1275 = vpack.c.b16 %v1272, %v1271
      %v1276 = vpack.c.b16 %v1274, %v1273
      %v1280 = vsel %vm334, %v1221, 0
      %v1283 = vsel %vm334, %v1230, 0
      %v1286 = vsel %vm334, %v1239, 0
      %v1289 = vsel %vm334, %v1248, 0
      %v1292 = vsel %vm334, %v1257, 0
      %v1295 = vsel %vm334, %v1266, 0
      %v1298 = vsel %vm334, %v1261, 0
      %1300 = vmatprep.subr.bf16.mxu0 0
      %1301 = vmatpush1.bf16.msra.mxu0 %v1275
      %1302 = vmatprep.subr.bf16.mxu0 0
      %1303 = vmatpush1.bf16.msra.mxu0 %v1276
      %1304 = vmatprep.subr.bf16.mxu0 0
      %1305 = vmatpush1.bf16.msra.mxu0 0
      %1306 = vmatprep.subr.bf16.mxu0 0
      %1307 = vmatpush1.bf16.msra.mxu0 0
      %1308 = vmatprep.subr.bf16.mxu0 0
      %1309 = vmatpush1.bf16.msra.mxu0 0
      %1310 = vmatprep.subr.bf16.mxu0 0
      %1311 = vmatpush1.bf16.msra.mxu0 0
      %1312 = vmatprep.subr.bf16.mxu0 0
      %1313 = vmatpush1.bf16.msra.mxu0 0
      %1314 = vmatprep.subr.bf16.mxu0 0
      %1315 = vmatpush1.bf16.msra.mxu0 0
      %1316 = vmatprep.subr.bf16.mxu0 0
      %1317 = vmatpush1.bf16.msra.mxu0 0
      %1318 = vmatprep.subr.bf16.mxu0 0
      %1319 = vmatpush1.bf16.msra.mxu0 0
      %1320 = vmatprep.subr.bf16.mxu0 0
      %1321 = vmatpush1.bf16.msra.mxu0 0
      %1322 = vmatprep.subr.bf16.mxu0 0
      %1323 = vmatpush1.bf16.msra.mxu0 0
      %1324 = vmatprep.subr.bf16.mxu0 0
      %1325 = vmatpush1.bf16.msra.mxu0 0
      %1326 = vmatprep.subr.bf16.mxu0 0
      %1327 = vmatpush1.bf16.msra.mxu0 0
      %1328 = vmatprep.subr.bf16.mxu0 0
      %1329 = vmatpush1.bf16.msra.mxu0 0
      %1330 = vmatprep.subr.bf16.mxu0 0
      %1331 = vmatpush1.bf16.msra.mxu0 0
      %1332 = vmatprep.mubr.bf16.mxu0 0
      %1333 = vmatmul.mubr.bf16.gmra.mrb[0].mxu0 %v1280
      %v1334 = vpop.f32.mrb[0].mxu0
      %v1335 = vadd.f32 0.0, %v1334
      %v1336 = vpop.f32.mrb[0].mxu0
      %v1337 = vpop.f32.mrb[0].mxu0
      %v1338 = vadd.f32 0.0, %v1337
      %v1339 = vpop.f32.mrb[0].mxu0
      %1340 = vmatprep.mubr.bf16.mxu0 0
      %1341 = vmatmul.mubr.bf16.gmra.mrb[0].mxu0 %v1283
      %v1342 = vpop.f32.mrb[0].mxu0
      %v1343 = vadd.f32 0.0, %v1342
      %v1344 = vpop.f32.mrb[0].mxu0
      %v1345 = vpop.f32.mrb[0].mxu0
      %v1346 = vadd.f32 0.0, %v1345
      %v1347 = vpop.f32.mrb[0].mxu0
      %1348 = vmatprep.mubr.bf16.mxu0 0
      %1349 = vmatmul.mubr.bf16.gmra.mrb[0].mxu0 %v1286
      %v1350 = vpop.f32.mrb[0].mxu0
      %v1351 = vadd.f32 0.0, %v1350
      %v1352 = vpop.f32.mrb[0].mxu0
      %v1353 = vpop.f32.mrb[0].mxu0
      %v1354 = vadd.f32 0.0, %v1353
      %v1355 = vpop.f32.mrb[0].mxu0
      %1356 = vmatprep.mubr.bf16.mxu0 0
      %1357 = vmatmul.mubr.bf16.gmra.mrb[0].mxu0 %v1289
      %v1358 = vpop.f32.mrb[0].mxu0
      %v1359 = vadd.f32 0.0, %v1358
      %v1360 = vpop.f32.mrb[0].mxu0
      %v1361 = vpop.f32.mrb[0].mxu0
      %v1362 = vadd.f32 0.0, %v1361
      %v1363 = vpop.f32.mrb[0].mxu0
      %1364 = vmatprep.mubr.bf16.mxu0 0
      %1365 = vmatmul.mubr.bf16.gmra.mrb[0].mxu0 %v1292
      %v1366 = vpop.f32.mrb[0].mxu0
      %v1367 = vadd.f32 0.0, %v1366
      %v1368 = vpop.f32.mrb[0].mxu0
      %v1369 = vpop.f32.mrb[0].mxu0
      %v1370 = vadd.f32 0.0, %v1369
      %v1371 = vpop.f32.mrb[0].mxu0
      %1372 = vmatprep.mubr.bf16.mxu0 0
      %1373 = vmatmul.mubr.bf16.gmra.mrb[0].mxu0 %v1295
      %v1374 = vpop.f32.mrb[0].mxu0
      %v1375 = vadd.f32 0.0, %v1374
      %v1376 = vpop.f32.mrb[0].mxu0
      %v1377 = vpop.f32.mrb[0].mxu0
      %v1378 = vadd.f32 0.0, %v1377
      %v1379 = vpop.f32.mrb[0].mxu0
      %1380 = vmatprep.mubr.bf16.mxu0 0
      %1381 = vmatmul.mubr.bf16.gmra.mrb[0].mxu0 %v1298
      %v1382 = vpop.f32.mrb[0].mxu0
      %v1383 = vadd.f32 0.0, %v1382
      %v1384 = vpop.f32.mrb[0].mxu0
      %v1385 = vpop.f32.mrb[0].mxu0
      %v1386 = vpop.f32.mrb[0].mxu0
      %1387 = vdwg.mxu0
      %v1388 = vadd.f32 %v1141, %v1335
      %v1389 = vadd.f32 %v1142, %v1338
      %v1390 = vadd.f32 %v1143, %v1343
      %v1391 = vadd.f32 %v1144, %v1346
      %v1392 = vadd.f32 %v1145, %v1351
      %v1393 = vadd.f32 %v1146, %v1354
      %v1394 = vadd.f32 %v1147, %v1359
      %v1395 = vadd.f32 %v1148, %v1362
      %v1396 = vadd.f32 %v1149, %v1367
      %v1397 = vadd.f32 %v1150, %v1370
      %v1398 = vadd.f32 %v1151, %v1375
      %v1399 = vadd.f32 %v1152, %v1378
      %v1400 = vadd.f32 %v1153, %v1383
      %v1401 = vld [vmem:[#allocation2 + $0x4] sm:$0xc]
      %v1402 = vld [vmem:[#allocation2 + $0x34] sm:$0x7]
      %v1403 = vld [vmem:[%s3 + $0x40] sm:$0xf]
      %v1404 = vld [vmem:[%s3 + $0x44] sm:$0xf]
      %v1405 = vld [vmem:[%s3 + $0x48] sm:$0xf]
      %v1406 = vld [vmem:[%s3 + $0x4c] sm:$0xf]
      %v1409 = vunpack.c.l.b16 %v1401
      %v1410 = vunpack.c.l.b16 %v1402
      %v1411 = vpack.c.b16 %v1185, %v1409
      %v1412 = vpack.c.b16 %v1410, %v1410
      %vm1413 = vcmask 1045504
      %v1414 = vrot.slane %v1411, 2
      %v1415 = vrot.slane %v1198, 2
      %v1416 = vsel %vm1413, %v1414, %v1415
      %v1417 = vrot.slane %v1199, 2
      %v1418 = vsel %vm1413, %v1415, %v1417
      %v1419 = vrot.slane %v1200, 2
      %v1420 = vsel %vm1413, %v1417, %v1419
      %v1421 = vrot.slane %v1201, 2
      %v1422 = vsel %vm1413, %v1419, %v1421
      %v1423 = vrot.slane %v1202, 2
      %v1424 = vsel %vm1413, %v1421, %v1423
      %v1425 = vrot.slane %v1412, 2
      %v1426 = vsel %vm1413, %v1423, %v1425
      %v1431 = vunpack.c.l.b16 %v1403
      %v1432 = vunpack.c.l.b16 %v1404
      %v1433 = vunpack.c.l.b16 %v1405
      %v1434 = vunpack.c.l.b16 %v1406
      %v1435 = vpack.c.b16 %v1432, %v1431
      %v1436 = vpack.c.b16 %v1434, %v1433
      %v1440 = vsel %vm334, %v1416, 0
      %v1443 = vsel %vm334, %v1418, 0
      %v1446 = vsel %vm334, %v1420, 0
      %v1449 = vsel %vm334, %v1422, 0
      %v1452 = vsel %vm334, %v1424, 0
      %v1455 = vsel %vm334, %v1426, 0
      %v1458 = vsel %vm334, %v1425, 0
      %1460 = vmatprep.subr.bf16.mxu0 0
      %1461 = vmatpush1.bf16.msra.mxu0 %v1435
      %1462 = vmatprep.subr.bf16.mxu0 0
      %1463 = vmatpush1.bf16.msra.mxu0 %v1436
      %1464 = vmatprep.subr.bf16.mxu0 0
      %1465 = vmatpush1.bf16.msra.mxu0 0
      %1466 = vmatprep.subr.bf16.mxu0 0
      %1467 = vmatpush1.bf16.msra.mxu0 0
      %1468 = vmatprep.subr.bf16.mxu0 0
      %1469 = vmatpush1.bf16.msra.mxu0 0
      %1470 = vmatprep.subr.bf16.mxu0 0
      %1471 = vmatpush1.bf16.msra.mxu0 0
      %1472 = vmatprep.subr.bf16.mxu0 0
      %1473 = vmatpush1.bf16.msra.mxu0 0
      %1474 = vmatprep.subr.bf16.mxu0 0
      %1475 = vmatpush1.bf16.msra.mxu0 0
      %1476 = vmatprep.subr.bf16.mxu0 0
      %1477 = vmatpush1.bf16.msra.mxu0 0
      %1478 = vmatprep.subr.bf16.mxu0 0
      %1479 = vmatpush1.bf16.msra.mxu0 0
      %1480 = vmatprep.subr.bf16.mxu0 0
      %1481 = vmatpush1.bf16.msra.mxu0 0
      %1482 = vmatprep.subr.bf16.mxu0 0
      %1483 = vmatpush1.bf16.msra.mxu0 0
      %1484 = vmatprep.subr.bf16.mxu0 0
      %1485 = vmatpush1.bf16.msra.mxu0 0
      %1486 = vmatprep.subr.bf16.mxu0 0
      %1487 = vmatpush1.bf16.msra.mxu0 0
      %1488 = vmatprep.subr.bf16.mxu0 0
      %1489 = vmatpush1.bf16.msra.mxu0 0
      %1490 = vmatprep.subr.bf16.mxu0 0
      %1491 = vmatpush1.bf16.msra.mxu0 0
      %1492 = vmatprep.mubr.bf16.mxu0 0
      %1493 = vmatmul.mubr.bf16.gmra.mrb[0].mxu0 %v1440
      %v1494 = vpop.f32.mrb[0].mxu0
      %v1495 = vadd.f32 0.0, %v1494
      %v1496 = vpop.f32.mrb[0].mxu0
      %v1497 = vpop.f32.mrb[0].mxu0
      %v1498 = vadd.f32 0.0, %v1497
      %v1499 = vpop.f32.mrb[0].mxu0
      %1500 = vmatprep.mubr.bf16.mxu0 0
      %1501 = vmatmul.mubr.bf16.gmra.mrb[0].mxu0 %v1443
      %v1502 = vpop.f32.mrb[0].mxu0
      %v1503 = vadd.f32 0.0, %v1502
      %v1504 = vpop.f32.mrb[0].mxu0
      %v1505 = vpop.f32.mrb[0].mxu0
      %v1506 = vadd.f32 0.0, %v1505
      %v1507 = vpop.f32.mrb[0].mxu0
      %1508 = vmatprep.mubr.bf16.mxu0 0
      %1509 = vmatmul.mubr.bf16.gmra.mrb[0].mxu0 %v1446
      %v1510 = vpop.f32.mrb[0].mxu0
      %v1511 = vadd.f32 0.0, %v1510
      %v1512 = vpop.f32.mrb[0].mxu0
      %v1513 = vpop.f32.mrb[0].mxu0
      %v1514 = vadd.f32 0.0, %v1513
      %v1515 = vpop.f32.mrb[0].mxu0
      %1516 = vmatprep.mubr.bf16.mxu0 0
      %1517 = vmatmul.mubr.bf16.gmra.mrb[0].mxu0 %v1449
      %v1518 = vpop.f32.mrb[0].mxu0
      %v1519 = vadd.f32 0.0, %v1518
      %v1520 = vpop.f32.mrb[0].mxu0
      %v1521 = vpop.f32.mrb[0].mxu0
      %v1522 = vadd.f32 0.0, %v1521
      %v1523 = vpop.f32.mrb[0].mxu0
      %1524 = vmatprep.mubr.bf16.mxu0 0
      %1525 = vmatmul.mubr.bf16.gmra.mrb[0].mxu0 %v1452
      %v1526 = vpop.f32.mrb[0].mxu0
      %v1527 = vadd.f32 0.0, %v1526
      %v1528 = vpop.f32.mrb[0].mxu0
      %v1529 = vpop.f32.mrb[0].mxu0
      %v1530 = vadd.f32 0.0, %v1529
      %v1531 = vpop.f32.mrb[0].mxu0
      %1532 = vmatprep.mubr.bf16.mxu0 0
      %1533 = vmatmul.mubr.bf16.gmra.mrb[0].mxu0 %v1455
      %v1534 = vpop.f32.mrb[0].mxu0
      %v1535 = vadd.f32 0.0, %v1534
      %v1536 = vpop.f32.mrb[0].mxu0
      %v1537 = vpop.f32.mrb[0].mxu0
      %v1538 = vadd.f32 0.0, %v1537
      %v1539 = vpop.f32.mrb[0].mxu0
      %1540 = vmatprep.mubr.bf16.mxu0 0
      %1541 = vmatmul.mubr.bf16.gmra.mrb[0].mxu0 %v1458
      %v1542 = vpop.f32.mrb[0].mxu0
      %v1543 = vadd.f32 0.0, %v1542
      %v1544 = vpop.f32.mrb[0].mxu0
      %v1545 = vpop.f32.mrb[0].mxu0
      %v1546 = vpop.f32.mrb[0].mxu0
      %1547 = vdwg.mxu0
      %v1548 = vadd.f32 %v1388, %v1495
      %v1549 = vadd.f32 %v1389, %v1498
      %v1550 = vadd.f32 %v1390, %v1503
      %v1551 = vadd.f32 %v1391, %v1506
      %v1552 = vadd.f32 %v1392, %v1511
      %v1553 = vadd.f32 %v1393, %v1514
      %v1554 = vadd.f32 %v1394, %v1519
      %v1555 = vadd.f32 %v1395, %v1522
      %v1556 = vadd.f32 %v1396, %v1527
      %v1557 = vadd.f32 %v1397, %v1530
      %v1558 = vadd.f32 %v1398, %v1535
      %v1559 = vadd.f32 %v1399, %v1538
      %v1560 = vadd.f32 %v1400, %v1543
      %v1561 = vld [vmem:[%s3 + $0x50] sm:$0xf]
      %v1562 = vld [vmem:[%s3 + $0x54] sm:$0xf]
      %v1563 = vld [vmem:[%s3 + $0x58] sm:$0xf]
      %v1564 = vld [vmem:[%s3 + $0x5c] sm:$0xf]
      %vm1565 = vsmask.f32 5376
      %v1567 = vshrl.u32 %v1411, 16
      %v1569 = vrot.slane %v1567, 2
      %v1570 = vshll.u32 %v1411, 16
      %v1572 = vrot.slane %v1570, 3
      %v1573 = vor.u32 %v1569, %v1572
      %v1574 = vrot.slane %v1214, 2
      %v1575 = vrot.slane %v1217, 3
      %v1576 = vor.u32 %v1574, %v1575
      %v1577 = vsel %vm1565, %v1573, %v1576
      %v1578 = vrot.slane %v1223, 2
      %v1579 = vrot.slane %v1226, 3
      %v1580 = vor.u32 %v1578, %v1579
      %v1581 = vsel %vm1565, %v1576, %v1580
      %v1582 = vrot.slane %v1232, 2
      %v1583 = vrot.slane %v1235, 3
      %v1584 = vor.u32 %v1582, %v1583
      %v1585 = vsel %vm1565, %v1580, %v1584
      %v1586 = vrot.slane %v1241, 2
      %v1587 = vrot.slane %v1244, 3
      %v1588 = vor.u32 %v1586, %v1587
      %v1589 = vsel %vm1565, %v1584, %v1588
      %v1590 = vrot.slane %v1250, 2
      %v1591 = vrot.slane %v1253, 3
      %v1592 = vor.u32 %v1590, %v1591
      %v1593 = vsel %vm1565, %v1588, %v1592
      %v1595 = vshrl.u32 %v1412, 16
      %v1597 = vrot.slane %v1595, 2
      %v1598 = vshll.u32 %v1412, 16
      %v1600 = vrot.slane %v1598, 3
      %v1601 = vor.u32 %v1597, %v1600
      %v1602 = vsel %vm1565, %v1592, %v1601
      %v1607 = vunpack.c.l.b16 %v1561
      %v1608 = vunpack.c.l.b16 %v1562
      %v1609 = vunpack.c.l.b16 %v1563
      %v1610 = vunpack.c.l.b16 %v1564
      %v1611 = vpack.c.b16 %v1608, %v1607
      %v1612 = vpack.c.b16 %v1610, %v1609
      %v1616 = vsel %vm334, %v1577, 0
      %v1619 = vsel %vm334, %v1581, 0
      %v1622 = vsel %vm334, %v1585, 0
      %v1625 = vsel %vm334, %v1589, 0
      %v1628 = vsel %vm334, %v1593, 0
      %v1631 = vsel %vm334, %v1602, 0
      %v1634 = vsel %vm334, %v1597, 0
      %1636 = vmatprep.subr.bf16.mxu0 0
      %1637 = vmatpush1.bf16.msra.mxu0 %v1611
      %1638 = vmatprep.subr.bf16.mxu0 0
      %1639 = vmatpush1.bf16.msra.mxu0 %v1612
      %1640 = vmatprep.subr.bf16.mxu0 0
      %1641 = vmatpush1.bf16.msra.mxu0 0
      %1642 = vmatprep.subr.bf16.mxu0 0
      %1643 = vmatpush1.bf16.msra.mxu0 0
      %1644 = vmatprep.subr.bf16.mxu0 0
      %1645 = vmatpush1.bf16.msra.mxu0 0
      %1646 = vmatprep.subr.bf16.mxu0 0
      %1647 = vmatpush1.bf16.msra.mxu0 0
      %1648 = vmatprep.subr.bf16.mxu0 0
      %1649 = vmatpush1.bf16.msra.mxu0 0
      %1650 = vmatprep.subr.bf16.mxu0 0
      %1651 = vmatpush1.bf16.msra.mxu0 0
      %1652 = vmatprep.subr.bf16.mxu0 0
      %1653 = vmatpush1.bf16.msra.mxu0 0
      %1654 = vmatprep.subr.bf16.mxu0 0
      %1655 = vmatpush1.bf16.msra.mxu0 0
      %1656 = vmatprep.subr.bf16.mxu0 0
      %1657 = vmatpush1.bf16.msra.mxu0 0
      %1658 = vmatprep.subr.bf16.mxu0 0
      %1659 = vmatpush1.bf16.msra.mxu0 0
      %1660 = vmatprep.subr.bf16.mxu0 0
      %1661 = vmatpush1.bf16.msra.mxu0 0
      %1662 = vmatprep.subr.bf16.mxu0 0
      %1663 = vmatpush1.bf16.msra.mxu0 0
      %1664 = vmatprep.subr.bf16.mxu0 0
      %1665 = vmatpush1.bf16.msra.mxu0 0
      %1666 = vmatprep.subr.bf16.mxu0 0
      %1667 = vmatpush1.bf16.msra.mxu0 0
      %1668 = vmatprep.mubr.bf16.mxu0 0
      %1669 = vmatmul.mubr.bf16.gmra.mrb[0].mxu0 %v1616
      %v1670 = vpop.f32.mrb[0].mxu0
      %v1671 = vadd.f32 0.0, %v1670
      %v1672 = vpop.f32.mrb[0].mxu0
      %v1673 = vpop.f32.mrb[0].mxu0
      %v1674 = vadd.f32 0.0, %v1673
      %v1675 = vpop.f32.mrb[0].mxu0
      %1676 = vmatprep.mubr.bf16.mxu0 0
      %1677 = vmatmul.mubr.bf16.gmra.mrb[0].mxu0 %v1619
      %v1678 = vpop.f32.mrb[0].mxu0
      %v1679 = vadd.f32 0.0, %v1678
      %v1680 = vpop.f32.mrb[0].mxu0
      %v1681 = vpop.f32.mrb[0].mxu0
      %v1682 = vadd.f32 0.0, %v1681
      %v1683 = vpop.f32.mrb[0].mxu0
      %1684 = vmatprep.mubr.bf16.mxu0 0
      %1685 = vmatmul.mubr.bf16.gmra.mrb[0].mxu0 %v1622
      %v1686 = vpop.f32.mrb[0].mxu0
      %v1687 = vadd.f32 0.0, %v1686
      %v1688 = vpop.f32.mrb[0].mxu0
      %v1689 = vpop.f32.mrb[0].mxu0
      %v1690 = vadd.f32 0.0, %v1689
      %v1691 = vpop.f32.mrb[0].mxu0
      %1692 = vmatprep.mubr.bf16.mxu0 0
      %1693 = vmatmul.mubr.bf16.gmra.mrb[0].mxu0 %v1625
      %v1694 = vpop.f32.mrb[0].mxu0
      %v1695 = vadd.f32 0.0, %v1694
      %v1696 = vpop.f32.mrb[0].mxu0
      %v1697 = vpop.f32.mrb[0].mxu0
      %v1698 = vadd.f32 0.0, %v1697
      %v1699 = vpop.f32.mrb[0].mxu0
      %1700 = vmatprep.mubr.bf16.mxu0 0
      %1701 = vmatmul.mubr.bf16.gmra.mrb[0].mxu0 %v1628
      %v1702 = vpop.f32.mrb[0].mxu0
      %v1703 = vadd.f32 0.0, %v1702
      %v1704 = vpop.f32.mrb[0].mxu0
      %v1705 = vpop.f32.mrb[0].mxu0
      %v1706 = vadd.f32 0.0, %v1705
      %v1707 = vpop.f32.mrb[0].mxu0
      %1708 = vmatprep.mubr.bf16.mxu0 0
      %1709 = vmatmul.mubr.bf16.gmra.mrb[0].mxu0 %v1631
      %v1710 = vpop.f32.mrb[0].mxu0
      %v1711 = vadd.f32 0.0, %v1710
      %v1712 = vpop.f32.mrb[0].mxu0
      %v1713 = vpop.f32.mrb[0].mxu0
      %v1714 = vadd.f32 0.0, %v1713
      %v1715 = vpop.f32.mrb[0].mxu0
      %1716 = vmatprep.mubr.bf16.mxu0 0
      %1717 = vmatmul.mubr.bf16.gmra.mrb[0].mxu0 %v1634
      %v1718 = vpop.f32.mrb[0].mxu0
      %v1719 = vadd.f32 0.0, %v1718
      %v1720 = vpop.f32.mrb[0].mxu0
      %v1721 = vpop.f32.mrb[0].mxu0
      %v1722 = vpop.f32.mrb[0].mxu0
      %1723 = vdwg.mxu0
      %v1724 = vadd.f32 %v1548, %v1671
      %v1725 = vadd.f32 %v1549, %v1674
      %v1726 = vadd.f32 %v1550, %v1679
      %v1727 = vadd.f32 %v1551, %v1682
      %v1728 = vadd.f32 %v1552, %v1687
      %v1729 = vadd.f32 %v1553, %v1690
      %v1730 = vadd.f32 %v1554, %v1695
      %v1731 = vadd.f32 %v1555, %v1698
      %v1732 = vadd.f32 %v1556, %v1703
      %v1733 = vadd.f32 %v1557, %v1706
      %v1734 = vadd.f32 %v1558, %v1711
      %v1735 = vadd.f32 %v1559, %v1714
      %v1736 = vadd.f32 %v1560, %v1719
      %v1737 = vld [vmem:[#allocation2 + $0x8] sm:$0x8]
      %v1738 = vld [vmem:[#allocation2 + $0xc] sm:$0xf]
      %v1739 = vld [vmem:[#allocation2 + $0x10] sm:$0xf]
      %v1740 = vld [vmem:[#allocation2 + $0x14] sm:$0xf]
      %v1741 = vld [vmem:[#allocation2 + $0x18] sm:$0xf]
      %v1742 = vld [vmem:[#allocation2 + $0x1c] sm:$0xf]
      %v1743 = vld [vmem:[#allocation2 + $0x20] sm:$0xf]
      %v1744 = vld [vmem:[#allocation2 + $0x24] sm:$0xf]
      %v1745 = vld [vmem:[#allocation2 + $0x28] sm:$0xf]
      %v1746 = vld [vmem:[#allocation2 + $0x2c] sm:$0xf]
      %v1747 = vld [vmem:[#allocation2 + $0x30] sm:$0xf]
      %v1748 = vld [vmem:[#allocation2 + $0x34] sm:$0xf]
      %v1749 = vld [vmem:[#allocation2 + $0x38] sm:$0xf]
      %v1750 = vld [vmem:[%s3 + $0x60] sm:$0xf]
      %v1751 = vld [vmem:[%s3 + $0x64] sm:$0xf]
      %v1752 = vld [vmem:[%s3 + $0x68] sm:$0xf]
      %v1753 = vld [vmem:[%s3 + $0x6c] sm:$0xf]
      %v1767 = vunpack.c.l.b16 %v1737
      %v1768 = vunpack.c.l.b16 %v1738
      %v1769 = vunpack.c.l.b16 %v1739
      %v1770 = vunpack.c.l.b16 %v1740
      %v1771 = vunpack.c.l.b16 %v1741
      %v1772 = vunpack.c.l.b16 %v1742
      %v1773 = vunpack.c.l.b16 %v1743
      %v1774 = vunpack.c.l.b16 %v1744
      %v1775 = vunpack.c.l.b16 %v1745
      %v1776 = vunpack.c.l.b16 %v1746
      %v1777 = vunpack.c.l.b16 %v1747
      %v1778 = vunpack.c.l.b16 %v1748
      %v1779 = vunpack.c.l.b16 %v1749
      %v1780 = vpack.c.b16 %v1768, %v1767
      %v1781 = vpack.c.b16 %v1770, %v1769
      %v1782 = vpack.c.b16 %v1772, %v1771
      %v1783 = vpack.c.b16 %v1774, %v1773
      %v1784 = vpack.c.b16 %v1776, %v1775
      %v1785 = vpack.c.b16 %v1778, %v1777
      %v1786 = vpack.c.b16 %v1779, %v1779
      %vm1787 = vcmask 1044480
      %v1788 = vrot.slane %v1780, 3
      %v1789 = vrot.slane %v1781, 3
      %v1790 = vsel %vm1787, %v1788, %v1789
      %v1791 = vrot.slane %v1782, 3
      %v1792 = vsel %vm1787, %v1789, %v1791
      %v1793 = vrot.slane %v1783, 3
      %v1794 = vsel %vm1787, %v1791, %v1793
      %v1795 = vrot.slane %v1784, 3
      %v1796 = vsel %vm1787, %v1793, %v1795
      %v1797 = vrot.slane %v1785, 3
      %v1798 = vsel %vm1787, %v1795, %v1797
      %v1799 = vrot.slane %v1786, 3
      %v1800 = vsel %vm1787, %v1797, %v1799
      %v1805 = vunpack.c.l.b16 %v1750
      %v1806 = vunpack.c.l.b16 %v1751
      %v1807 = vunpack.c.l.b16 %v1752
      %v1808 = vunpack.c.l.b16 %v1753
      %v1809 = vpack.c.b16 %v1806, %v1805
      %v1810 = vpack.c.b16 %v1808, %v1807
      %v1814 = vsel %vm334, %v1790, 0
      %v1817 = vsel %vm334, %v1792, 0
      %v1820 = vsel %vm334, %v1794, 0
      %v1823 = vsel %vm334, %v1796, 0
      %v1826 = vsel %vm334, %v1798, 0
      %v1829 = vsel %vm334, %v1800, 0
      %v1832 = vsel %vm334, %v1799, 0
      %1834 = vmatprep.subr.bf16.mxu0 0
      %1835 = vmatpush1.bf16.msra.mxu0 %v1809
      %1836 = vmatprep.subr.bf16.mxu0 0
      %1837 = vmatpush1.bf16.msra.mxu0 %v1810
      %1838 = vmatprep.subr.bf16.mxu0 0
      %1839 = vmatpush1.bf16.msra.mxu0 0
      %1840 = vmatprep.subr.bf16.mxu0 0
      %1841 = vmatpush1.bf16.msra.mxu0 0
      %1842 = vmatprep.subr.bf16.mxu0 0
      %1843 = vmatpush1.bf16.msra.mxu0 0
      %1844 = vmatprep.subr.bf16.mxu0 0
      %1845 = vmatpush1.bf16.msra.mxu0 0
      %1846 = vmatprep.subr.bf16.mxu0 0
      %1847 = vmatpush1.bf16.msra.mxu0 0
      %1848 = vmatprep.subr.bf16.mxu0 0
      %1849 = vmatpush1.bf16.msra.mxu0 0
      %1850 = vmatprep.subr.bf16.mxu0 0
      %1851 = vmatpush1.bf16.msra.mxu0 0
      %1852 = vmatprep.subr.bf16.mxu0 0
      %1853 = vmatpush1.bf16.msra.mxu0 0
      %1854 = vmatprep.subr.bf16.mxu0 0
      %1855 = vmatpush1.bf16.msra.mxu0 0
      %1856 = vmatprep.subr.bf16.mxu0 0
      %1857 = vmatpush1.bf16.msra.mxu0 0
      %1858 = vmatprep.subr.bf16.mxu0 0
      %1859 = vmatpush1.bf16.msra.mxu0 0
      %1860 = vmatprep.subr.bf16.mxu0 0
      %1861 = vmatpush1.bf16.msra.mxu0 0
      %1862 = vmatprep.subr.bf16.mxu0 0
      %1863 = vmatpush1.bf16.msra.mxu0 0
      %1864 = vmatprep.subr.bf16.mxu0 0
      %1865 = vmatpush1.bf16.msra.mxu0 0
      %1866 = vmatprep.mubr.bf16.mxu0 0
      %1867 = vmatmul.mubr.bf16.gmra.mrb[0].mxu0 %v1814
      %v1868 = vpop.f32.mrb[0].mxu0
      %v1869 = vadd.f32 0.0, %v1868
      %v1870 = vpop.f32.mrb[0].mxu0
      %v1871 = vpop.f32.mrb[0].mxu0
      %v1872 = vadd.f32 0.0, %v1871
      %v1873 = vpop.f32.mrb[0].mxu0
      %1874 = vmatprep.mubr.bf16.mxu0 0
      %1875 = vmatmul.mubr.bf16.gmra.mrb[0].mxu0 %v1817
      %v1876 = vpop.f32.mrb[0].mxu0
      %v1877 = vadd.f32 0.0, %v1876
      %v1878 = vpop.f32.mrb[0].mxu0
      %v1879 = vpop.f32.mrb[0].mxu0
      %v1880 = vadd.f32 0.0, %v1879
      %v1881 = vpop.f32.mrb[0].mxu0
      %1882 = vmatprep.mubr.bf16.mxu0 0
      %1883 = vmatmul.mubr.bf16.gmra.mrb[0].mxu0 %v1820
      %v1884 = vpop.f32.mrb[0].mxu0
      %v1885 = vadd.f32 0.0, %v1884
      %v1886 = vpop.f32.mrb[0].mxu0
      %v1887 = vpop.f32.mrb[0].mxu0
      %v1888 = vadd.f32 0.0, %v1887
      %v1889 = vpop.f32.mrb[0].mxu0
      %1890 = vmatprep.mubr.bf16.mxu0 0
      %1891 = vmatmul.mubr.bf16.gmra.mrb[0].mxu0 %v1823
      %v1892 = vpop.f32.mrb[0].mxu0
      %v1893 = vadd.f32 0.0, %v1892
      %v1894 = vpop.f32.mrb[0].mxu0
      %v1895 = vpop.f32.mrb[0].mxu0
      %v1896 = vadd.f32 0.0, %v1895
      %v1897 = vpop.f32.mrb[0].mxu0
      %1898 = vmatprep.mubr.bf16.mxu0 0
      %1899 = vmatmul.mubr.bf16.gmra.mrb[0].mxu0 %v1826
      %v1900 = vpop.f32.mrb[0].mxu0
      %v1901 = vadd.f32 0.0, %v1900
      %v1902 = vpop.f32.mrb[0].mxu0
      %v1903 = vpop.f32.mrb[0].mxu0
      %v1904 = vadd.f32 0.0, %v1903
      %v1905 = vpop.f32.mrb[0].mxu0
      %1906 = vmatprep.mubr.bf16.mxu0 0
      %1907 = vmatmul.mubr.bf16.gmra.mrb[0].mxu0 %v1829
      %v1908 = vpop.f32.mrb[0].mxu0
      %v1909 = vadd.f32 0.0, %v1908
      %v1910 = vpop.f32.mrb[0].mxu0
      %v1911 = vpop.f32.mrb[0].mxu0
      %v1912 = vadd.f32 0.0, %v1911
      %v1913 = vpop.f32.mrb[0].mxu0
      %1914 = vmatprep.mubr.bf16.mxu0 0
      %1915 = vmatmul.mubr.bf16.gmra.mrb[0].mxu0 %v1832
      %v1916 = vpop.f32.mrb[0].mxu0
      %v1917 = vadd.f32 0.0, %v1916
      %v1918 = vpop.f32.mrb[0].mxu0
      %v1919 = vpop.f32.mrb[0].mxu0
      %v1920 = vpop.f32.mrb[0].mxu0
      %1921 = vdwg.mxu0
      %v1922 = vadd.f32 %v1724, %v1869
      %v1923 = vadd.f32 %v1725, %v1872
      %v1924 = vadd.f32 %v1726, %v1877
      %v1925 = vadd.f32 %v1727, %v1880
      %v1926 = vadd.f32 %v1728, %v1885
      %v1927 = vadd.f32 %v1729, %v1888
      %v1928 = vadd.f32 %v1730, %v1893
      %v1929 = vadd.f32 %v1731, %v1896
      %v1930 = vadd.f32 %v1732, %v1901
      %v1931 = vadd.f32 %v1733, %v1904
      %v1932 = vadd.f32 %v1734, %v1909
      %v1933 = vadd.f32 %v1735, %v1912
      %v1934 = vadd.f32 %v1736, %v1917
      %v1935 = vld [vmem:[%s3 + $0x70] sm:$0xf]
      %v1936 = vld [vmem:[%s3 + $0x74] sm:$0xf]
      %v1937 = vld [vmem:[%s3 + $0x78] sm:$0xf]
      %v1938 = vld [vmem:[%s3 + $0x7c] sm:$0xf]
      %vm1939 = vsmask.f32 4352
      %v1941 = vshrl.u32 %v1780, 16
      %v1943 = vrot.slane %v1941, 3
      %v1944 = vshll.u32 %v1780, 16
      %v1946 = vrot.slane %v1944, 4
      %v1947 = vor.u32 %v1943, %v1946
      %v1949 = vshrl.u32 %v1781, 16
      %v1951 = vrot.slane %v1949, 3
      %v1952 = vshll.u32 %v1781, 16
      %v1954 = vrot.slane %v1952, 4
      %v1955 = vor.u32 %v1951, %v1954
      %v1956 = vsel %vm1939, %v1947, %v1955
      %v1958 = vshrl.u32 %v1782, 16
      %v1960 = vrot.slane %v1958, 3
      %v1961 = vshll.u32 %v1782, 16
      %v1963 = vrot.slane %v1961, 4
      %v1964 = vor.u32 %v1960, %v1963
      %v1965 = vsel %vm1939, %v1955, %v1964
      %v1967 = vshrl.u32 %v1783, 16
      %v1969 = vrot.slane %v1967, 3
      %v1970 = vshll.u32 %v1783, 16
      %v1972 = vrot.slane %v1970, 4
      %v1973 = vor.u32 %v1969, %v1972
      %v1974 = vsel %vm1939, %v1964, %v1973
      %v1976 = vshrl.u32 %v1784, 16
      %v1978 = vrot.slane %v1976, 3
      %v1979 = vshll.u32 %v1784, 16
      %v1981 = vrot.slane %v1979, 4
      %v1982 = vor.u32 %v1978, %v1981
      %v1983 = vsel %vm1939, %v1973, %v1982
      %v1985 = vshrl.u32 %v1785, 16
      %v1987 = vrot.slane %v1985, 3
      %v1988 = vshll.u32 %v1785, 16
      %v1990 = vrot.slane %v1988, 4
      %v1991 = vor.u32 %v1987, %v1990
      %v1992 = vsel %vm1939, %v1982, %v1991
      %v1994 = vshrl.u32 %v1786, 16
      %v1996 = vrot.slane %v1994, 3
      %v1997 = vshll.u32 %v1786, 16
      %v1999 = vrot.slane %v1997, 4
      %v2000 = vor.u32 %v1996, %v1999
      %v2001 = vsel %vm1939, %v1991, %v2000
      %v2006 = vunpack.c.l.b16 %v1935
      %v2007 = vunpack.c.l.b16 %v1936
      %v2008 = vunpack.c.l.b16 %v1937
      %v2009 = vunpack.c.l.b16 %v1938
      %v2010 = vpack.c.b16 %v2007, %v2006
      %v2011 = vpack.c.b16 %v2009, %v2008
      %v2015 = vsel %vm334, %v1956, 0
      %v2018 = vsel %vm334, %v1965, 0
      %v2021 = vsel %vm334, %v1974, 0
      %v2024 = vsel %vm334, %v1983, 0
      %v2027 = vsel %vm334, %v1992, 0
      %v2030 = vsel %vm334, %v2001, 0
      %v2033 = vsel %vm334, %v1996, 0
      %2035 = vmatprep.subr.bf16.mxu0 0
      %2036 = vmatpush1.bf16.msra.mxu0 %v2010
      %2037 = vmatprep.subr.bf16.mxu0 0
      %2038 = vmatpush1.bf16.msra.mxu0 %v2011
      %2039 = vmatprep.subr.bf16.mxu0 0
      %2040 = vmatpush1.bf16.msra.mxu0 0
      %2041 = vmatprep.subr.bf16.mxu0 0
      %2042 = vmatpush1.bf16.msra.mxu0 0
      %2043 = vmatprep.subr.bf16.mxu0 0
      %2044 = vmatpush1.bf16.msra.mxu0 0
      %2045 = vmatprep.subr.bf16.mxu0 0
      %2046 = vmatpush1.bf16.msra.mxu0 0
      %2047 = vmatprep.subr.bf16.mxu0 0
      %2048 = vmatpush1.bf16.msra.mxu0 0
      %2049 = vmatprep.subr.bf16.mxu0 0
      %2050 = vmatpush1.bf16.msra.mxu0 0
      %2051 = vmatprep.subr.bf16.mxu0 0
      %2052 = vmatpush1.bf16.msra.mxu0 0
      %2053 = vmatprep.subr.bf16.mxu0 0
      %2054 = vmatpush1.bf16.msra.mxu0 0
      %2055 = vmatprep.subr.bf16.mxu0 0
      %2056 = vmatpush1.bf16.msra.mxu0 0
      %2057 = vmatprep.subr.bf16.mxu0 0
      %2058 = vmatpush1.bf16.msra.mxu0 0
      %2059 = vmatprep.subr.bf16.mxu0 0
      %2060 = vmatpush1.bf16.msra.mxu0 0
      %2061 = vmatprep.subr.bf16.mxu0 0
      %2062 = vmatpush1.bf16.msra.mxu0 0
      %2063 = vmatprep.subr.bf16.mxu0 0
      %2064 = vmatpush1.bf16.msra.mxu0 0
      %2065 = vmatprep.subr.bf16.mxu0 0
      %2066 = vmatpush1.bf16.msra.mxu0 0
      %2067 = vmatprep.mubr.bf16.mxu0 0
      %2068 = vmatmul.mubr.bf16.gmra.mrb[0].mxu0 %v2015
      %v2069 = vpop.f32.mrb[0].mxu0
      %v2070 = vadd.f32 0.0, %v2069
      %v2071 = vpop.f32.mrb[0].mxu0
      %v2072 = vpop.f32.mrb[0].mxu0
      %v2073 = vadd.f32 0.0, %v2072
      %v2074 = vpop.f32.mrb[0].mxu0
      %2075 = vmatprep.mubr.bf16.mxu0 0
      %2076 = vmatmul.mubr.bf16.gmra.mrb[0].mxu0 %v2018
      %v2077 = vpop.f32.mrb[0].mxu0
      %v2078 = vadd.f32 0.0, %v2077
      %v2079 = vpop.f32.mrb[0].mxu0
      %v2080 = vpop.f32.mrb[0].mxu0
      %v2081 = vadd.f32 0.0, %v2080
      %v2082 = vpop.f32.mrb[0].mxu0
      %2083 = vmatprep.mubr.bf16.mxu0 0
      %2084 = vmatmul.mubr.bf16.gmra.mrb[0].mxu0 %v2021
      %v2085 = vpop.f32.mrb[0].mxu0
      %v2086 = vadd.f32 0.0, %v2085
      %v2087 = vpop.f32.mrb[0].mxu0
      %v2088 = vpop.f32.mrb[0].mxu0
      %v2089 = vadd.f32 0.0, %v2088
      %v2090 = vpop.f32.mrb[0].mxu0
      %2091 = vmatprep.mubr.bf16.mxu0 0
      %2092 = vmatmul.mubr.bf16.gmra.mrb[0].mxu0 %v2024
      %v2093 = vpop.f32.mrb[0].mxu0
      %v2094 = vadd.f32 0.0, %v2093
      %v2095 = vpop.f32.mrb[0].mxu0
      %v2096 = vpop.f32.mrb[0].mxu0
      %v2097 = vadd.f32 0.0, %v2096
      %v2098 = vpop.f32.mrb[0].mxu0
      %2099 = vmatprep.mubr.bf16.mxu0 0
      %2100 = vmatmul.mubr.bf16.gmra.mrb[0].mxu0 %v2027
      %v2101 = vpop.f32.mrb[0].mxu0
      %v2102 = vadd.f32 0.0, %v2101
      %v2103 = vpop.f32.mrb[0].mxu0
      %v2104 = vpop.f32.mrb[0].mxu0
      %v2105 = vadd.f32 0.0, %v2104
      %v2106 = vpop.f32.mrb[0].mxu0
      %2107 = vmatprep.mubr.bf16.mxu0 0
      %2108 = vmatmul.mubr.bf16.gmra.mrb[0].mxu0 %v2030
      %v2109 = vpop.f32.mrb[0].mxu0
      %v2110 = vadd.f32 0.0, %v2109
      %v2111 = vpop.f32.mrb[0].mxu0
      %v2112 = vpop.f32.mrb[0].mxu0
      %v2113 = vadd.f32 0.0, %v2112
      %v2114 = vpop.f32.mrb[0].mxu0
      %2115 = vmatprep.mubr.bf16.mxu0 0
      %2116 = vmatmul.mubr.bf16.gmra.mrb[0].mxu0 %v2033
      %v2117 = vpop.f32.mrb[0].mxu0
      %v2118 = vadd.f32 0.0, %v2117
      %v2119 = vpop.f32.mrb[0].mxu0
      %v2120 = vpop.f32.mrb[0].mxu0
      %v2121 = vpop.f32.mrb[0].mxu0
      %2122 = vdwg.mxu0
      %v2123 = vadd.f32 %v1922, %v2070
      %v2124 = vadd.f32 %v1923, %v2073
      %v2125 = vadd.f32 %v1924, %v2078
      %v2126 = vadd.f32 %v1925, %v2081
      %v2127 = vadd.f32 %v1926, %v2086
      %v2128 = vadd.f32 %v1927, %v2089
      %v2129 = vadd.f32 %v1928, %v2094
      %v2130 = vadd.f32 %v1929, %v2097
      %v2131 = vadd.f32 %v1930, %v2102
      %v2132 = vadd.f32 %v1931, %v2105
      %v2133 = vadd.f32 %v1932, %v2110
      %v2134 = vadd.f32 %v1933, %v2113
      %v2135 = vadd.f32 %v1934, %v2118
      %v2136 = vld [vmem:[#allocation2 + $0xc] sm:$0xf]
      %v2137 = vld [vmem:[#allocation2 + $0x10] sm:$0xf]
      %v2138 = vld [vmem:[#allocation2 + $0x14] sm:$0xf]
      %v2139 = vld [vmem:[#allocation2 + $0x18] sm:$0xf]
      %v2140 = vld [vmem:[#allocation2 + $0x1c] sm:$0xf]
      %v2141 = vld [vmem:[#allocation2 + $0x20] sm:$0xf]
      %v2142 = vld [vmem:[#allocation2 + $0x24] sm:$0xf]
      %v2143 = vld [vmem:[#allocation2 + $0x28] sm:$0xf]
      %v2144 = vld [vmem:[#allocation2 + $0x2c] sm:$0xf]
      %v2145 = vld [vmem:[#allocation2 + $0x30] sm:$0xf]
      %v2146 = vld [vmem:[#allocation2 + $0x34] sm:$0xf]
      %v2147 = vld [vmem:[#allocation2 + $0x38] sm:$0xf]
      %v2148 = vld [vmem:[#allocation2 + $0x3c] sm:$0x1]
      %v2149 = vld [vmem:[%s3 + $0x80] sm:$0xf]
      %v2150 = vld [vmem:[%s3 + $0x84] sm:$0xf]
      %v2151 = vld [vmem:[%s3 + $0x88] sm:$0xf]
      %v2152 = vld [vmem:[%s3 + $0x8c] sm:$0xf]
      %v2166 = vunpack.c.l.b16 %v2136
      %v2167 = vunpack.c.l.b16 %v2137
      %v2168 = vunpack.c.l.b16 %v2138
      %v2169 = vunpack.c.l.b16 %v2139
      %v2170 = vunpack.c.l.b16 %v2140
      %v2171 = vunpack.c.l.b16 %v2141
      %v2172 = vunpack.c.l.b16 %v2142
      %v2173 = vunpack.c.l.b16 %v2143
      %v2174 = vunpack.c.l.b16 %v2144
      %v2175 = vunpack.c.l.b16 %v2145
      %v2176 = vunpack.c.l.b16 %v2146
      %v2177 = vunpack.c.l.b16 %v2147
      %v2178 = vunpack.c.l.b16 %v2148
      %v2179 = vpack.c.b16 %v2167, %v2166
      %v2180 = vpack.c.b16 %v2169, %v2168
      %v2181 = vpack.c.b16 %v2171, %v2170
      %v2182 = vpack.c.b16 %v2173, %v2172
      %v2183 = vpack.c.b16 %v2175, %v2174
      %v2184 = vpack.c.b16 %v2177, %v2176
      %v2185 = vpack.c.b16 %v2178, %v2178
      %v2190 = vunpack.c.l.b16 %v2149
      %v2191 = vunpack.c.l.b16 %v2150
      %v2192 = vunpack.c.l.b16 %v2151
      %v2193 = vunpack.c.l.b16 %v2152
      %v2194 = vpack.c.b16 %v2191, %v2190
      %v2195 = vpack.c.b16 %v2193, %v2192
      %v2199 = vsel %vm334, %v2179, 0
      %v2202 = vsel %vm334, %v2180, 0
      %v2205 = vsel %vm334, %v2181, 0
      %v2208 = vsel %vm334, %v2182, 0
      %v2211 = vsel %vm334, %v2183, 0
      %v2214 = vsel %vm334, %v2184, 0
      %v2217 = vsel %vm334, %v2185, 0
      %2219 = vmatprep.subr.bf16.mxu0 0
      %2220 = vmatpush1.bf16.msra.mxu0 %v2194
      %2221 = vmatprep.subr.bf16.mxu0 0
      %2222 = vmatpush1.bf16.msra.mxu0 %v2195
      %2223 = vmatprep.subr.bf16.mxu0 0
      %2224 = vmatpush1.bf16.msra.mxu0 0
      %2225 = vmatprep.subr.bf16.mxu0 0
      %2226 = vmatpush1.bf16.msra.mxu0 0
      %2227 = vmatprep.subr.bf16.mxu0 0
      %2228 = vmatpush1.bf16.msra.mxu0 0
      %2229 = vmatprep.subr.bf16.mxu0 0
      %2230 = vmatpush1.bf16.msra.mxu0 0
      %2231 = vmatprep.subr.bf16.mxu0 0
      %2232 = vmatpush1.bf16.msra.mxu0 0
      %2233 = vmatprep.subr.bf16.mxu0 0
      %2234 = vmatpush1.bf16.msra.mxu0 0
      %2235 = vmatprep.subr.bf16.mxu0 0
      %2236 = vmatpush1.bf16.msra.mxu0 0
      %2237 = vmatprep.subr.bf16.mxu0 0
      %2238 = vmatpush1.bf16.msra.mxu0 0
      %2239 = vmatprep.subr.bf16.mxu0 0
      %2240 = vmatpush1.bf16.msra.mxu0 0
      %2241 = vmatprep.subr.bf16.mxu0 0
      %2242 = vmatpush1.bf16.msra.mxu0 0
      %2243 = vmatprep.subr.bf16.mxu0 0
      %2244 = vmatpush1.bf16.msra.mxu0 0
      %2245 = vmatprep.subr.bf16.mxu0 0
      %2246 = vmatpush1.bf16.msra.mxu0 0
      %2247 = vmatprep.subr.bf16.mxu0 0
      %2248 = vmatpush1.bf16.msra.mxu0 0
      %2249 = vmatprep.subr.bf16.mxu0 0
      %2250 = vmatpush1.bf16.msra.mxu0 0
      %2251 = vmatprep.mubr.bf16.mxu0 0
      %2252 = vmatmul.mubr.bf16.gmra.mrb[0].mxu0 %v2199
      %v2253 = vpop.f32.mrb[0].mxu0
      %v2254 = vadd.f32 0.0, %v2253
      %v2255 = vpop.f32.mrb[0].mxu0
      %v2256 = vpop.f32.mrb[0].mxu0
      %v2257 = vadd.f32 0.0, %v2256
      %v2258 = vpop.f32.mrb[0].mxu0
      %2259 = vmatprep.mubr.bf16.mxu0 0
      %2260 = vmatmul.mubr.bf16.gmra.mrb[0].mxu0 %v2202
      %v2261 = vpop.f32.mrb[0].mxu0
      %v2262 = vadd.f32 0.0, %v2261
      %v2263 = vpop.f32.mrb[0].mxu0
      %v2264 = vpop.f32.mrb[0].mxu0
      %v2265 = vadd.f32 0.0, %v2264
      %v2266 = vpop.f32.mrb[0].mxu0
      %2267 = vmatprep.mubr.bf16.mxu0 0
      %2268 = vmatmul.mubr.bf16.gmra.mrb[0].mxu0 %v2205
      %v2269 = vpop.f32.mrb[0].mxu0
      %v2270 = vadd.f32 0.0, %v2269
      %v2271 = vpop.f32.mrb[0].mxu0
      %v2272 = vpop.f32.mrb[0].mxu0
      %v2273 = vadd.f32 0.0, %v2272
      %v2274 = vpop.f32.mrb[0].mxu0
      %2275 = vmatprep.mubr.bf16.mxu0 0
      %2276 = vmatmul.mubr.bf16.gmra.mrb[0].mxu0 %v2208
      %v2277 = vpop.f32.mrb[0].mxu0
      %v2278 = vadd.f32 0.0, %v2277
      %v2279 = vpop.f32.mrb[0].mxu0
      %v2280 = vpop.f32.mrb[0].mxu0
      %v2281 = vadd.f32 0.0, %v2280
      %v2282 = vpop.f32.mrb[0].mxu0
      %2283 = vmatprep.mubr.bf16.mxu0 0
      %2284 = vmatmul.mubr.bf16.gmra.mrb[0].mxu0 %v2211
      %v2285 = vpop.f32.mrb[0].mxu0
      %v2286 = vadd.f32 0.0, %v2285
      %v2287 = vpop.f32.mrb[0].mxu0
      %v2288 = vpop.f32.mrb[0].mxu0
      %v2289 = vadd.f32 0.0, %v2288
      %v2290 = vpop.f32.mrb[0].mxu0
      %2291 = vmatprep.mubr.bf16.mxu0 0
      %2292 = vmatmul.mubr.bf16.gmra.mrb[0].mxu0 %v2214
      %v2293 = vpop.f32.mrb[0].mxu0
      %v2294 = vadd.f32 0.0, %v2293
      %v2295 = vpop.f32.mrb[0].mxu0
      %v2296 = vpop.f32.mrb[0].mxu0
      %v2297 = vadd.f32 0.0, %v2296
      %v2298 = vpop.f32.mrb[0].mxu0
      %2299 = vmatprep.mubr.bf16.mxu0 0
      %2300 = vmatmul.mubr.bf16.gmra.mrb[0].mxu0 %v2217
      %v2301 = vpop.f32.mrb[0].mxu0
      %v2302 = vadd.f32 0.0, %v2301
      %v2303 = vpop.f32.mrb[0].mxu0
      %v2304 = vpop.f32.mrb[0].mxu0
      %v2305 = vpop.f32.mrb[0].mxu0
      %2306 = vdwg.mxu0
      %v2307 = vadd.f32 %v2123, %v2254
      %v2308 = vadd.f32 %v2124, %v2257
      %v2309 = vadd.f32 %v2125, %v2262
      %v2310 = vadd.f32 %v2126, %v2265
      %v2311 = vadd.f32 %v2127, %v2270
      %v2312 = vadd.f32 %v2128, %v2273
      %v2313 = vadd.f32 %v2129, %v2278
      %v2314 = vadd.f32 %v2130, %v2281
      %v2315 = vadd.f32 %v2131, %v2286
      %v2316 = vadd.f32 %v2132, %v2289
      %v2317 = vadd.f32 %v2133, %v2294
      %v2318 = vadd.f32 %v2134, %v2297
      %v2319 = vadd.f32 %v2135, %v2302
      %v2320 = vld [vmem:[%s4] sm:$0x1]
      %v2322 = vlaneseq
      %v2323 = vshrl.u32 %v2322, 7
      %v2324 = vsub.s32 0, %v2323
      %v2325 = vrot.slane %v2320, %v2324
      %v2327 = vadd.f32 %v2307, %v2325
      %v2328 = vadd.f32 %v2308, %v2325
      %v2329 = vadd.f32 %v2309, %v2325
      %v2330 = vadd.f32 %v2310, %v2325
      %v2331 = vadd.f32 %v2311, %v2325
      %v2332 = vadd.f32 %v2312, %v2325
      %v2333 = vadd.f32 %v2313, %v2325
      %v2334 = vadd.f32 %v2314, %v2325
      %v2335 = vadd.f32 %v2315, %v2325
      %v2336 = vadd.f32 %v2316, %v2325
      %v2337 = vadd.f32 %v2317, %v2325
      %v2338 = vadd.f32 %v2318, %v2325
      %v2339 = vadd.f32 %v2319, %v2325
      %v2340 = vmax.f32 %v2327, 0.0
      %v2341 = vmax.f32 %v2328, 0.0
      %v2342 = vmax.f32 %v2329, 0.0
      %v2343 = vmax.f32 %v2330, 0.0
      %v2344 = vmax.f32 %v2331, 0.0
      %v2345 = vmax.f32 %v2332, 0.0
      %v2346 = vmax.f32 %v2333, 0.0
      %v2347 = vmax.f32 %v2334, 0.0
      %v2348 = vmax.f32 %v2335, 0.0
      %v2349 = vmax.f32 %v2336, 0.0
      %v2350 = vmax.f32 %v2337, 0.0
      %v2351 = vmax.f32 %v2338, 0.0
      %v2352 = vmax.f32 %v2339, 0.0
      %v2353 = vpack.c.bf16 %v2341, %v2340
      %v2354 = vpack.c.bf16 %v2343, %v2342
      %v2355 = vpack.c.bf16 %v2345, %v2344
      %v2356 = vpack.c.bf16 %v2347, %v2346
      %v2357 = vpack.c.bf16 %v2349, %v2348
      %v2358 = vpack.c.bf16 %v2351, %v2350
      %v2359 = vpack.c.bf16 %v2352, %v2352
      %v2367 = vunpack.c.l.b16 %v2353
      %v2368 = vunpack.c.h.b16 %v2353
      %v2369 = vunpack.c.l.b16 %v2354
      %v2370 = vunpack.c.h.b16 %v2354
      %v2371 = vunpack.c.l.b16 %v2355
      %v2372 = vunpack.c.h.b16 %v2355
      %v2373 = vunpack.c.l.b16 %v2356
      %v2374 = vunpack.c.h.b16 %v2356
      %v2375 = vunpack.c.l.b16 %v2357
      %v2376 = vunpack.c.h.b16 %v2357
      %v2377 = vunpack.c.l.b16 %v2358
      %v2378 = vunpack.c.h.b16 %v2358
      %v2379 = vunpack.c.l.b16 %v2359
      %v2380 = vpack.c.b16 %v2367, %v2367
      %v2381 = vpack.c.b16 %v2368, %v2368
      %v2382 = vpack.c.b16 %v2369, %v2369
      %v2383 = vpack.c.b16 %v2370, %v2370
      %v2384 = vpack.c.b16 %v2371, %v2371
      %v2385 = vpack.c.b16 %v2372, %v2372
      %v2386 = vpack.c.b16 %v2373, %v2373
      %v2387 = vpack.c.b16 %v2374, %v2374
      %v2388 = vpack.c.b16 %v2375, %v2375
      %v2389 = vpack.c.b16 %v2376, %v2376
      %v2390 = vpack.c.b16 %v2377, %v2377
      %v2391 = vpack.c.b16 %v2378, %v2378
      %v2392 = vpack.c.b16 %v2379, %v2379
      %2406 = vst.msk [vmem:[#allocation3] sm:$0xf] %vm628, %v2380
      %2407 = vst.msk [vmem:[#allocation3 + $0x4] sm:$0xf] %vm628, %v2381
      %2408 = vst.msk [vmem:[#allocation3 + $0x8] sm:$0xf] %vm628, %v2382
      %2409 = vst.msk [vmem:[#allocation3 + $0xc] sm:$0xf] %vm628, %v2383
      %2410 = vst.msk [vmem:[#allocation3 + $0x10] sm:$0xf] %vm628, %v2384
      %2411 = vst.msk [vmem:[#allocation3 + $0x14] sm:$0xf] %vm628, %v2385
      %2412 = vst.msk [vmem:[#allocation3 + $0x18] sm:$0xf] %vm628, %v2386
      %2413 = vst.msk [vmem:[#allocation3 + $0x1c] sm:$0xf] %vm628, %v2387
      %2414 = vst.msk [vmem:[#allocation3 + $0x20] sm:$0xf] %vm628, %v2388
      %2415 = vst.msk [vmem:[#allocation3 + $0x24] sm:$0xf] %vm628, %v2389
      %2416 = vst.msk [vmem:[#allocation3 + $0x28] sm:$0xf] %vm628, %v2390
      %2417 = vst.msk [vmem:[#allocation3 + $0x2c] sm:$0xf] %vm628, %v2391
      %v2418 = vld [vmem:[#allocation3 + $0x30] sm:$0x1]
      %v2419 = vsel %vm646, %v2392, %v2418
      %2420 = vst [vmem:[#allocation3 + $0x30] sm:$0x1] %v2419
      %v2421 = vld [vmem:[#allocation3] sm:$0xf]
      %v2422 = vld [vmem:[#allocation3 + $0x4] sm:$0xf]
      %v2423 = vld [vmem:[#allocation3 + $0x8] sm:$0xf]
      %v2424 = vld [vmem:[#allocation3 + $0xc] sm:$0xf]
      %v2425 = vld [vmem:[#allocation3 + $0x10] sm:$0xf]
      %v2426 = vld [vmem:[#allocation3 + $0x14] sm:$0xf]
      %v2427 = vld [vmem:[#allocation3 + $0x18] sm:$0xf]
      %v2428 = vld [vmem:[#allocation3 + $0x1c] sm:$0xf]
      %v2429 = vld [vmem:[#allocation3 + $0x20] sm:$0xf]
      %v2430 = vld [vmem:[#allocation3 + $0x24] sm:$0x1]
      %v2431 = vld [vmem:[%s5] sm:$0xf]
      %v2432 = vld [vmem:[%s5 + $0x4] sm:$0xf]
      %v2433 = vld [vmem:[%s5 + $0x8] sm:$0xf]
      %v2434 = vld [vmem:[%s5 + $0xc] sm:$0xf]
      %v2435 = vld [vmem:[%s5 + $0x10] sm:$0xf]
      %v2436 = vld [vmem:[%s5 + $0x14] sm:$0xf]
      %v2437 = vld [vmem:[%s5 + $0x18] sm:$0xf]
      %v2438 = vld [vmem:[%s5 + $0x1c] sm:$0xf]
      %v2449 = vunpack.c.l.b16 %v2421
      %v2450 = vunpack.c.l.b16 %v2422
      %v2451 = vunpack.c.l.b16 %v2423
      %v2452 = vunpack.c.l.b16 %v2424
      %v2453 = vunpack.c.l.b16 %v2425
      %v2454 = vunpack.c.l.b16 %v2426
      %v2455 = vunpack.c.l.b16 %v2427
      %v2456 = vunpack.c.l.b16 %v2428
      %v2457 = vunpack.c.l.b16 %v2429
      %v2458 = vunpack.c.l.b16 %v2430
      %v2459 = vpack.c.b16 %v2450, %v2449
      %v2460 = vpack.c.b16 %v2452, %v2451
      %v2461 = vpack.c.b16 %v2454, %v2453
      %v2462 = vpack.c.b16 %v2456, %v2455
      %v2463 = vpack.c.b16 %v2458, %v2457
      %v2465 = vshrl.u32 %v2459, 16
      %v2467 = vshll.u32 %v2459, 16
      %v2469 = vrot.slane %v2467, 1
      %v2470 = vor.u32 %v2465, %v2469
      %v2472 = vshll.u32 %v2460, 16
      %v2474 = vrot.slane %v2472, 1
      %v2475 = vsel %vm704, %v2470, %v2474
      %v2476 = vshrl.u32 %v2460, 16
      %v2478 = vor.u32 %v2476, %v2474
      %v2480 = vshll.u32 %v2461, 16
      %v2482 = vrot.slane %v2480, 1
      %v2483 = vsel %vm704, %v2478, %v2482
      %v2484 = vshrl.u32 %v2461, 16
      %v2486 = vor.u32 %v2484, %v2482
      %v2488 = vshll.u32 %v2462, 16
      %v2490 = vrot.slane %v2488, 1
      %v2491 = vsel %vm704, %v2486, %v2490
      %v2492 = vshrl.u32 %v2462, 16
      %v2494 = vor.u32 %v2492, %v2490
      %v2496 = vshll.u32 %v2463, 16
      %v2498 = vrot.slane %v2496, 1
      %v2499 = vsel %vm704, %v2494, %v2498
      %v2500 = vshrl.u32 %v2463, 16
      %v2502 = vor.u32 %v2500, %v2498
      %v2507 = vunpack.c.l.b16 %v2435
      %v2508 = vunpack.c.l.b16 %v2436
      %v2509 = vunpack.c.l.b16 %v2437
      %v2510 = vunpack.c.l.b16 %v2438
      %v2511 = vpack.c.b16 %v2508, %v2507
      %v2512 = vpack.c.b16 %v2510, %v2509
      %v2516 = vsel %vm334, %v2475, 0
      %v2519 = vsel %vm334, %v2483, 0
      %v2522 = vsel %vm334, %v2491, 0
      %v2525 = vsel %vm334, %v2499, 0
      %v2528 = vsel %vm334, %v2502, 0
      %2530 = vmatprep.subr.bf16.mxu0 0
      %2531 = vmatpush1.bf16.msra.mxu0 %v2511
      %2532 = vmatprep.subr.bf16.mxu0 0
      %2533 = vmatpush1.bf16.msra.mxu0 %v2512
      %2534 = vmatprep.subr.bf16.mxu0 0
      %2535 = vmatpush1.bf16.msra.mxu0 0
      %2536 = vmatprep.subr.bf16.mxu0 0
      %2537 = vmatpush1.bf16.msra.mxu0 0
      %2538 = vmatprep.subr.bf16.mxu0 0
      %2539 = vmatpush1.bf16.msra.mxu0 0
      %2540 = vmatprep.subr.bf16.mxu0 0
      %2541 = vmatpush1.bf16.msra.mxu0 0
      %2542 = vmatprep.subr.bf16.mxu0 0
      %2543 = vmatpush1.bf16.msra.mxu0 0
      %2544 = vmatprep.subr.bf16.mxu0 0
      %2545 = vmatpush1.bf16.msra.mxu0 0
      %2546 = vmatprep.subr.bf16.mxu0 0
      %2547 = vmatpush1.bf16.msra.mxu0 0
      %2548 = vmatprep.subr.bf16.mxu0 0
      %2549 = vmatpush1.bf16.msra.mxu0 0
      %2550 = vmatprep.subr.bf16.mxu0 0
      %2551 = vmatpush1.bf16.msra.mxu0 0
      %2552 = vmatprep.subr.bf16.mxu0 0
      %2553 = vmatpush1.bf16.msra.mxu0 0
      %2554 = vmatprep.subr.bf16.mxu0 0
      %2555 = vmatpush1.bf16.msra.mxu0 0
      %2556 = vmatprep.subr.bf16.mxu0 0
      %2557 = vmatpush1.bf16.msra.mxu0 0
      %2558 = vmatprep.subr.bf16.mxu0 0
      %2559 = vmatpush1.bf16.msra.mxu0 0
      %2560 = vmatprep.subr.bf16.mxu0 0
      %2561 = vmatpush1.bf16.msra.mxu0 0
      %2562 = vmatprep.mubr.bf16.mxu0 0
      %2563 = vmatmul.mubr.bf16.gmra.mrb[0].mxu0 %v2516
      %v2564 = vpop.f32.mrb[0].mxu0
      %v2565 = vadd.f32 0.0, %v2564
      %v2566 = vpop.f32.mrb[0].mxu0
      %v2567 = vpop.f32.mrb[0].mxu0
      %v2568 = vadd.f32 0.0, %v2567
      %v2569 = vpop.f32.mrb[0].mxu0
      %2570 = vmatprep.mubr.bf16.mxu0 0
      %2571 = vmatmul.mubr.bf16.gmra.mrb[0].mxu0 %v2519
      %v2572 = vpop.f32.mrb[0].mxu0
      %v2573 = vadd.f32 0.0, %v2572
      %v2574 = vpop.f32.mrb[0].mxu0
      %v2575 = vpop.f32.mrb[0].mxu0
      %v2576 = vadd.f32 0.0, %v2575
      %v2577 = vpop.f32.mrb[0].mxu0
      %2578 = vmatprep.mubr.bf16.mxu0 0
      %2579 = vmatmul.mubr.bf16.gmra.mrb[0].mxu0 %v2522
      %v2580 = vpop.f32.mrb[0].mxu0
      %v2581 = vadd.f32 0.0, %v2580
      %v2582 = vpop.f32.mrb[0].mxu0
      %v2583 = vpop.f32.mrb[0].mxu0
      %v2584 = vadd.f32 0.0, %v2583
      %v2585 = vpop.f32.mrb[0].mxu0
      %2586 = vmatprep.mubr.bf16.mxu0 0
      %2587 = vmatmul.mubr.bf16.gmra.mrb[0].mxu0 %v2525
      %v2588 = vpop.f32.mrb[0].mxu0
      %v2589 = vadd.f32 0.0, %v2588
      %v2590 = vpop.f32.mrb[0].mxu0
      %v2591 = vpop.f32.mrb[0].mxu0
      %v2592 = vadd.f32 0.0, %v2591
      %v2593 = vpop.f32.mrb[0].mxu0
      %2594 = vmatprep.mubr.bf16.mxu0 0
      %2595 = vmatmul.mubr.bf16.gmra.mrb[0].mxu0 %v2528
      %v2596 = vpop.f32.mrb[0].mxu0
      %v2597 = vadd.f32 0.0, %v2596
      %v2598 = vpop.f32.mrb[0].mxu0
      %v2599 = vpop.f32.mrb[0].mxu0
      %v2600 = vadd.f32 0.0, %v2599
      %v2601 = vpop.f32.mrb[0].mxu0
      %2602 = vdwg.mxu0
      %v2607 = vunpack.c.l.b16 %v2431
      %v2608 = vunpack.c.l.b16 %v2432
      %v2609 = vunpack.c.l.b16 %v2433
      %v2610 = vunpack.c.l.b16 %v2434
      %v2611 = vpack.c.b16 %v2608, %v2607
      %v2612 = vpack.c.b16 %v2610, %v2609
      %v2615 = vsel %vm334, %v2459, 0
      %v2617 = vsel %vm334, %v2460, 0
      %v2619 = vsel %vm334, %v2461, 0
      %v2621 = vsel %vm334, %v2462, 0
      %v2623 = vsel %vm334, %v2463, 0
      %2625 = vmatprep.subr.bf16.mxu0 0
      %2626 = vmatpush1.bf16.msra.mxu0 %v2611
      %2627 = vmatprep.subr.bf16.mxu0 0
      %2628 = vmatpush1.bf16.msra.mxu0 %v2612
      %2629 = vmatprep.subr.bf16.mxu0 0
      %2630 = vmatpush1.bf16.msra.mxu0 0
      %2631 = vmatprep.subr.bf16.mxu0 0
      %2632 = vmatpush1.bf16.msra.mxu0 0
      %2633 = vmatprep.subr.bf16.mxu0 0
      %2634 = vmatpush1.bf16.msra.mxu0 0
      %2635 = vmatprep.subr.bf16.mxu0 0
      %2636 = vmatpush1.bf16.msra.mxu0 0
      %2637 = vmatprep.subr.bf16.mxu0 0
      %2638 = vmatpush1.bf16.msra.mxu0 0
      %2639 = vmatprep.subr.bf16.mxu0 0
      %2640 = vmatpush1.bf16.msra.mxu0 0
      %2641 = vmatprep.subr.bf16.mxu0 0
      %2642 = vmatpush1.bf16.msra.mxu0 0
      %2643 = vmatprep.subr.bf16.mxu0 0
      %2644 = vmatpush1.bf16.msra.mxu0 0
      %2645 = vmatprep.subr.bf16.mxu0 0
      %2646 = vmatpush1.bf16.msra.mxu0 0
      %2647 = vmatprep.subr.bf16.mxu0 0
      %2648 = vmatpush1.bf16.msra.mxu0 0
      %2649 = vmatprep.subr.bf16.mxu0 0
      %2650 = vmatpush1.bf16.msra.mxu0 0
      %2651 = vmatprep.subr.bf16.mxu0 0
      %2652 = vmatpush1.bf16.msra.mxu0 0
      %2653 = vmatprep.subr.bf16.mxu0 0
      %2654 = vmatpush1.bf16.msra.mxu0 0
      %2655 = vmatprep.subr.bf16.mxu0 0
      %2656 = vmatpush1.bf16.msra.mxu0 0
      %2657 = vmatprep.mubr.bf16.mxu0 0
      %2658 = vmatmul.mubr.bf16.gmra.mrb[0].mxu0 %v2615
      %v2659 = vpop.f32.mrb[0].mxu0
      %v2660 = vadd.f32 %v2565, %v2659
      %v2661 = vpop.f32.mrb[0].mxu0
      %v2662 = vpop.f32.mrb[0].mxu0
      %v2663 = vadd.f32 %v2568, %v2662
      %v2664 = vpop.f32.mrb[0].mxu0
      %2665 = vmatprep.mubr.bf16.mxu0 0
      %2666 = vmatmul.mubr.bf16.gmra.mrb[0].mxu0 %v2617
      %v2667 = vpop.f32.mrb[0].mxu0
      %v2668 = vadd.f32 %v2573, %v2667
      %v2669 = vpop.f32.mrb[0].mxu0
      %v2670 = vpop.f32.mrb[0].mxu0
      %v2671 = vadd.f32 %v2576, %v2670
      %v2672 = vpop.f32.mrb[0].mxu0
      %2673 = vmatprep.mubr.bf16.mxu0 0
      %2674 = vmatmul.mubr.bf16.gmra.mrb[0].mxu0 %v2619
      %v2675 = vpop.f32.mrb[0].mxu0
      %v2676 = vadd.f32 %v2581, %v2675
      %v2677 = vpop.f32.mrb[0].mxu0
      %v2678 = vpop.f32.mrb[0].mxu0
      %v2679 = vadd.f32 %v2584, %v2678
      %v2680 = vpop.f32.mrb[0].mxu0
      %2681 = vmatprep.mubr.bf16.mxu0 0
      %2682 = vmatmul.mubr.bf16.gmra.mrb[0].mxu0 %v2621
      %v2683 = vpop.f32.mrb[0].mxu0
      %v2684 = vadd.f32 %v2589, %v2683
      %v2685 = vpop.f32.mrb[0].mxu0
      %v2686 = vpop.f32.mrb[0].mxu0
      %v2687 = vadd.f32 %v2592, %v2686
      %v2688 = vpop.f32.mrb[0].mxu0
      %2689 = vmatprep.mubr.bf16.mxu0 0
      %2690 = vmatmul.mubr.bf16.gmra.mrb[0].mxu0 %v2623
      %v2691 = vpop.f32.mrb[0].mxu0
      %v2692 = vadd.f32 %v2597, %v2691
      %v2693 = vpop.f32.mrb[0].mxu0
      %v2694 = vpop.f32.mrb[0].mxu0
      %v2695 = vadd.f32 %v2600, %v2694
      %v2696 = vpop.f32.mrb[0].mxu0
      %2697 = vdwg.mxu0
      %v2698 = vld [vmem:[#allocation3] sm:$0xe]
      %v2699 = vld [vmem:[#allocation3 + $0x24] sm:$0x3]
      %v2700 = vld [vmem:[%s5 + $0x20] sm:$0xf]
      %v2701 = vld [vmem:[%s5 + $0x24] sm:$0xf]
      %v2702 = vld [vmem:[%s5 + $0x28] sm:$0xf]
      %v2703 = vld [vmem:[%s5 + $0x2c] sm:$0xf]
      %v2706 = vunpack.c.l.b16 %v2698
      %v2707 = vunpack.c.l.b16 %v2699
      %v2708 = vpack.c.b16 %v2450, %v2706
      %v2709 = vpack.c.b16 %v2707, %v2457
      %v2710 = vrot.slane %v2708, 1
      %v2711 = vrot.slane %v2460, 1
      %v2712 = vsel %vm1006, %v2710, %v2711
      %v2713 = vrot.slane %v2461, 1
      %v2714 = vsel %vm1006, %v2711, %v2713
      %v2715 = vrot.slane %v2462, 1
      %v2716 = vsel %vm1006, %v2713, %v2715
      %v2717 = vrot.slane %v2709, 1
      %v2718 = vsel %vm1006, %v2715, %v2717
      %v2723 = vunpack.c.l.b16 %v2700
      %v2724 = vunpack.c.l.b16 %v2701
      %v2725 = vunpack.c.l.b16 %v2702
      %v2726 = vunpack.c.l.b16 %v2703
      %v2727 = vpack.c.b16 %v2724, %v2723
      %v2728 = vpack.c.b16 %v2726, %v2725
      %v2732 = vsel %vm334, %v2712, 0
      %v2735 = vsel %vm334, %v2714, 0
      %v2738 = vsel %vm334, %v2716, 0
      %v2741 = vsel %vm334, %v2718, 0
      %v2744 = vsel %vm334, %v2717, 0
      %2746 = vmatprep.subr.bf16.mxu0 0
      %2747 = vmatpush1.bf16.msra.mxu0 %v2727
      %2748 = vmatprep.subr.bf16.mxu0 0
      %2749 = vmatpush1.bf16.msra.mxu0 %v2728
      %2750 = vmatprep.subr.bf16.mxu0 0
      %2751 = vmatpush1.bf16.msra.mxu0 0
      %2752 = vmatprep.subr.bf16.mxu0 0
      %2753 = vmatpush1.bf16.msra.mxu0 0
      %2754 = vmatprep.subr.bf16.mxu0 0
      %2755 = vmatpush1.bf16.msra.mxu0 0
      %2756 = vmatprep.subr.bf16.mxu0 0
      %2757 = vmatpush1.bf16.msra.mxu0 0
      %2758 = vmatprep.subr.bf16.mxu0 0
      %2759 = vmatpush1.bf16.msra.mxu0 0
      %2760 = vmatprep.subr.bf16.mxu0 0
      %2761 = vmatpush1.bf16.msra.mxu0 0
      %2762 = vmatprep.subr.bf16.mxu0 0
      %2763 = vmatpush1.bf16.msra.mxu0 0
      %2764 = vmatprep.subr.bf16.mxu0 0
      %2765 = vmatpush1.bf16.msra.mxu0 0
      %2766 = vmatprep.subr.bf16.mxu0 0
      %2767 = vmatpush1.bf16.msra.mxu0 0
      %2768 = vmatprep.subr.bf16.mxu0 0
      %2769 = vmatpush1.bf16.msra.mxu0 0
      %2770 = vmatprep.subr.bf16.mxu0 0
      %2771 = vmatpush1.bf16.msra.mxu0 0
      %2772 = vmatprep.subr.bf16.mxu0 0
      %2773 = vmatpush1.bf16.msra.mxu0 0
      %2774 = vmatprep.subr.bf16.mxu0 0
      %2775 = vmatpush1.bf16.msra.mxu0 0
      %2776 = vmatprep.subr.bf16.mxu0 0
      %2777 = vmatpush1.bf16.msra.mxu0 0
      %2778 = vmatprep.mubr.bf16.mxu0 0
      %2779 = vmatmul.mubr.bf16.gmra.mrb[0].mxu0 %v2732
      %v2780 = vpop.f32.mrb[0].mxu0
      %v2781 = vadd.f32 0.0, %v2780
      %v2782 = vpop.f32.mrb[0].mxu0
      %v2783 = vpop.f32.mrb[0].mxu0
      %v2784 = vadd.f32 0.0, %v2783
      %v2785 = vpop.f32.mrb[0].mxu0
      %2786 = vmatprep.mubr.bf16.mxu0 0
      %2787 = vmatmul.mubr.bf16.gmra.mrb[0].mxu0 %v2735
      %v2788 = vpop.f32.mrb[0].mxu0
      %v2789 = vadd.f32 0.0, %v2788
      %v2790 = vpop.f32.mrb[0].mxu0
      %v2791 = vpop.f32.mrb[0].mxu0
      %v2792 = vadd.f32 0.0, %v2791
      %v2793 = vpop.f32.mrb[0].mxu0
      %2794 = vmatprep.mubr.bf16.mxu0 0
      %2795 = vmatmul.mubr.bf16.gmra.mrb[0].mxu0 %v2738
      %v2796 = vpop.f32.mrb[0].mxu0
      %v2797 = vadd.f32 0.0, %v2796
      %v2798 = vpop.f32.mrb[0].mxu0
      %v2799 = vpop.f32.mrb[0].mxu0
      %v2800 = vadd.f32 0.0, %v2799
      %v2801 = vpop.f32.mrb[0].mxu0
      %2802 = vmatprep.mubr.bf16.mxu0 0
      %2803 = vmatmul.mubr.bf16.gmra.mrb[0].mxu0 %v2741
      %v2804 = vpop.f32.mrb[0].mxu0
      %v2805 = vadd.f32 0.0, %v2804
      %v2806 = vpop.f32.mrb[0].mxu0
      %v2807 = vpop.f32.mrb[0].mxu0
      %v2808 = vadd.f32 0.0, %v2807
      %v2809 = vpop.f32.mrb[0].mxu0
      %2810 = vmatprep.mubr.bf16.mxu0 0
      %2811 = vmatmul.mubr.bf16.gmra.mrb[0].mxu0 %v2744
      %v2812 = vpop.f32.mrb[0].mxu0
      %v2813 = vadd.f32 0.0, %v2812
      %v2814 = vpop.f32.mrb[0].mxu0
      %v2815 = vpop.f32.mrb[0].mxu0
      %v2816 = vadd.f32 0.0, %v2815
      %v2817 = vpop.f32.mrb[0].mxu0
      %2818 = vdwg.mxu0
      %v2819 = vadd.f32 %v2660, %v2781
      %v2820 = vadd.f32 %v2663, %v2784
      %v2821 = vadd.f32 %v2668, %v2789
      %v2822 = vadd.f32 %v2671, %v2792
      %v2823 = vadd.f32 %v2676, %v2797
      %v2824 = vadd.f32 %v2679, %v2800
      %v2825 = vadd.f32 %v2684, %v2805
      %v2826 = vadd.f32 %v2687, %v2808
      %v2827 = vadd.f32 %v2692, %v2813
      %v2828 = vadd.f32 %v2695, %v2816
      %v2829 = vld [vmem:[#allocation3 + $0x4] sm:$0xe]
      %v2830 = vld [vmem:[#allocation3 + $0x8] sm:$0xf]
      %v2831 = vld [vmem:[#allocation3 + $0xc] sm:$0xf]
      %v2832 = vld [vmem:[#allocation3 + $0x10] sm:$0xf]
      %v2833 = vld [vmem:[#allocation3 + $0x14] sm:$0xf]
      %v2834 = vld [vmem:[#allocation3 + $0x18] sm:$0xf]
      %v2835 = vld [vmem:[#allocation3 + $0x1c] sm:$0xf]
      %v2836 = vld [vmem:[#allocation3 + $0x20] sm:$0xf]
      %v2837 = vld [vmem:[#allocation3 + $0x24] sm:$0xf]
      %v2838 = vld [vmem:[#allocation3 + $0x28] sm:$0x3]
      %v2839 = vld [vmem:[%s5 + $0x30] sm:$0xf]
      %v2840 = vld [vmem:[%s5 + $0x34] sm:$0xf]
      %v2841 = vld [vmem:[%s5 + $0x38] sm:$0xf]
      %v2842 = vld [vmem:[%s5 + $0x3c] sm:$0xf]
      %v2853 = vunpack.c.l.b16 %v2829
      %v2854 = vunpack.c.l.b16 %v2830
      %v2855 = vunpack.c.l.b16 %v2831
      %v2856 = vunpack.c.l.b16 %v2832
      %v2857 = vunpack.c.l.b16 %v2833
      %v2858 = vunpack.c.l.b16 %v2834
      %v2859 = vunpack.c.l.b16 %v2835
      %v2860 = vunpack.c.l.b16 %v2836
      %v2861 = vunpack.c.l.b16 %v2837
      %v2862 = vunpack.c.l.b16 %v2838
      %v2863 = vpack.c.b16 %v2854, %v2853
      %v2864 = vpack.c.b16 %v2856, %v2855
      %v2865 = vpack.c.b16 %v2858, %v2857
      %v2866 = vpack.c.b16 %v2860, %v2859
      %v2867 = vpack.c.b16 %v2862, %v2861
      %v2869 = vshrl.u32 %v2863, 16
      %v2871 = vrot.slane %v2869, 1
      %v2872 = vshll.u32 %v2863, 16
      %v2874 = vrot.slane %v2872, 2
      %v2875 = vor.u32 %v2871, %v2874
      %v2877 = vshrl.u32 %v2864, 16
      %v2879 = vrot.slane %v2877, 1
      %v2880 = vshll.u32 %v2864, 16
      %v2882 = vrot.slane %v2880, 2
      %v2883 = vor.u32 %v2879, %v2882
      %v2884 = vsel %vm1204, %v2875, %v2883
      %v2886 = vshrl.u32 %v2865, 16
      %v2888 = vrot.slane %v2886, 1
      %v2889 = vshll.u32 %v2865, 16
      %v2891 = vrot.slane %v2889, 2
      %v2892 = vor.u32 %v2888, %v2891
      %v2893 = vsel %vm1204, %v2883, %v2892
      %v2895 = vshrl.u32 %v2866, 16
      %v2897 = vrot.slane %v2895, 1
      %v2898 = vshll.u32 %v2866, 16
      %v2900 = vrot.slane %v2898, 2
      %v2901 = vor.u32 %v2897, %v2900
      %v2902 = vsel %vm1204, %v2892, %v2901
      %v2904 = vshrl.u32 %v2867, 16
      %v2906 = vrot.slane %v2904, 1
      %v2907 = vshll.u32 %v2867, 16
      %v2909 = vrot.slane %v2907, 2
      %v2910 = vor.u32 %v2906, %v2909
      %v2911 = vsel %vm1204, %v2901, %v2910
      %v2916 = vunpack.c.l.b16 %v2839
      %v2917 = vunpack.c.l.b16 %v2840
      %v2918 = vunpack.c.l.b16 %v2841
      %v2919 = vunpack.c.l.b16 %v2842
      %v2920 = vpack.c.b16 %v2917, %v2916
      %v2921 = vpack.c.b16 %v2919, %v2918
      %v2925 = vsel %vm334, %v2884, 0
      %v2928 = vsel %vm334, %v2893, 0
      %v2931 = vsel %vm334, %v2902, 0
      %v2934 = vsel %vm334, %v2911, 0
      %v2937 = vsel %vm334, %v2910, 0
      %2939 = vmatprep.subr.bf16.mxu0 0
      %2940 = vmatpush1.bf16.msra.mxu0 %v2920
      %2941 = vmatprep.subr.bf16.mxu0 0
      %2942 = vmatpush1.bf16.msra.mxu0 %v2921
      %2943 = vmatprep.subr.bf16.mxu0 0
      %2944 = vmatpush1.bf16.msra.mxu0 0
      %2945 = vmatprep.subr.bf16.mxu0 0
      %2946 = vmatpush1.bf16.msra.mxu0 0
      %2947 = vmatprep.subr.bf16.mxu0 0
      %2948 = vmatpush1.bf16.msra.mxu0 0
      %2949 = vmatprep.subr.bf16.mxu0 0
      %2950 = vmatpush1.bf16.msra.mxu0 0
      %2951 = vmatprep.subr.bf16.mxu0 0
      %2952 = vmatpush1.bf16.msra.mxu0 0
      %2953 = vmatprep.subr.bf16.mxu0 0
      %2954 = vmatpush1.bf16.msra.mxu0 0
      %2955 = vmatprep.subr.bf16.mxu0 0
      %2956 = vmatpush1.bf16.msra.mxu0 0
      %2957 = vmatprep.subr.bf16.mxu0 0
      %2958 = vmatpush1.bf16.msra.mxu0 0
      %2959 = vmatprep.subr.bf16.mxu0 0
      %2960 = vmatpush1.bf16.msra.mxu0 0
      %2961 = vmatprep.subr.bf16.mxu0 0
      %2962 = vmatpush1.bf16.msra.mxu0 0
      %2963 = vmatprep.subr.bf16.mxu0 0
      %2964 = vmatpush1.bf16.msra.mxu0 0
      %2965 = vmatprep.subr.bf16.mxu0 0
      %2966 = vmatpush1.bf16.msra.mxu0 0
      %2967 = vmatprep.subr.bf16.mxu0 0
      %2968 = vmatpush1.bf16.msra.mxu0 0
      %2969 = vmatprep.subr.bf16.mxu0 0
      %2970 = vmatpush1.bf16.msra.mxu0 0
      %2971 = vmatprep.mubr.bf16.mxu0 0
      %2972 = vmatmul.mubr.bf16.gmra.mrb[0].mxu0 %v2925
      %v2973 = vpop.f32.mrb[0].mxu0
      %v2974 = vadd.f32 0.0, %v2973
      %v2975 = vpop.f32.mrb[0].mxu0
      %v2976 = vpop.f32.mrb[0].mxu0
      %v2977 = vadd.f32 0.0, %v2976
      %v2978 = vpop.f32.mrb[0].mxu0
      %2979 = vmatprep.mubr.bf16.mxu0 0
      %2980 = vmatmul.mubr.bf16.gmra.mrb[0].mxu0 %v2928
      %v2981 = vpop.f32.mrb[0].mxu0
      %v2982 = vadd.f32 0.0, %v2981
      %v2983 = vpop.f32.mrb[0].mxu0
      %v2984 = vpop.f32.mrb[0].mxu0
      %v2985 = vadd.f32 0.0, %v2984
      %v2986 = vpop.f32.mrb[0].mxu0
      %2987 = vmatprep.mubr.bf16.mxu0 0
      %2988 = vmatmul.mubr.bf16.gmra.mrb[0].mxu0 %v2931
      %v2989 = vpop.f32.mrb[0].mxu0
      %v2990 = vadd.f32 0.0, %v2989
      %v2991 = vpop.f32.mrb[0].mxu0
      %v2992 = vpop.f32.mrb[0].mxu0
      %v2993 = vadd.f32 0.0, %v2992
      %v2994 = vpop.f32.mrb[0].mxu0
      %2995 = vmatprep.mubr.bf16.mxu0 0
      %2996 = vmatmul.mubr.bf16.gmra.mrb[0].mxu0 %v2934
      %v2997 = vpop.f32.mrb[0].mxu0
      %v2998 = vadd.f32 0.0, %v2997
      %v2999 = vpop.f32.mrb[0].mxu0
      %v3000 = vpop.f32.mrb[0].mxu0
      %v3001 = vadd.f32 0.0, %v3000
      %v3002 = vpop.f32.mrb[0].mxu0
      %3003 = vmatprep.mubr.bf16.mxu0 0
      %3004 = vmatmul.mubr.bf16.gmra.mrb[0].mxu0 %v2937
      %v3005 = vpop.f32.mrb[0].mxu0
      %v3006 = vadd.f32 0.0, %v3005
      %v3007 = vpop.f32.mrb[0].mxu0
      %v3008 = vpop.f32.mrb[0].mxu0
      %v3009 = vadd.f32 0.0, %v3008
      %v3010 = vpop.f32.mrb[0].mxu0
      %3011 = vdwg.mxu0
      %v3012 = vadd.f32 %v2819, %v2974
      %v3013 = vadd.f32 %v2820, %v2977
      %v3014 = vadd.f32 %v2821, %v2982
      %v3015 = vadd.f32 %v2822, %v2985
      %v3016 = vadd.f32 %v2823, %v2990
      %v3017 = vadd.f32 %v2824, %v2993
      %v3018 = vadd.f32 %v2825, %v2998
      %v3019 = vadd.f32 %v2826, %v3001
      %v3020 = vadd.f32 %v2827, %v3006
      %v3021 = vadd.f32 %v2828, %v3009
      %v3022 = vld [vmem:[#allocation3 + $0x4] sm:$0xc]
      %v3023 = vld [vmem:[#allocation3 + $0x28] sm:$0x7]
      %v3024 = vld [vmem:[%s5 + $0x40] sm:$0xf]
      %v3025 = vld [vmem:[%s5 + $0x44] sm:$0xf]
      %v3026 = vld [vmem:[%s5 + $0x48] sm:$0xf]
      %v3027 = vld [vmem:[%s5 + $0x4c] sm:$0xf]
      %v3030 = vunpack.c.l.b16 %v3022
      %v3031 = vunpack.c.l.b16 %v3023
      %v3032 = vpack.c.b16 %v2854, %v3030
      %v3033 = vpack.c.b16 %v3031, %v2861
      %v3034 = vrot.slane %v3032, 2
      %v3035 = vrot.slane %v2864, 2
      %v3036 = vsel %vm1413, %v3034, %v3035
      %v3037 = vrot.slane %v2865, 2
      %v3038 = vsel %vm1413, %v3035, %v3037
      %v3039 = vrot.slane %v2866, 2
      %v3040 = vsel %vm1413, %v3037, %v3039
      %v3041 = vrot.slane %v3033, 2
      %v3042 = vsel %vm1413, %v3039, %v3041
      %v3047 = vunpack.c.l.b16 %v3024
      %v3048 = vunpack.c.l.b16 %v3025
      %v3049 = vunpack.c.l.b16 %v3026
      %v3050 = vunpack.c.l.b16 %v3027
      %v3051 = vpack.c.b16 %v3048, %v3047
      %v3052 = vpack.c.b16 %v3050, %v3049
      %v3056 = vsel %vm334, %v3036, 0
      %v3059 = vsel %vm334, %v3038, 0
      %v3062 = vsel %vm334, %v3040, 0
      %v3065 = vsel %vm334, %v3042, 0
      %v3068 = vsel %vm334, %v3041, 0
      %3070 = vmatprep.subr.bf16.mxu0 0
      %3071 = vmatpush1.bf16.msra.mxu0 %v3051
      %3072 = vmatprep.subr.bf16.mxu0 0
      %3073 = vmatpush1.bf16.msra.mxu0 %v3052
      %3074 = vmatprep.subr.bf16.mxu0 0
      %3075 = vmatpush1.bf16.msra.mxu0 0
      %3076 = vmatprep.subr.bf16.mxu0 0
      %3077 = vmatpush1.bf16.msra.mxu0 0
      %3078 = vmatprep.subr.bf16.mxu0 0
      %3079 = vmatpush1.bf16.msra.mxu0 0
      %3080 = vmatprep.subr.bf16.mxu0 0
      %3081 = vmatpush1.bf16.msra.mxu0 0
      %3082 = vmatprep.subr.bf16.mxu0 0
      %3083 = vmatpush1.bf16.msra.mxu0 0
      %3084 = vmatprep.subr.bf16.mxu0 0
      %3085 = vmatpush1.bf16.msra.mxu0 0
      %3086 = vmatprep.subr.bf16.mxu0 0
      %3087 = vmatpush1.bf16.msra.mxu0 0
      %3088 = vmatprep.subr.bf16.mxu0 0
      %3089 = vmatpush1.bf16.msra.mxu0 0
      %3090 = vmatprep.subr.bf16.mxu0 0
      %3091 = vmatpush1.bf16.msra.mxu0 0
      %3092 = vmatprep.subr.bf16.mxu0 0
      %3093 = vmatpush1.bf16.msra.mxu0 0
      %3094 = vmatprep.subr.bf16.mxu0 0
      %3095 = vmatpush1.bf16.msra.mxu0 0
      %3096 = vmatprep.subr.bf16.mxu0 0
      %3097 = vmatpush1.bf16.msra.mxu0 0
      %3098 = vmatprep.subr.bf16.mxu0 0
      %3099 = vmatpush1.bf16.msra.mxu0 0
      %3100 = vmatprep.subr.bf16.mxu0 0
      %3101 = vmatpush1.bf16.msra.mxu0 0
      %3102 = vmatprep.mubr.bf16.mxu0 0
      %3103 = vmatmul.mubr.bf16.gmra.mrb[0].mxu0 %v3056
      %v3104 = vpop.f32.mrb[0].mxu0
      %v3105 = vadd.f32 0.0, %v3104
      %v3106 = vpop.f32.mrb[0].mxu0
      %v3107 = vpop.f32.mrb[0].mxu0
      %v3108 = vadd.f32 0.0, %v3107
      %v3109 = vpop.f32.mrb[0].mxu0
      %3110 = vmatprep.mubr.bf16.mxu0 0
      %3111 = vmatmul.mubr.bf16.gmra.mrb[0].mxu0 %v3059
      %v3112 = vpop.f32.mrb[0].mxu0
      %v3113 = vadd.f32 0.0, %v3112
      %v3114 = vpop.f32.mrb[0].mxu0
      %v3115 = vpop.f32.mrb[0].mxu0
      %v3116 = vadd.f32 0.0, %v3115
      %v3117 = vpop.f32.mrb[0].mxu0
      %3118 = vmatprep.mubr.bf16.mxu0 0
      %3119 = vmatmul.mubr.bf16.gmra.mrb[0].mxu0 %v3062
      %v3120 = vpop.f32.mrb[0].mxu0
      %v3121 = vadd.f32 0.0, %v3120
      %v3122 = vpop.f32.mrb[0].mxu0
      %v3123 = vpop.f32.mrb[0].mxu0
      %v3124 = vadd.f32 0.0, %v3123
      %v3125 = vpop.f32.mrb[0].mxu0
      %3126 = vmatprep.mubr.bf16.mxu0 0
      %3127 = vmatmul.mubr.bf16.gmra.mrb[0].mxu0 %v3065
      %v3128 = vpop.f32.mrb[0].mxu0
      %v3129 = vadd.f32 0.0, %v3128
      %v3130 = vpop.f32.mrb[0].mxu0
      %v3131 = vpop.f32.mrb[0].mxu0
      %v3132 = vadd.f32 0.0, %v3131
      %v3133 = vpop.f32.mrb[0].mxu0
      %3134 = vmatprep.mubr.bf16.mxu0 0
      %3135 = vmatmul.mubr.bf16.gmra.mrb[0].mxu0 %v3068
      %v3136 = vpop.f32.mrb[0].mxu0
      %v3137 = vadd.f32 0.0, %v3136
      %v3138 = vpop.f32.mrb[0].mxu0
      %v3139 = vpop.f32.mrb[0].mxu0
      %v3140 = vadd.f32 0.0, %v3139
      %v3141 = vpop.f32.mrb[0].mxu0
      %3142 = vdwg.mxu0
      %v3143 = vadd.f32 %v3012, %v3105
      %v3144 = vadd.f32 %v3013, %v3108
      %v3145 = vadd.f32 %v3014, %v3113
      %v3146 = vadd.f32 %v3015, %v3116
      %v3147 = vadd.f32 %v3016, %v3121
      %v3148 = vadd.f32 %v3017, %v3124
      %v3149 = vadd.f32 %v3018, %v3129
      %v3150 = vadd.f32 %v3019, %v3132
      %v3151 = vadd.f32 %v3020, %v3137
      %v3152 = vadd.f32 %v3021, %v3140
      %v3153 = vld [vmem:[%s5 + $0x50] sm:$0xf]
      %v3154 = vld [vmem:[%s5 + $0x54] sm:$0xf]
      %v3155 = vld [vmem:[%s5 + $0x58] sm:$0xf]
      %v3156 = vld [vmem:[%s5 + $0x5c] sm:$0xf]
      %v3158 = vshrl.u32 %v3032, 16
      %v3160 = vrot.slane %v3158, 2
      %v3161 = vshll.u32 %v3032, 16
      %v3163 = vrot.slane %v3161, 3
      %v3164 = vor.u32 %v3160, %v3163
      %v3165 = vrot.slane %v2877, 2
      %v3166 = vrot.slane %v2880, 3
      %v3167 = vor.u32 %v3165, %v3166
      %v3168 = vsel %vm1565, %v3164, %v3167
      %v3169 = vrot.slane %v2886, 2
      %v3170 = vrot.slane %v2889, 3
      %v3171 = vor.u32 %v3169, %v3170
      %v3172 = vsel %vm1565, %v3167, %v3171
      %v3173 = vrot.slane %v2895, 2
      %v3174 = vrot.slane %v2898, 3
      %v3175 = vor.u32 %v3173, %v3174
      %v3176 = vsel %vm1565, %v3171, %v3175
      %v3178 = vshrl.u32 %v3033, 16
      %v3180 = vrot.slane %v3178, 2
      %v3181 = vshll.u32 %v3033, 16
      %v3183 = vrot.slane %v3181, 3
      %v3184 = vor.u32 %v3180, %v3183
      %v3185 = vsel %vm1565, %v3175, %v3184
      %v3190 = vunpack.c.l.b16 %v3153
      %v3191 = vunpack.c.l.b16 %v3154
      %v3192 = vunpack.c.l.b16 %v3155
      %v3193 = vunpack.c.l.b16 %v3156
      %v3194 = vpack.c.b16 %v3191, %v3190
      %v3195 = vpack.c.b16 %v3193, %v3192
      %v3199 = vsel %vm334, %v3168, 0
      %v3202 = vsel %vm334, %v3172, 0
      %v3205 = vsel %vm334, %v3176, 0
      %v3208 = vsel %vm334, %v3185, 0
      %v3211 = vsel %vm334, %v3184, 0
      %3213 = vmatprep.subr.bf16.mxu0 0
      %3214 = vmatpush1.bf16.msra.mxu0 %v3194
      %3215 = vmatprep.subr.bf16.mxu0 0
      %3216 = vmatpush1.bf16.msra.mxu0 %v3195
      %3217 = vmatprep.subr.bf16.mxu0 0
      %3218 = vmatpush1.bf16.msra.mxu0 0
      %3219 = vmatprep.subr.bf16.mxu0 0
      %3220 = vmatpush1.bf16.msra.mxu0 0
      %3221 = vmatprep.subr.bf16.mxu0 0
      %3222 = vmatpush1.bf16.msra.mxu0 0
      %3223 = vmatprep.subr.bf16.mxu0 0
      %3224 = vmatpush1.bf16.msra.mxu0 0
      %3225 = vmatprep.subr.bf16.mxu0 0
      %3226 = vmatpush1.bf16.msra.mxu0 0
      %3227 = vmatprep.subr.bf16.mxu0 0
      %3228 = vmatpush1.bf16.msra.mxu0 0
      %3229 = vmatprep.subr.bf16.mxu0 0
      %3230 = vmatpush1.bf16.msra.mxu0 0
      %3231 = vmatprep.subr.bf16.mxu0 0
      %3232 = vmatpush1.bf16.msra.mxu0 0
      %3233 = vmatprep.subr.bf16.mxu0 0
      %3234 = vmatpush1.bf16.msra.mxu0 0
      %3235 = vmatprep.subr.bf16.mxu0 0
      %3236 = vmatpush1.bf16.msra.mxu0 0
      %3237 = vmatprep.subr.bf16.mxu0 0
      %3238 = vmatpush1.bf16.msra.mxu0 0
      %3239 = vmatprep.subr.bf16.mxu0 0
      %3240 = vmatpush1.bf16.msra.mxu0 0
      %3241 = vmatprep.subr.bf16.mxu0 0
      %3242 = vmatpush1.bf16.msra.mxu0 0
      %3243 = vmatprep.subr.bf16.mxu0 0
      %3244 = vmatpush1.bf16.msra.mxu0 0
      %3245 = vmatprep.mubr.bf16.mxu0 0
      %3246 = vmatmul.mubr.bf16.gmra.mrb[0].mxu0 %v3199
      %v3247 = vpop.f32.mrb[0].mxu0
      %v3248 = vadd.f32 0.0, %v3247
      %v3249 = vpop.f32.mrb[0].mxu0
      %v3250 = vpop.f32.mrb[0].mxu0
      %v3251 = vadd.f32 0.0, %v3250
      %v3252 = vpop.f32.mrb[0].mxu0
      %3253 = vmatprep.mubr.bf16.mxu0 0
      %3254 = vmatmul.mubr.bf16.gmra.mrb[0].mxu0 %v3202
      %v3255 = vpop.f32.mrb[0].mxu0
      %v3256 = vadd.f32 0.0, %v3255
      %v3257 = vpop.f32.mrb[0].mxu0
      %v3258 = vpop.f32.mrb[0].mxu0
      %v3259 = vadd.f32 0.0, %v3258
      %v3260 = vpop.f32.mrb[0].mxu0
      %3261 = vmatprep.mubr.bf16.mxu0 0
      %3262 = vmatmul.mubr.bf16.gmra.mrb[0].mxu0 %v3205
      %v3263 = vpop.f32.mrb[0].mxu0
      %v3264 = vadd.f32 0.0, %v3263
      %v3265 = vpop.f32.mrb[0].mxu0
      %v3266 = vpop.f32.mrb[0].mxu0
      %v3267 = vadd.f32 0.0, %v3266
      %v3268 = vpop.f32.mrb[0].mxu0
      %3269 = vmatprep.mubr.bf16.mxu0 0
      %3270 = vmatmul.mubr.bf16.gmra.mrb[0].mxu0 %v3208
      %v3271 = vpop.f32.mrb[0].mxu0
      %v3272 = vadd.f32 0.0, %v3271
      %v3273 = vpop.f32.mrb[0].mxu0
      %v3274 = vpop.f32.mrb[0].mxu0
      %v3275 = vadd.f32 0.0, %v3274
      %v3276 = vpop.f32.mrb[0].mxu0
      %3277 = vmatprep.mubr.bf16.mxu0 0
      %3278 = vmatmul.mubr.bf16.gmra.mrb[0].mxu0 %v3211
      %v3279 = vpop.f32.mrb[0].mxu0
      %v3280 = vadd.f32 0.0, %v3279
      %v3281 = vpop.f32.mrb[0].mxu0
      %v3282 = vpop.f32.mrb[0].mxu0
      %v3283 = vadd.f32 0.0, %v3282
      %v3284 = vpop.f32.mrb[0].mxu0
      %3285 = vdwg.mxu0
      %v3286 = vadd.f32 %v3143, %v3248
      %v3287 = vadd.f32 %v3144, %v3251
      %v3288 = vadd.f32 %v3145, %v3256
      %v3289 = vadd.f32 %v3146, %v3259
      %v3290 = vadd.f32 %v3147, %v3264
      %v3291 = vadd.f32 %v3148, %v3267
      %v3292 = vadd.f32 %v3149, %v3272
      %v3293 = vadd.f32 %v3150, %v3275
      %v3294 = vadd.f32 %v3151, %v3280
      %v3295 = vadd.f32 %v3152, %v3283
      %v3296 = vld [vmem:[#allocation3 + $0x8] sm:$0x8]
      %v3297 = vld [vmem:[#allocation3 + $0xc] sm:$0xf]
      %v3298 = vld [vmem:[#allocation3 + $0x10] sm:$0xf]
      %v3299 = vld [vmem:[#allocation3 + $0x14] sm:$0xf]
      %v3300 = vld [vmem:[#allocation3 + $0x18] sm:$0xf]
      %v3301 = vld [vmem:[#allocation3 + $0x1c] sm:$0xf]
      %v3302 = vld [vmem:[#allocation3 + $0x20] sm:$0xf]
      %v3303 = vld [vmem:[#allocation3 + $0x24] sm:$0xf]
      %v3304 = vld [vmem:[#allocation3 + $0x28] sm:$0xf]
      %v3305 = vld [vmem:[#allocation3 + $0x2c] sm:$0xf]
      %v3306 = vld [vmem:[%s5 + $0x60] sm:$0xf]
      %v3307 = vld [vmem:[%s5 + $0x64] sm:$0xf]
      %v3308 = vld [vmem:[%s5 + $0x68] sm:$0xf]
      %v3309 = vld [vmem:[%s5 + $0x6c] sm:$0xf]
      %v3320 = vunpack.c.l.b16 %v3296
      %v3321 = vunpack.c.l.b16 %v3297
      %v3322 = vunpack.c.l.b16 %v3298
      %v3323 = vunpack.c.l.b16 %v3299
      %v3324 = vunpack.c.l.b16 %v3300
      %v3325 = vunpack.c.l.b16 %v3301
      %v3326 = vunpack.c.l.b16 %v3302
      %v3327 = vunpack.c.l.b16 %v3303
      %v3328 = vunpack.c.l.b16 %v3304
      %v3329 = vunpack.c.l.b16 %v3305
      %v3330 = vpack.c.b16 %v3321, %v3320
      %v3331 = vpack.c.b16 %v3323, %v3322
      %v3332 = vpack.c.b16 %v3325, %v3324
      %v3333 = vpack.c.b16 %v3327, %v3326
      %v3334 = vpack.c.b16 %v3329, %v3328
      %v3335 = vrot.slane %v3330, 3
      %v3336 = vrot.slane %v3331, 3
      %v3337 = vsel %vm1787, %v3335, %v3336
      %v3338 = vrot.slane %v3332, 3
      %v3339 = vsel %vm1787, %v3336, %v3338
      %v3340 = vrot.slane %v3333, 3
      %v3341 = vsel %vm1787, %v3338, %v3340
      %v3342 = vrot.slane %v3334, 3
      %v3343 = vsel %vm1787, %v3340, %v3342
      %v3348 = vunpack.c.l.b16 %v3306
      %v3349 = vunpack.c.l.b16 %v3307
      %v3350 = vunpack.c.l.b16 %v3308
      %v3351 = vunpack.c.l.b16 %v3309
      %v3352 = vpack.c.b16 %v3349, %v3348
      %v3353 = vpack.c.b16 %v3351, %v3350
      %v3357 = vsel %vm334, %v3337, 0
      %v3360 = vsel %vm334, %v3339, 0
      %v3363 = vsel %vm334, %v3341, 0
      %v3366 = vsel %vm334, %v3343, 0
      %v3369 = vsel %vm334, %v3342, 0
      %3371 = vmatprep.subr.bf16.mxu0 0
      %3372 = vmatpush1.bf16.msra.mxu0 %v3352
      %3373 = vmatprep.subr.bf16.mxu0 0
      %3374 = vmatpush1.bf16.msra.mxu0 %v3353
      %3375 = vmatprep.subr.bf16.mxu0 0
      %3376 = vmatpush1.bf16.msra.mxu0 0
      %3377 = vmatprep.subr.bf16.mxu0 0
      %3378 = vmatpush1.bf16.msra.mxu0 0
      %3379 = vmatprep.subr.bf16.mxu0 0
      %3380 = vmatpush1.bf16.msra.mxu0 0
      %3381 = vmatprep.subr.bf16.mxu0 0
      %3382 = vmatpush1.bf16.msra.mxu0 0
      %3383 = vmatprep.subr.bf16.mxu0 0
      %3384 = vmatpush1.bf16.msra.mxu0 0
      %3385 = vmatprep.subr.bf16.mxu0 0
      %3386 = vmatpush1.bf16.msra.mxu0 0
      %3387 = vmatprep.subr.bf16.mxu0 0
      %3388 = vmatpush1.bf16.msra.mxu0 0
      %3389 = vmatprep.subr.bf16.mxu0 0
      %3390 = vmatpush1.bf16.msra.mxu0 0
      %3391 = vmatprep.subr.bf16.mxu0 0
      %3392 = vmatpush1.bf16.msra.mxu0 0
      %3393 = vmatprep.subr.bf16.mxu0 0
      %3394 = vmatpush1.bf16.msra.mxu0 0
      %3395 = vmatprep.subr.bf16.mxu0 0
      %3396 = vmatpush1.bf16.msra.mxu0 0
      %3397 = vmatprep.subr.bf16.mxu0 0
      %3398 = vmatpush1.bf16.msra.mxu0 0
      %3399 = vmatprep.subr.bf16.mxu0 0
      %3400 = vmatpush1.bf16.msra.mxu0 0
      %3401 = vmatprep.subr.bf16.mxu0 0
      %3402 = vmatpush1.bf16.msra.mxu0 0
      %3403 = vmatprep.mubr.bf16.mxu0 0
      %3404 = vmatmul.mubr.bf16.gmra.mrb[0].mxu0 %v3357
      %v3405 = vpop.f32.mrb[0].mxu0
      %v3406 = vadd.f32 0.0, %v3405
      %v3407 = vpop.f32.mrb[0].mxu0
      %v3408 = vpop.f32.mrb[0].mxu0
      %v3409 = vadd.f32 0.0, %v3408
      %v3410 = vpop.f32.mrb[0].mxu0
      %3411 = vmatprep.mubr.bf16.mxu0 0
      %3412 = vmatmul.mubr.bf16.gmra.mrb[0].mxu0 %v3360
      %v3413 = vpop.f32.mrb[0].mxu0
      %v3414 = vadd.f32 0.0, %v3413
      %v3415 = vpop.f32.mrb[0].mxu0
      %v3416 = vpop.f32.mrb[0].mxu0
      %v3417 = vadd.f32 0.0, %v3416
      %v3418 = vpop.f32.mrb[0].mxu0
      %3419 = vmatprep.mubr.bf16.mxu0 0
      %3420 = vmatmul.mubr.bf16.gmra.mrb[0].mxu0 %v3363
      %v3421 = vpop.f32.mrb[0].mxu0
      %v3422 = vadd.f32 0.0, %v3421
      %v3423 = vpop.f32.mrb[0].mxu0
      %v3424 = vpop.f32.mrb[0].mxu0
      %v3425 = vadd.f32 0.0, %v3424
      %v3426 = vpop.f32.mrb[0].mxu0
      %3427 = vmatprep.mubr.bf16.mxu0 0
      %3428 = vmatmul.mubr.bf16.gmra.mrb[0].mxu0 %v3366
      %v3429 = vpop.f32.mrb[0].mxu0
      %v3430 = vadd.f32 0.0, %v3429
      %v3431 = vpop.f32.mrb[0].mxu0
      %v3432 = vpop.f32.mrb[0].mxu0
      %v3433 = vadd.f32 0.0, %v3432
      %v3434 = vpop.f32.mrb[0].mxu0
      %3435 = vmatprep.mubr.bf16.mxu0 0
      %3436 = vmatmul.mubr.bf16.gmra.mrb[0].mxu0 %v3369
      %v3437 = vpop.f32.mrb[0].mxu0
      %v3438 = vadd.f32 0.0, %v3437
      %v3439 = vpop.f32.mrb[0].mxu0
      %v3440 = vpop.f32.mrb[0].mxu0
      %v3441 = vadd.f32 0.0, %v3440
      %v3442 = vpop.f32.mrb[0].mxu0
      %3443 = vdwg.mxu0
      %v3444 = vadd.f32 %v3286, %v3406
      %v3445 = vadd.f32 %v3287, %v3409
      %v3446 = vadd.f32 %v3288, %v3414
      %v3447 = vadd.f32 %v3289, %v3417
      %v3448 = vadd.f32 %v3290, %v3422
      %v3449 = vadd.f32 %v3291, %v3425
      %v3450 = vadd.f32 %v3292, %v3430
      %v3451 = vadd.f32 %v3293, %v3433
      %v3452 = vadd.f32 %v3294, %v3438
      %v3453 = vadd.f32 %v3295, %v3441
      %v3454 = vld [vmem:[%s5 + $0x70] sm:$0xf]
      %v3455 = vld [vmem:[%s5 + $0x74] sm:$0xf]
      %v3456 = vld [vmem:[%s5 + $0x78] sm:$0xf]
      %v3457 = vld [vmem:[%s5 + $0x7c] sm:$0xf]
      %v3459 = vshrl.u32 %v3330, 16
      %v3461 = vrot.slane %v3459, 3
      %v3462 = vshll.u32 %v3330, 16
      %v3464 = vrot.slane %v3462, 4
      %v3465 = vor.u32 %v3461, %v3464
      %v3467 = vshrl.u32 %v3331, 16
      %v3469 = vrot.slane %v3467, 3
      %v3470 = vshll.u32 %v3331, 16
      %v3472 = vrot.slane %v3470, 4
      %v3473 = vor.u32 %v3469, %v3472
      %v3474 = vsel %vm1939, %v3465, %v3473
      %v3476 = vshrl.u32 %v3332, 16
      %v3478 = vrot.slane %v3476, 3
      %v3479 = vshll.u32 %v3332, 16
      %v3481 = vrot.slane %v3479, 4
      %v3482 = vor.u32 %v3478, %v3481
      %v3483 = vsel %vm1939, %v3473, %v3482
      %v3485 = vshrl.u32 %v3333, 16
      %v3487 = vrot.slane %v3485, 3
      %v3488 = vshll.u32 %v3333, 16
      %v3490 = vrot.slane %v3488, 4
      %v3491 = vor.u32 %v3487, %v3490
      %v3492 = vsel %vm1939, %v3482, %v3491
      %v3494 = vshrl.u32 %v3334, 16
      %v3496 = vrot.slane %v3494, 3
      %v3497 = vshll.u32 %v3334, 16
      %v3499 = vrot.slane %v3497, 4
      %v3500 = vor.u32 %v3496, %v3499
      %v3501 = vsel %vm1939, %v3491, %v3500
      %v3506 = vunpack.c.l.b16 %v3454
      %v3507 = vunpack.c.l.b16 %v3455
      %v3508 = vunpack.c.l.b16 %v3456
      %v3509 = vunpack.c.l.b16 %v3457
      %v3510 = vpack.c.b16 %v3507, %v3506
      %v3511 = vpack.c.b16 %v3509, %v3508
      %v3515 = vsel %vm334, %v3474, 0
      %v3518 = vsel %vm334, %v3483, 0
      %v3521 = vsel %vm334, %v3492, 0
      %v3524 = vsel %vm334, %v3501, 0
      %v3527 = vsel %vm334, %v3500, 0
      %3529 = vmatprep.subr.bf16.mxu0 0
      %3530 = vmatpush1.bf16.msra.mxu0 %v3510
      %3531 = vmatprep.subr.bf16.mxu0 0
      %3532 = vmatpush1.bf16.msra.mxu0 %v3511
      %3533 = vmatprep.subr.bf16.mxu0 0
      %3534 = vmatpush1.bf16.msra.mxu0 0
      %3535 = vmatprep.subr.bf16.mxu0 0
      %3536 = vmatpush1.bf16.msra.mxu0 0
      %3537 = vmatprep.subr.bf16.mxu0 0
      %3538 = vmatpush1.bf16.msra.mxu0 0
      %3539 = vmatprep.subr.bf16.mxu0 0
      %3540 = vmatpush1.bf16.msra.mxu0 0
      %3541 = vmatprep.subr.bf16.mxu0 0
      %3542 = vmatpush1.bf16.msra.mxu0 0
      %3543 = vmatprep.subr.bf16.mxu0 0
      %3544 = vmatpush1.bf16.msra.mxu0 0
      %3545 = vmatprep.subr.bf16.mxu0 0
      %3546 = vmatpush1.bf16.msra.mxu0 0
      %3547 = vmatprep.subr.bf16.mxu0 0
      %3548 = vmatpush1.bf16.msra.mxu0 0
      %3549 = vmatprep.subr.bf16.mxu0 0
      %3550 = vmatpush1.bf16.msra.mxu0 0
      %3551 = vmatprep.subr.bf16.mxu0 0
      %3552 = vmatpush1.bf16.msra.mxu0 0
      %3553 = vmatprep.subr.bf16.mxu0 0
      %3554 = vmatpush1.bf16.msra.mxu0 0
      %3555 = vmatprep.subr.bf16.mxu0 0
      %3556 = vmatpush1.bf16.msra.mxu0 0
      %3557 = vmatprep.subr.bf16.mxu0 0
      %3558 = vmatpush1.bf16.msra.mxu0 0
      %3559 = vmatprep.subr.bf16.mxu0 0
      %3560 = vmatpush1.bf16.msra.mxu0 0
      %3561 = vmatprep.mubr.bf16.mxu0 0
      %3562 = vmatmul.mubr.bf16.gmra.mrb[0].mxu0 %v3515
      %v3563 = vpop.f32.mrb[0].mxu0
      %v3564 = vadd.f32 0.0, %v3563
      %v3565 = vpop.f32.mrb[0].mxu0
      %v3566 = vpop.f32.mrb[0].mxu0
      %v3567 = vadd.f32 0.0, %v3566
      %v3568 = vpop.f32.mrb[0].mxu0
      %3569 = vmatprep.mubr.bf16.mxu0 0
      %3570 = vmatmul.mubr.bf16.gmra.mrb[0].mxu0 %v3518
      %v3571 = vpop.f32.mrb[0].mxu0
      %v3572 = vadd.f32 0.0, %v3571
      %v3573 = vpop.f32.mrb[0].mxu0
      %v3574 = vpop.f32.mrb[0].mxu0
      %v3575 = vadd.f32 0.0, %v3574
      %v3576 = vpop.f32.mrb[0].mxu0
      %3577 = vmatprep.mubr.bf16.mxu0 0
      %3578 = vmatmul.mubr.bf16.gmra.mrb[0].mxu0 %v3521
      %v3579 = vpop.f32.mrb[0].mxu0
      %v3580 = vadd.f32 0.0, %v3579
      %v3581 = vpop.f32.mrb[0].mxu0
      %v3582 = vpop.f32.mrb[0].mxu0
      %v3583 = vadd.f32 0.0, %v3582
      %v3584 = vpop.f32.mrb[0].mxu0
      %3585 = vmatprep.mubr.bf16.mxu0 0
      %3586 = vmatmul.mubr.bf16.gmra.mrb[0].mxu0 %v3524
      %v3587 = vpop.f32.mrb[0].mxu0
      %v3588 = vadd.f32 0.0, %v3587
      %v3589 = vpop.f32.mrb[0].mxu0
      %v3590 = vpop.f32.mrb[0].mxu0
      %v3591 = vadd.f32 0.0, %v3590
      %v3592 = vpop.f32.mrb[0].mxu0
      %3593 = vmatprep.mubr.bf16.mxu0 0
      %3594 = vmatmul.mubr.bf16.gmra.mrb[0].mxu0 %v3527
      %v3595 = vpop.f32.mrb[0].mxu0
      %v3596 = vadd.f32 0.0, %v3595
      %v3597 = vpop.f32.mrb[0].mxu0
      %v3598 = vpop.f32.mrb[0].mxu0
      %v3599 = vadd.f32 0.0, %v3598
      %v3600 = vpop.f32.mrb[0].mxu0
      %3601 = vdwg.mxu0
      %v3602 = vadd.f32 %v3444, %v3564
      %v3603 = vadd.f32 %v3445, %v3567
      %v3604 = vadd.f32 %v3446, %v3572
      %v3605 = vadd.f32 %v3447, %v3575
      %v3606 = vadd.f32 %v3448, %v3580
      %v3607 = vadd.f32 %v3449, %v3583
      %v3608 = vadd.f32 %v3450, %v3588
      %v3609 = vadd.f32 %v3451, %v3591
      %v3610 = vadd.f32 %v3452, %v3596
      %v3611 = vadd.f32 %v3453, %v3599
      %v3612 = vld [vmem:[#allocation3 + $0xc] sm:$0xf]
      %v3613 = vld [vmem:[#allocation3 + $0x10] sm:$0xf]
      %v3614 = vld [vmem:[#allocation3 + $0x14] sm:$0xf]
      %v3615 = vld [vmem:[#allocation3 + $0x18] sm:$0xf]
      %v3616 = vld [vmem:[#allocation3 + $0x1c] sm:$0xf]
      %v3617 = vld [vmem:[#allocation3 + $0x20] sm:$0xf]
      %v3618 = vld [vmem:[#allocation3 + $0x24] sm:$0xf]
      %v3619 = vld [vmem:[#allocation3 + $0x28] sm:$0xf]
      %v3620 = vld [vmem:[#allocation3 + $0x2c] sm:$0xf]
      %v3621 = vld [vmem:[#allocation3 + $0x30] sm:$0x1]
      %v3622 = vld [vmem:[%s5 + $0x80] sm:$0xf]
      %v3623 = vld [vmem:[%s5 + $0x84] sm:$0xf]
      %v3624 = vld [vmem:[%s5 + $0x88] sm:$0xf]
      %v3625 = vld [vmem:[%s5 + $0x8c] sm:$0xf]
      %v3636 = vunpack.c.l.b16 %v3612
      %v3637 = vunpack.c.l.b16 %v3613
      %v3638 = vunpack.c.l.b16 %v3614
      %v3639 = vunpack.c.l.b16 %v3615
      %v3640 = vunpack.c.l.b16 %v3616
      %v3641 = vunpack.c.l.b16 %v3617
      %v3642 = vunpack.c.l.b16 %v3618
      %v3643 = vunpack.c.l.b16 %v3619
      %v3644 = vunpack.c.l.b16 %v3620
      %v3645 = vunpack.c.l.b16 %v3621
      %v3646 = vpack.c.b16 %v3637, %v3636
      %v3647 = vpack.c.b16 %v3639, %v3638
      %v3648 = vpack.c.b16 %v3641, %v3640
      %v3649 = vpack.c.b16 %v3643, %v3642
      %v3650 = vpack.c.b16 %v3645, %v3644
      %v3655 = vunpack.c.l.b16 %v3622
      %v3656 = vunpack.c.l.b16 %v3623
      %v3657 = vunpack.c.l.b16 %v3624
      %v3658 = vunpack.c.l.b16 %v3625
      %v3659 = vpack.c.b16 %v3656, %v3655
      %v3660 = vpack.c.b16 %v3658, %v3657
      %v3664 = vsel %vm334, %v3646, 0
      %v3667 = vsel %vm334, %v3647, 0
      %v3670 = vsel %vm334, %v3648, 0
      %v3673 = vsel %vm334, %v3649, 0
      %v3676 = vsel %vm334, %v3650, 0
      %3678 = vmatprep.subr.bf16.mxu0 0
      %3679 = vmatpush1.bf16.msra.mxu0 %v3659
      %3680 = vmatprep.subr.bf16.mxu0 0
      %3681 = vmatpush1.bf16.msra.mxu0 %v3660
      %3682 = vmatprep.subr.bf16.mxu0 0
      %3683 = vmatpush1.bf16.msra.mxu0 0
      %3684 = vmatprep.subr.bf16.mxu0 0
      %3685 = vmatpush1.bf16.msra.mxu0 0
      %3686 = vmatprep.subr.bf16.mxu0 0
      %3687 = vmatpush1.bf16.msra.mxu0 0
      %3688 = vmatprep.subr.bf16.mxu0 0
      %3689 = vmatpush1.bf16.msra.mxu0 0
      %3690 = vmatprep.subr.bf16.mxu0 0
      %3691 = vmatpush1.bf16.msra.mxu0 0
      %3692 = vmatprep.subr.bf16.mxu0 0
      %3693 = vmatpush1.bf16.msra.mxu0 0
      %3694 = vmatprep.subr.bf16.mxu0 0
      %3695 = vmatpush1.bf16.msra.mxu0 0
      %3696 = vmatprep.subr.bf16.mxu0 0
      %3697 = vmatpush1.bf16.msra.mxu0 0
      %3698 = vmatprep.subr.bf16.mxu0 0
      %3699 = vmatpush1.bf16.msra.mxu0 0
      %3700 = vmatprep.subr.bf16.mxu0 0
      %3701 = vmatpush1.bf16.msra.mxu0 0
      %3702 = vmatprep.subr.bf16.mxu0 0
      %3703 = vmatpush1.bf16.msra.mxu0 0
      %3704 = vmatprep.subr.bf16.mxu0 0
      %3705 = vmatpush1.bf16.msra.mxu0 0
      %3706 = vmatprep.subr.bf16.mxu0 0
      %3707 = vmatpush1.bf16.msra.mxu0 0
      %3708 = vmatprep.subr.bf16.mxu0 0
      %3709 = vmatpush1.bf16.msra.mxu0 0
      %3710 = vmatprep.mubr.bf16.mxu0 0
      %3711 = vmatmul.mubr.bf16.gmra.mrb[0].mxu0 %v3664
      %v3712 = vpop.f32.mrb[0].mxu0
      %v3713 = vadd.f32 0.0, %v3712
      %v3714 = vpop.f32.mrb[0].mxu0
      %v3715 = vpop.f32.mrb[0].mxu0
      %v3716 = vadd.f32 0.0, %v3715
      %v3717 = vpop.f32.mrb[0].mxu0
      %3718 = vmatprep.mubr.bf16.mxu0 0
      %3719 = vmatmul.mubr.bf16.gmra.mrb[0].mxu0 %v3667
      %v3720 = vpop.f32.mrb[0].mxu0
      %v3721 = vadd.f32 0.0, %v3720
      %v3722 = vpop.f32.mrb[0].mxu0
      %v3723 = vpop.f32.mrb[0].mxu0
      %v3724 = vadd.f32 0.0, %v3723
      %v3725 = vpop.f32.mrb[0].mxu0
      %3726 = vmatprep.mubr.bf16.mxu0 0
      %3727 = vmatmul.mubr.bf16.gmra.mrb[0].mxu0 %v3670
      %v3728 = vpop.f32.mrb[0].mxu0
      %v3729 = vadd.f32 0.0, %v3728
      %v3730 = vpop.f32.mrb[0].mxu0
      %v3731 = vpop.f32.mrb[0].mxu0
      %v3732 = vadd.f32 0.0, %v3731
      %v3733 = vpop.f32.mrb[0].mxu0
      %3734 = vmatprep.mubr.bf16.mxu0 0
      %3735 = vmatmul.mubr.bf16.gmra.mrb[0].mxu0 %v3673
      %v3736 = vpop.f32.mrb[0].mxu0
      %v3737 = vadd.f32 0.0, %v3736
      %v3738 = vpop.f32.mrb[0].mxu0
      %v3739 = vpop.f32.mrb[0].mxu0
      %v3740 = vadd.f32 0.0, %v3739
      %v3741 = vpop.f32.mrb[0].mxu0
      %3742 = vmatprep.mubr.bf16.mxu0 0
      %3743 = vmatmul.mubr.bf16.gmra.mrb[0].mxu0 %v3676
      %v3744 = vpop.f32.mrb[0].mxu0
      %v3745 = vadd.f32 0.0, %v3744
      %v3746 = vpop.f32.mrb[0].mxu0
      %v3747 = vpop.f32.mrb[0].mxu0
      %v3748 = vadd.f32 0.0, %v3747
      %v3749 = vpop.f32.mrb[0].mxu0
      %3750 = vdwg.mxu0
      %v3751 = vadd.f32 %v3602, %v3713
      %v3752 = vadd.f32 %v3603, %v3716
      %v3753 = vadd.f32 %v3604, %v3721
      %v3754 = vadd.f32 %v3605, %v3724
      %v3755 = vadd.f32 %v3606, %v3729
      %v3756 = vadd.f32 %v3607, %v3732
      %v3757 = vadd.f32 %v3608, %v3737
      %v3758 = vadd.f32 %v3609, %v3740
      %v3759 = vadd.f32 %v3610, %v3745
      %v3760 = vadd.f32 %v3611, %v3748
      %v3761 = vld [vmem:[%s6] sm:$0x1]
      %v3763 = vlaneseq
      %v3764 = vshrl.u32 %v3763, 7
      %v3765 = vsub.s32 0, %v3764
      %v3766 = vrot.slane %v3761, %v3765
      %v3768 = vadd.f32 %v3751, %v3766
      %v3769 = vadd.f32 %v3752, %v3766
      %v3770 = vadd.f32 %v3753, %v3766
      %v3771 = vadd.f32 %v3754, %v3766
      %v3772 = vadd.f32 %v3755, %v3766
      %v3773 = vadd.f32 %v3756, %v3766
      %v3774 = vadd.f32 %v3757, %v3766
      %v3775 = vadd.f32 %v3758, %v3766
      %v3776 = vadd.f32 %v3759, %v3766
      %v3777 = vadd.f32 %v3760, %v3766
      %v3778 = vmax.f32 %v3768, 0.0
      %v3779 = vmax.f32 %v3769, 0.0
      %v3780 = vmax.f32 %v3770, 0.0
      %v3781 = vmax.f32 %v3771, 0.0
      %v3782 = vmax.f32 %v3772, 0.0
      %v3783 = vmax.f32 %v3773, 0.0
      %v3784 = vmax.f32 %v3774, 0.0
      %v3785 = vmax.f32 %v3775, 0.0
      %v3786 = vmax.f32 %v3776, 0.0
      %v3787 = vmax.f32 %v3777, 0.0
      %v3788 = vpack.c.bf16 %v3779, %v3778
      %v3789 = vpack.c.bf16 %v3781, %v3780
      %v3790 = vpack.c.bf16 %v3783, %v3782
      %v3791 = vpack.c.bf16 %v3785, %v3784
      %v3792 = vpack.c.bf16 %v3787, %v3786
      %v3798 = vunpack.c.l.b16 %v3788
      %v3799 = vunpack.c.h.b16 %v3788
      %v3800 = vunpack.c.l.b16 %v3789
      %v3801 = vunpack.c.h.b16 %v3789
      %v3802 = vunpack.c.l.b16 %v3790
      %v3803 = vunpack.c.h.b16 %v3790
      %v3804 = vunpack.c.l.b16 %v3791
      %v3805 = vunpack.c.h.b16 %v3791
      %v3806 = vunpack.c.l.b16 %v3792
      %v3807 = vunpack.c.h.b16 %v3792
      %v3808 = vpack.c.b16 %v3798, %v3798
      %v3809 = vpack.c.b16 %v3799, %v3799
      %v3810 = vpack.c.b16 %v3800, %v3800
      %v3811 = vpack.c.b16 %v3801, %v3801
      %v3812 = vpack.c.b16 %v3802, %v3802
      %v3813 = vpack.c.b16 %v3803, %v3803
      %v3814 = vpack.c.b16 %v3804, %v3804
      %v3815 = vpack.c.b16 %v3805, %v3805
      %v3816 = vpack.c.b16 %v3806, %v3806
      %v3817 = vpack.c.b16 %v3807, %v3807
      %3828 = vst.msk [vmem:[#allocation4] sm:$0xf] %vm628, %v3808
      %3829 = vst.msk [vmem:[#allocation4 + $0x4] sm:$0xf] %vm628, %v3809
      %3830 = vst.msk [vmem:[#allocation4 + $0x8] sm:$0xf] %vm628, %v3810
      %3831 = vst.msk [vmem:[#allocation4 + $0xc] sm:$0xf] %vm628, %v3811
      %3832 = vst.msk [vmem:[#allocation4 + $0x10] sm:$0xf] %vm628, %v3812
      %3833 = vst.msk [vmem:[#allocation4 + $0x14] sm:$0xf] %vm628, %v3813
      %3834 = vst.msk [vmem:[#allocation4 + $0x18] sm:$0xf] %vm628, %v3814
      %3835 = vst.msk [vmem:[#allocation4 + $0x1c] sm:$0xf] %vm628, %v3815
      %3836 = vst.msk [vmem:[#allocation4 + $0x20] sm:$0xf] %vm628, %v3816
      %v3837 = vld [vmem:[#allocation4 + $0x24] sm:$0x1]
      %v3838 = vsel %vm646, %v3817, %v3837
      %3839 = vst [vmem:[#allocation4 + $0x24] sm:$0x1] %v3838
      %v3840 = vld [vmem:[#allocation4] sm:$0xf]
      %v3841 = vld [vmem:[#allocation4 + $0x4] sm:$0xf]
      %v3842 = vld [vmem:[#allocation4 + $0x8] sm:$0xf]
      %v3843 = vld [vmem:[#allocation4 + $0xc] sm:$0xf]
      %v3844 = vld [vmem:[#allocation4 + $0x10] sm:$0xf]
      %v3845 = vld [vmem:[#allocation4 + $0x14] sm:$0xf]
      %v3846 = vld [vmem:[#allocation4 + $0x18] sm:$0x1]
      %v3847 = vld [vmem:[%s7] sm:$0xf]
      %v3848 = vld [vmem:[%s7 + $0x4] sm:$0xf]
      %v3849 = vld [vmem:[%s7 + $0x8] sm:$0xf]
      %v3850 = vld [vmem:[%s7 + $0xc] sm:$0xf]
      %v3851 = vld [vmem:[%s7 + $0x10] sm:$0xf]
      %v3852 = vld [vmem:[%s7 + $0x14] sm:$0xf]
      %v3853 = vld [vmem:[%s7 + $0x18] sm:$0xf]
      %v3854 = vld [vmem:[%s7 + $0x1c] sm:$0xf]
      %v3862 = vunpack.c.l.b16 %v3840
      %v3863 = vunpack.c.l.b16 %v3841
      %v3864 = vunpack.c.l.b16 %v3842
      %v3865 = vunpack.c.l.b16 %v3843
      %v3866 = vunpack.c.l.b16 %v3844
      %v3867 = vunpack.c.l.b16 %v3845
      %v3868 = vunpack.c.l.b16 %v3846
      %v3869 = vpack.c.b16 %v3863, %v3862
      %v3870 = vpack.c.b16 %v3865, %v3864
      %v3871 = vpack.c.b16 %v3867, %v3866
      %v3872 = vpack.c.b16 %v3868, %v3868
      %v3874 = vshrl.u32 %v3869, 16
      %v3876 = vshll.u32 %v3869, 16
      %v3878 = vrot.slane %v3876, 1
      %v3879 = vor.u32 %v3874, %v3878
      %v3881 = vshll.u32 %v3870, 16
      %v3883 = vrot.slane %v3881, 1
      %v3884 = vsel %vm704, %v3879, %v3883
      %v3885 = vshrl.u32 %v3870, 16
      %v3887 = vor.u32 %v3885, %v3883
      %v3889 = vshll.u32 %v3871, 16
      %v3891 = vrot.slane %v3889, 1
      %v3892 = vsel %vm704, %v3887, %v3891
      %v3893 = vshrl.u32 %v3871, 16
      %v3895 = vor.u32 %v3893, %v3891
      %v3897 = vshll.u32 %v3872, 16
      %v3899 = vrot.slane %v3897, 1
      %v3900 = vsel %vm704, %v3895, %v3899
      %v3901 = vshrl.u32 %v3872, 16
      %v3907 = vunpack.c.l.b16 %v3851
      %v3908 = vunpack.c.l.b16 %v3852
      %v3909 = vunpack.c.l.b16 %v3853
      %v3910 = vunpack.c.l.b16 %v3854
      %v3911 = vpack.c.b16 %v3908, %v3907
      %v3912 = vpack.c.b16 %v3910, %v3909
      %v3916 = vsel %vm334, %v3884, 0
      %v3919 = vsel %vm334, %v3892, 0
      %v3922 = vsel %vm334, %v3900, 0
      %v3925 = vsel %vm334, %v3901, 0
      %3927 = vmatprep.subr.bf16.mxu0 0
      %3928 = vmatpush1.bf16.msra.mxu0 %v3911
      %3929 = vmatprep.subr.bf16.mxu0 0
      %3930 = vmatpush1.bf16.msra.mxu0 %v3912
      %3931 = vmatprep.subr.bf16.mxu0 0
      %3932 = vmatpush1.bf16.msra.mxu0 0
      %3933 = vmatprep.subr.bf16.mxu0 0
      %3934 = vmatpush1.bf16.msra.mxu0 0
      %3935 = vmatprep.subr.bf16.mxu0 0
      %3936 = vmatpush1.bf16.msra.mxu0 0
      %3937 = vmatprep.subr.bf16.mxu0 0
      %3938 = vmatpush1.bf16.msra.mxu0 0
      %3939 = vmatprep.subr.bf16.mxu0 0
      %3940 = vmatpush1.bf16.msra.mxu0 0
      %3941 = vmatprep.subr.bf16.mxu0 0
      %3942 = vmatpush1.bf16.msra.mxu0 0
      %3943 = vmatprep.subr.bf16.mxu0 0
      %3944 = vmatpush1.bf16.msra.mxu0 0
      %3945 = vmatprep.subr.bf16.mxu0 0
      %3946 = vmatpush1.bf16.msra.mxu0 0
      %3947 = vmatprep.subr.bf16.mxu0 0
      %3948 = vmatpush1.bf16.msra.mxu0 0
      %3949 = vmatprep.subr.bf16.mxu0 0
      %3950 = vmatpush1.bf16.msra.mxu0 0
      %3951 = vmatprep.subr.bf16.mxu0 0
      %3952 = vmatpush1.bf16.msra.mxu0 0
      %3953 = vmatprep.subr.bf16.mxu0 0
      %3954 = vmatpush1.bf16.msra.mxu0 0
      %3955 = vmatprep.subr.bf16.mxu0 0
      %3956 = vmatpush1.bf16.msra.mxu0 0
      %3957 = vmatprep.subr.bf16.mxu0 0
      %3958 = vmatpush1.bf16.msra.mxu0 0
      %3959 = vmatprep.mubr.bf16.mxu0 0
      %3960 = vmatmul.mubr.bf16.gmra.mrb[0].mxu0 %v3916
      %v3961 = vpop.f32.mrb[0].mxu0
      %v3962 = vadd.f32 0.0, %v3961
      %v3963 = vpop.f32.mrb[0].mxu0
      %v3964 = vpop.f32.mrb[0].mxu0
      %v3965 = vadd.f32 0.0, %v3964
      %v3966 = vpop.f32.mrb[0].mxu0
      %3967 = vmatprep.mubr.bf16.mxu0 0
      %3968 = vmatmul.mubr.bf16.gmra.mrb[0].mxu0 %v3919
      %v3969 = vpop.f32.mrb[0].mxu0
      %v3970 = vadd.f32 0.0, %v3969
      %v3971 = vpop.f32.mrb[0].mxu0
      %v3972 = vpop.f32.mrb[0].mxu0
      %v3973 = vadd.f32 0.0, %v3972
      %v3974 = vpop.f32.mrb[0].mxu0
      %3975 = vmatprep.mubr.bf16.mxu0 0
      %3976 = vmatmul.mubr.bf16.gmra.mrb[0].mxu0 %v3922
      %v3977 = vpop.f32.mrb[0].mxu0
      %v3978 = vadd.f32 0.0, %v3977
      %v3979 = vpop.f32.mrb[0].mxu0
      %v3980 = vpop.f32.mrb[0].mxu0
      %v3981 = vadd.f32 0.0, %v3980
      %v3982 = vpop.f32.mrb[0].mxu0
      %3983 = vmatprep.mubr.bf16.mxu0 0
      %3984 = vmatmul.mubr.bf16.gmra.mrb[0].mxu0 %v3925
      %v3985 = vpop.f32.mrb[0].mxu0
      %v3986 = vadd.f32 0.0, %v3985
      %v3987 = vpop.f32.mrb[0].mxu0
      %v3988 = vpop.f32.mrb[0].mxu0
      %v3989 = vpop.f32.mrb[0].mxu0
      %3990 = vdwg.mxu0
      %v3995 = vunpack.c.l.b16 %v3847
      %v3996 = vunpack.c.l.b16 %v3848
      %v3997 = vunpack.c.l.b16 %v3849
      %v3998 = vunpack.c.l.b16 %v3850
      %v3999 = vpack.c.b16 %v3996, %v3995
      %v4000 = vpack.c.b16 %v3998, %v3997
      %v4003 = vsel %vm334, %v3869, 0
      %v4005 = vsel %vm334, %v3870, 0
      %v4007 = vsel %vm334, %v3871, 0
      %v4009 = vsel %vm334, %v3872, 0
      %4011 = vmatprep.subr.bf16.mxu0 0
      %4012 = vmatpush1.bf16.msra.mxu0 %v3999
      %4013 = vmatprep.subr.bf16.mxu0 0
      %4014 = vmatpush1.bf16.msra.mxu0 %v4000
      %4015 = vmatprep.subr.bf16.mxu0 0
      %4016 = vmatpush1.bf16.msra.mxu0 0
      %4017 = vmatprep.subr.bf16.mxu0 0
      %4018 = vmatpush1.bf16.msra.mxu0 0
      %4019 = vmatprep.subr.bf16.mxu0 0
      %4020 = vmatpush1.bf16.msra.mxu0 0
      %4021 = vmatprep.subr.bf16.mxu0 0
      %4022 = vmatpush1.bf16.msra.mxu0 0
      %4023 = vmatprep.subr.bf16.mxu0 0
      %4024 = vmatpush1.bf16.msra.mxu0 0
      %4025 = vmatprep.subr.bf16.mxu0 0
      %4026 = vmatpush1.bf16.msra.mxu0 0
      %4027 = vmatprep.subr.bf16.mxu0 0
      %4028 = vmatpush1.bf16.msra.mxu0 0
      %4029 = vmatprep.subr.bf16.mxu0 0
      %4030 = vmatpush1.bf16.msra.mxu0 0
      %4031 = vmatprep.subr.bf16.mxu0 0
      %4032 = vmatpush1.bf16.msra.mxu0 0
      %4033 = vmatprep.subr.bf16.mxu0 0
      %4034 = vmatpush1.bf16.msra.mxu0 0
      %4035 = vmatprep.subr.bf16.mxu0 0
      %4036 = vmatpush1.bf16.msra.mxu0 0
      %4037 = vmatprep.subr.bf16.mxu0 0
      %4038 = vmatpush1.bf16.msra.mxu0 0
      %4039 = vmatprep.subr.bf16.mxu0 0
      %4040 = vmatpush1.bf16.msra.mxu0 0
      %4041 = vmatprep.subr.bf16.mxu0 0
      %4042 = vmatpush1.bf16.msra.mxu0 0
      %4043 = vmatprep.mubr.bf16.mxu0 0
      %4044 = vmatmul.mubr.bf16.gmra.mrb[0].mxu0 %v4003
      %v4045 = vpop.f32.mrb[0].mxu0
      %v4046 = vadd.f32 %v3962, %v4045
      %v4047 = vpop.f32.mrb[0].mxu0
      %v4048 = vpop.f32.mrb[0].mxu0
      %v4049 = vadd.f32 %v3965, %v4048
      %v4050 = vpop.f32.mrb[0].mxu0
      %4051 = vmatprep.mubr.bf16.mxu0 0
      %4052 = vmatmul.mubr.bf16.gmra.mrb[0].mxu0 %v4005
      %v4053 = vpop.f32.mrb[0].mxu0
      %v4054 = vadd.f32 %v3970, %v4053
      %v4055 = vpop.f32.mrb[0].mxu0
      %v4056 = vpop.f32.mrb[0].mxu0
      %v4057 = vadd.f32 %v3973, %v4056
      %v4058 = vpop.f32.mrb[0].mxu0
      %4059 = vmatprep.mubr.bf16.mxu0 0
      %4060 = vmatmul.mubr.bf16.gmra.mrb[0].mxu0 %v4007
      %v4061 = vpop.f32.mrb[0].mxu0
      %v4062 = vadd.f32 %v3978, %v4061
      %v4063 = vpop.f32.mrb[0].mxu0
      %v4064 = vpop.f32.mrb[0].mxu0
      %v4065 = vadd.f32 %v3981, %v4064
      %v4066 = vpop.f32.mrb[0].mxu0
      %4067 = vmatprep.mubr.bf16.mxu0 0
      %4068 = vmatmul.mubr.bf16.gmra.mrb[0].mxu0 %v4009
      %v4069 = vpop.f32.mrb[0].mxu0
      %v4070 = vadd.f32 %v3986, %v4069
      %v4071 = vpop.f32.mrb[0].mxu0
      %v4072 = vpop.f32.mrb[0].mxu0
      %v4073 = vpop.f32.mrb[0].mxu0
      %4074 = vdwg.mxu0
      %v4075 = vld [vmem:[#allocation4] sm:$0xe]
      %v4076 = vld [vmem:[#allocation4 + $0x18] sm:$0x3]
      %v4077 = vld [vmem:[%s7 + $0x20] sm:$0xf]
      %v4078 = vld [vmem:[%s7 + $0x24] sm:$0xf]
      %v4079 = vld [vmem:[%s7 + $0x28] sm:$0xf]
      %v4080 = vld [vmem:[%s7 + $0x2c] sm:$0xf]
      %v4083 = vunpack.c.l.b16 %v4075
      %v4084 = vunpack.c.l.b16 %v4076
      %v4085 = vpack.c.b16 %v3863, %v4083
      %v4086 = vpack.c.b16 %v4084, %v4084
      %v4087 = vrot.slane %v4085, 1
      %v4088 = vrot.slane %v3870, 1
      %v4089 = vsel %vm1006, %v4087, %v4088
      %v4090 = vrot.slane %v3871, 1
      %v4091 = vsel %vm1006, %v4088, %v4090
      %v4092 = vrot.slane %v4086, 1
      %v4093 = vsel %vm1006, %v4090, %v4092
      %v4098 = vunpack.c.l.b16 %v4077
      %v4099 = vunpack.c.l.b16 %v4078
      %v4100 = vunpack.c.l.b16 %v4079
      %v4101 = vunpack.c.l.b16 %v4080
      %v4102 = vpack.c.b16 %v4099, %v4098
      %v4103 = vpack.c.b16 %v4101, %v4100
      %v4107 = vsel %vm334, %v4089, 0
      %v4110 = vsel %vm334, %v4091, 0
      %v4113 = vsel %vm334, %v4093, 0
      %v4116 = vsel %vm334, %v4092, 0
      %4118 = vmatprep.subr.bf16.mxu0 0
      %4119 = vmatpush1.bf16.msra.mxu0 %v4102
      %4120 = vmatprep.subr.bf16.mxu0 0
      %4121 = vmatpush1.bf16.msra.mxu0 %v4103
      %4122 = vmatprep.subr.bf16.mxu0 0
      %4123 = vmatpush1.bf16.msra.mxu0 0
      %4124 = vmatprep.subr.bf16.mxu0 0
      %4125 = vmatpush1.bf16.msra.mxu0 0
      %4126 = vmatprep.subr.bf16.mxu0 0
      %4127 = vmatpush1.bf16.msra.mxu0 0
      %4128 = vmatprep.subr.bf16.mxu0 0
      %4129 = vmatpush1.bf16.msra.mxu0 0
      %4130 = vmatprep.subr.bf16.mxu0 0
      %4131 = vmatpush1.bf16.msra.mxu0 0
      %4132 = vmatprep.subr.bf16.mxu0 0
      %4133 = vmatpush1.bf16.msra.mxu0 0
      %4134 = vmatprep.subr.bf16.mxu0 0
      %4135 = vmatpush1.bf16.msra.mxu0 0
      %4136 = vmatprep.subr.bf16.mxu0 0
      %4137 = vmatpush1.bf16.msra.mxu0 0
      %4138 = vmatprep.subr.bf16.mxu0 0
      %4139 = vmatpush1.bf16.msra.mxu0 0
      %4140 = vmatprep.subr.bf16.mxu0 0
      %4141 = vmatpush1.bf16.msra.mxu0 0
      %4142 = vmatprep.subr.bf16.mxu0 0
      %4143 = vmatpush1.bf16.msra.mxu0 0
      %4144 = vmatprep.subr.bf16.mxu0 0
      %4145 = vmatpush1.bf16.msra.mxu0 0
      %4146 = vmatprep.subr.bf16.mxu0 0
      %4147 = vmatpush1.bf16.msra.mxu0 0
      %4148 = vmatprep.subr.bf16.mxu0 0
      %4149 = vmatpush1.bf16.msra.mxu0 0
      %4150 = vmatprep.mubr.bf16.mxu0 0
      %4151 = vmatmul.mubr.bf16.gmra.mrb[0].mxu0 %v4107
      %v4152 = vpop.f32.mrb[0].mxu0
      %v4153 = vadd.f32 0.0, %v4152
      %v4154 = vpop.f32.mrb[0].mxu0
      %v4155 = vpop.f32.mrb[0].mxu0
      %v4156 = vadd.f32 0.0, %v4155
      %v4157 = vpop.f32.mrb[0].mxu0
      %4158 = vmatprep.mubr.bf16.mxu0 0
      %4159 = vmatmul.mubr.bf16.gmra.mrb[0].mxu0 %v4110
      %v4160 = vpop.f32.mrb[0].mxu0
      %v4161 = vadd.f32 0.0, %v4160
      %v4162 = vpop.f32.mrb[0].mxu0
      %v4163 = vpop.f32.mrb[0].mxu0
      %v4164 = vadd.f32 0.0, %v4163
      %v4165 = vpop.f32.mrb[0].mxu0
      %4166 = vmatprep.mubr.bf16.mxu0 0
      %4167 = vmatmul.mubr.bf16.gmra.mrb[0].mxu0 %v4113
      %v4168 = vpop.f32.mrb[0].mxu0
      %v4169 = vadd.f32 0.0, %v4168
      %v4170 = vpop.f32.mrb[0].mxu0
      %v4171 = vpop.f32.mrb[0].mxu0
      %v4172 = vadd.f32 0.0, %v4171
      %v4173 = vpop.f32.mrb[0].mxu0
      %4174 = vmatprep.mubr.bf16.mxu0 0
      %4175 = vmatmul.mubr.bf16.gmra.mrb[0].mxu0 %v4116
      %v4176 = vpop.f32.mrb[0].mxu0
      %v4177 = vadd.f32 0.0, %v4176
      %v4178 = vpop.f32.mrb[0].mxu0
      %v4179 = vpop.f32.mrb[0].mxu0
      %v4180 = vpop.f32.mrb[0].mxu0
      %4181 = vdwg.mxu0
      %v4182 = vadd.f32 %v4046, %v4153
      %v4183 = vadd.f32 %v4049, %v4156
      %v4184 = vadd.f32 %v4054, %v4161
      %v4185 = vadd.f32 %v4057, %v4164
      %v4186 = vadd.f32 %v4062, %v4169
      %v4187 = vadd.f32 %v4065, %v4172
      %v4188 = vadd.f32 %v4070, %v4177
      %v4189 = vld [vmem:[#allocation4 + $0x4] sm:$0xe]
      %v4190 = vld [vmem:[#allocation4 + $0x8] sm:$0xf]
      %v4191 = vld [vmem:[#allocation4 + $0xc] sm:$0xf]
      %v4192 = vld [vmem:[#allocation4 + $0x10] sm:$0xf]
      %v4193 = vld [vmem:[#allocation4 + $0x14] sm:$0xf]
      %v4194 = vld [vmem:[#allocation4 + $0x18] sm:$0xf]
      %v4195 = vld [vmem:[#allocation4 + $0x1c] sm:$0x3]
      %v4196 = vld [vmem:[%s7 + $0x30] sm:$0xf]
      %v4197 = vld [vmem:[%s7 + $0x34] sm:$0xf]
      %v4198 = vld [vmem:[%s7 + $0x38] sm:$0xf]
      %v4199 = vld [vmem:[%s7 + $0x3c] sm:$0xf]
      %v4207 = vunpack.c.l.b16 %v4189
      %v4208 = vunpack.c.l.b16 %v4190
      %v4209 = vunpack.c.l.b16 %v4191
      %v4210 = vunpack.c.l.b16 %v4192
      %v4211 = vunpack.c.l.b16 %v4193
      %v4212 = vunpack.c.l.b16 %v4194
      %v4213 = vunpack.c.l.b16 %v4195
      %v4214 = vpack.c.b16 %v4208, %v4207
      %v4215 = vpack.c.b16 %v4210, %v4209
      %v4216 = vpack.c.b16 %v4212, %v4211
      %v4217 = vpack.c.b16 %v4213, %v4213
      %v4219 = vshrl.u32 %v4214, 16
      %v4221 = vrot.slane %v4219, 1
      %v4222 = vshll.u32 %v4214, 16
      %v4224 = vrot.slane %v4222, 2
      %v4225 = vor.u32 %v4221, %v4224
      %v4227 = vshrl.u32 %v4215, 16
      %v4229 = vrot.slane %v4227, 1
      %v4230 = vshll.u32 %v4215, 16
      %v4232 = vrot.slane %v4230, 2
      %v4233 = vor.u32 %v4229, %v4232
      %v4234 = vsel %vm1204, %v4225, %v4233
      %v4236 = vshrl.u32 %v4216, 16
      %v4238 = vrot.slane %v4236, 1
      %v4239 = vshll.u32 %v4216, 16
      %v4241 = vrot.slane %v4239, 2
      %v4242 = vor.u32 %v4238, %v4241
      %v4243 = vsel %vm1204, %v4233, %v4242
      %v4245 = vshrl.u32 %v4217, 16
      %v4247 = vrot.slane %v4245, 1
      %v4248 = vshll.u32 %v4217, 16
      %v4250 = vrot.slane %v4248, 2
      %v4251 = vor.u32 %v4247, %v4250
      %v4252 = vsel %vm1204, %v4242, %v4251
      %v4257 = vunpack.c.l.b16 %v4196
      %v4258 = vunpack.c.l.b16 %v4197
      %v4259 = vunpack.c.l.b16 %v4198
      %v4260 = vunpack.c.l.b16 %v4199
      %v4261 = vpack.c.b16 %v4258, %v4257
      %v4262 = vpack.c.b16 %v4260, %v4259
      %v4266 = vsel %vm334, %v4234, 0
      %v4269 = vsel %vm334, %v4243, 0
      %v4272 = vsel %vm334, %v4252, 0
      %v4275 = vsel %vm334, %v4247, 0
      %4277 = vmatprep.subr.bf16.mxu0 0
      %4278 = vmatpush1.bf16.msra.mxu0 %v4261
      %4279 = vmatprep.subr.bf16.mxu0 0
      %4280 = vmatpush1.bf16.msra.mxu0 %v4262
      %4281 = vmatprep.subr.bf16.mxu0 0
      %4282 = vmatpush1.bf16.msra.mxu0 0
      %4283 = vmatprep.subr.bf16.mxu0 0
      %4284 = vmatpush1.bf16.msra.mxu0 0
      %4285 = vmatprep.subr.bf16.mxu0 0
      %4286 = vmatpush1.bf16.msra.mxu0 0
      %4287 = vmatprep.subr.bf16.mxu0 0
      %4288 = vmatpush1.bf16.msra.mxu0 0
      %4289 = vmatprep.subr.bf16.mxu0 0
      %4290 = vmatpush1.bf16.msra.mxu0 0
      %4291 = vmatprep.subr.bf16.mxu0 0
      %4292 = vmatpush1.bf16.msra.mxu0 0
      %4293 = vmatprep.subr.bf16.mxu0 0
      %4294 = vmatpush1.bf16.msra.mxu0 0
      %4295 = vmatprep.subr.bf16.mxu0 0
      %4296 = vmatpush1.bf16.msra.mxu0 0
      %4297 = vmatprep.subr.bf16.mxu0 0
      %4298 = vmatpush1.bf16.msra.mxu0 0
      %4299 = vmatprep.subr.bf16.mxu0 0
      %4300 = vmatpush1.bf16.msra.mxu0 0
      %4301 = vmatprep.subr.bf16.mxu0 0
      %4302 = vmatpush1.bf16.msra.mxu0 0
      %4303 = vmatprep.subr.bf16.mxu0 0
      %4304 = vmatpush1.bf16.msra.mxu0 0
      %4305 = vmatprep.subr.bf16.mxu0 0
      %4306 = vmatpush1.bf16.msra.mxu0 0
      %4307 = vmatprep.subr.bf16.mxu0 0
      %4308 = vmatpush1.bf16.msra.mxu0 0
      %4309 = vmatprep.mubr.bf16.mxu0 0
      %4310 = vmatmul.mubr.bf16.gmra.mrb[0].mxu0 %v4266
      %v4311 = vpop.f32.mrb[0].mxu0
      %v4312 = vadd.f32 0.0, %v4311
      %v4313 = vpop.f32.mrb[0].mxu0
      %v4314 = vpop.f32.mrb[0].mxu0
      %v4315 = vadd.f32 0.0, %v4314
      %v4316 = vpop.f32.mrb[0].mxu0
      %4317 = vmatprep.mubr.bf16.mxu0 0
      %4318 = vmatmul.mubr.bf16.gmra.mrb[0].mxu0 %v4269
      %v4319 = vpop.f32.mrb[0].mxu0
      %v4320 = vadd.f32 0.0, %v4319
      %v4321 = vpop.f32.mrb[0].mxu0
      %v4322 = vpop.f32.mrb[0].mxu0
      %v4323 = vadd.f32 0.0, %v4322
      %v4324 = vpop.f32.mrb[0].mxu0
      %4325 = vmatprep.mubr.bf16.mxu0 0
      %4326 = vmatmul.mubr.bf16.gmra.mrb[0].mxu0 %v4272
      %v4327 = vpop.f32.mrb[0].mxu0
      %v4328 = vadd.f32 0.0, %v4327
      %v4329 = vpop.f32.mrb[0].mxu0
      %v4330 = vpop.f32.mrb[0].mxu0
      %v4331 = vadd.f32 0.0, %v4330
      %v4332 = vpop.f32.mrb[0].mxu0
      %4333 = vmatprep.mubr.bf16.mxu0 0
      %4334 = vmatmul.mubr.bf16.gmra.mrb[0].mxu0 %v4275
      %v4335 = vpop.f32.mrb[0].mxu0
      %v4336 = vadd.f32 0.0, %v4335
      %v4337 = vpop.f32.mrb[0].mxu0
      %v4338 = vpop.f32.mrb[0].mxu0
      %v4339 = vpop.f32.mrb[0].mxu0
      %4340 = vdwg.mxu0
      %v4341 = vadd.f32 %v4182, %v4312
      %v4342 = vadd.f32 %v4183, %v4315
      %v4343 = vadd.f32 %v4184, %v4320
      %v4344 = vadd.f32 %v4185, %v4323
      %v4345 = vadd.f32 %v4186, %v4328
      %v4346 = vadd.f32 %v4187, %v4331
      %v4347 = vadd.f32 %v4188, %v4336
      %v4348 = vld [vmem:[#allocation4 + $0x4] sm:$0xc]
      %v4349 = vld [vmem:[#allocation4 + $0x1c] sm:$0x7]
      %v4350 = vld [vmem:[%s7 + $0x40] sm:$0xf]
      %v4351 = vld [vmem:[%s7 + $0x44] sm:$0xf]
      %v4352 = vld [vmem:[%s7 + $0x48] sm:$0xf]
      %v4353 = vld [vmem:[%s7 + $0x4c] sm:$0xf]
      %v4356 = vunpack.c.l.b16 %v4348
      %v4357 = vunpack.c.l.b16 %v4349
      %v4358 = vpack.c.b16 %v4208, %v4356
      %v4359 = vpack.c.b16 %v4357, %v4357
      %v4360 = vrot.slane %v4358, 2
      %v4361 = vrot.slane %v4215, 2
      %v4362 = vsel %vm1413, %v4360, %v4361
      %v4363 = vrot.slane %v4216, 2
      %v4364 = vsel %vm1413, %v4361, %v4363
      %v4365 = vrot.slane %v4359, 2
      %v4366 = vsel %vm1413, %v4363, %v4365
      %v4371 = vunpack.c.l.b16 %v4350
      %v4372 = vunpack.c.l.b16 %v4351
      %v4373 = vunpack.c.l.b16 %v4352
      %v4374 = vunpack.c.l.b16 %v4353
      %v4375 = vpack.c.b16 %v4372, %v4371
      %v4376 = vpack.c.b16 %v4374, %v4373
      %v4380 = vsel %vm334, %v4362, 0
      %v4383 = vsel %vm334, %v4364, 0
      %v4386 = vsel %vm334, %v4366, 0
      %v4389 = vsel %vm334, %v4365, 0
      %4391 = vmatprep.subr.bf16.mxu0 0
      %4392 = vmatpush1.bf16.msra.mxu0 %v4375
      %4393 = vmatprep.subr.bf16.mxu0 0
      %4394 = vmatpush1.bf16.msra.mxu0 %v4376
      %4395 = vmatprep.subr.bf16.mxu0 0
      %4396 = vmatpush1.bf16.msra.mxu0 0
      %4397 = vmatprep.subr.bf16.mxu0 0
      %4398 = vmatpush1.bf16.msra.mxu0 0
      %4399 = vmatprep.subr.bf16.mxu0 0
      %4400 = vmatpush1.bf16.msra.mxu0 0
      %4401 = vmatprep.subr.bf16.mxu0 0
      %4402 = vmatpush1.bf16.msra.mxu0 0
      %4403 = vmatprep.subr.bf16.mxu0 0
      %4404 = vmatpush1.bf16.msra.mxu0 0
      %4405 = vmatprep.subr.bf16.mxu0 0
      %4406 = vmatpush1.bf16.msra.mxu0 0
      %4407 = vmatprep.subr.bf16.mxu0 0
      %4408 = vmatpush1.bf16.msra.mxu0 0
      %4409 = vmatprep.subr.bf16.mxu0 0
      %4410 = vmatpush1.bf16.msra.mxu0 0
      %4411 = vmatprep.subr.bf16.mxu0 0
      %4412 = vmatpush1.bf16.msra.mxu0 0
      %4413 = vmatprep.subr.bf16.mxu0 0
      %4414 = vmatpush1.bf16.msra.mxu0 0
      %4415 = vmatprep.subr.bf16.mxu0 0
      %4416 = vmatpush1.bf16.msra.mxu0 0
      %4417 = vmatprep.subr.bf16.mxu0 0
      %4418 = vmatpush1.bf16.msra.mxu0 0
      %4419 = vmatprep.subr.bf16.mxu0 0
      %4420 = vmatpush1.bf16.msra.mxu0 0
      %4421 = vmatprep.subr.bf16.mxu0 0
      %4422 = vmatpush1.bf16.msra.mxu0 0
      %4423 = vmatprep.mubr.bf16.mxu0 0
      %4424 = vmatmul.mubr.bf16.gmra.mrb[0].mxu0 %v4380
      %v4425 = vpop.f32.mrb[0].mxu0
      %v4426 = vadd.f32 0.0, %v4425
      %v4427 = vpop.f32.mrb[0].mxu0
      %v4428 = vpop.f32.mrb[0].mxu0
      %v4429 = vadd.f32 0.0, %v4428
      %v4430 = vpop.f32.mrb[0].mxu0
      %4431 = vmatprep.mubr.bf16.mxu0 0
      %4432 = vmatmul.mubr.bf16.gmra.mrb[0].mxu0 %v4383
      %v4433 = vpop.f32.mrb[0].mxu0
      %v4434 = vadd.f32 0.0, %v4433
      %v4435 = vpop.f32.mrb[0].mxu0
      %v4436 = vpop.f32.mrb[0].mxu0
      %v4437 = vadd.f32 0.0, %v4436
      %v4438 = vpop.f32.mrb[0].mxu0
      %4439 = vmatprep.mubr.bf16.mxu0 0
      %4440 = vmatmul.mubr.bf16.gmra.mrb[0].mxu0 %v4386
      %v4441 = vpop.f32.mrb[0].mxu0
      %v4442 = vadd.f32 0.0, %v4441
      %v4443 = vpop.f32.mrb[0].mxu0
      %v4444 = vpop.f32.mrb[0].mxu0
      %v4445 = vadd.f32 0.0, %v4444
      %v4446 = vpop.f32.mrb[0].mxu0
      %4447 = vmatprep.mubr.bf16.mxu0 0
      %4448 = vmatmul.mubr.bf16.gmra.mrb[0].mxu0 %v4389
      %v4449 = vpop.f32.mrb[0].mxu0
      %v4450 = vadd.f32 0.0, %v4449
      %v4451 = vpop.f32.mrb[0].mxu0
      %v4452 = vpop.f32.mrb[0].mxu0
      %v4453 = vpop.f32.mrb[0].mxu0
      %4454 = vdwg.mxu0
      %v4455 = vadd.f32 %v4341, %v4426
      %v4456 = vadd.f32 %v4342, %v4429
      %v4457 = vadd.f32 %v4343, %v4434
      %v4458 = vadd.f32 %v4344, %v4437
      %v4459 = vadd.f32 %v4345, %v4442
      %v4460 = vadd.f32 %v4346, %v4445
      %v4461 = vadd.f32 %v4347, %v4450
      %v4462 = vld [vmem:[%s7 + $0x50] sm:$0xf]
      %v4463 = vld [vmem:[%s7 + $0x54] sm:$0xf]
      %v4464 = vld [vmem:[%s7 + $0x58] sm:$0xf]
      %v4465 = vld [vmem:[%s7 + $0x5c] sm:$0xf]
      %v4467 = vshrl.u32 %v4358, 16
      %v4469 = vrot.slane %v4467, 2
      %v4470 = vshll.u32 %v4358, 16
      %v4472 = vrot.slane %v4470, 3
      %v4473 = vor.u32 %v4469, %v4472
      %v4474 = vrot.slane %v4227, 2
      %v4475 = vrot.slane %v4230, 3
      %v4476 = vor.u32 %v4474, %v4475
      %v4477 = vsel %vm1565, %v4473, %v4476
      %v4478 = vrot.slane %v4236, 2
      %v4479 = vrot.slane %v4239, 3
      %v4480 = vor.u32 %v4478, %v4479
      %v4481 = vsel %vm1565, %v4476, %v4480
      %v4483 = vshrl.u32 %v4359, 16
      %v4485 = vrot.slane %v4483, 2
      %v4486 = vshll.u32 %v4359, 16
      %v4488 = vrot.slane %v4486, 3
      %v4489 = vor.u32 %v4485, %v4488
      %v4490 = vsel %vm1565, %v4480, %v4489
      %v4495 = vunpack.c.l.b16 %v4462
      %v4496 = vunpack.c.l.b16 %v4463
      %v4497 = vunpack.c.l.b16 %v4464
      %v4498 = vunpack.c.l.b16 %v4465
      %v4499 = vpack.c.b16 %v4496, %v4495
      %v4500 = vpack.c.b16 %v4498, %v4497
      %v4504 = vsel %vm334, %v4477, 0
      %v4507 = vsel %vm334, %v4481, 0
      %v4510 = vsel %vm334, %v4490, 0
      %v4513 = vsel %vm334, %v4485, 0
      %4515 = vmatprep.subr.bf16.mxu0 0
      %4516 = vmatpush1.bf16.msra.mxu0 %v4499
      %4517 = vmatprep.subr.bf16.mxu0 0
      %4518 = vmatpush1.bf16.msra.mxu0 %v4500
      %4519 = vmatprep.subr.bf16.mxu0 0
      %4520 = vmatpush1.bf16.msra.mxu0 0
      %4521 = vmatprep.subr.bf16.mxu0 0
      %4522 = vmatpush1.bf16.msra.mxu0 0
      %4523 = vmatprep.subr.bf16.mxu0 0
      %4524 = vmatpush1.bf16.msra.mxu0 0
      %4525 = vmatprep.subr.bf16.mxu0 0
      %4526 = vmatpush1.bf16.msra.mxu0 0
      %4527 = vmatprep.subr.bf16.mxu0 0
      %4528 = vmatpush1.bf16.msra.mxu0 0
      %4529 = vmatprep.subr.bf16.mxu0 0
      %4530 = vmatpush1.bf16.msra.mxu0 0
      %4531 = vmatprep.subr.bf16.mxu0 0
      %4532 = vmatpush1.bf16.msra.mxu0 0
      %4533 = vmatprep.subr.bf16.mxu0 0
      %4534 = vmatpush1.bf16.msra.mxu0 0
      %4535 = vmatprep.subr.bf16.mxu0 0
      %4536 = vmatpush1.bf16.msra.mxu0 0
      %4537 = vmatprep.subr.bf16.mxu0 0
      %4538 = vmatpush1.bf16.msra.mxu0 0
      %4539 = vmatprep.subr.bf16.mxu0 0
      %4540 = vmatpush1.bf16.msra.mxu0 0
      %4541 = vmatprep.subr.bf16.mxu0 0
      %4542 = vmatpush1.bf16.msra.mxu0 0
      %4543 = vmatprep.subr.bf16.mxu0 0
      %4544 = vmatpush1.bf16.msra.mxu0 0
      %4545 = vmatprep.subr.bf16.mxu0 0
      %4546 = vmatpush1.bf16.msra.mxu0 0
      %4547 = vmatprep.mubr.bf16.mxu0 0
      %4548 = vmatmul.mubr.bf16.gmra.mrb[0].mxu0 %v4504
      %v4549 = vpop.f32.mrb[0].mxu0
      %v4550 = vadd.f32 0.0, %v4549
      %v4551 = vpop.f32.mrb[0].mxu0
      %v4552 = vpop.f32.mrb[0].mxu0
      %v4553 = vadd.f32 0.0, %v4552
      %v4554 = vpop.f32.mrb[0].mxu0
      %4555 = vmatprep.mubr.bf16.mxu0 0
      %4556 = vmatmul.mubr.bf16.gmra.mrb[0].mxu0 %v4507
      %v4557 = vpop.f32.mrb[0].mxu0
      %v4558 = vadd.f32 0.0, %v4557
      %v4559 = vpop.f32.mrb[0].mxu0
      %v4560 = vpop.f32.mrb[0].mxu0
      %v4561 = vadd.f32 0.0, %v4560
      %v4562 = vpop.f32.mrb[0].mxu0
      %4563 = vmatprep.mubr.bf16.mxu0 0
      %4564 = vmatmul.mubr.bf16.gmra.mrb[0].mxu0 %v4510
      %v4565 = vpop.f32.mrb[0].mxu0
      %v4566 = vadd.f32 0.0, %v4565
      %v4567 = vpop.f32.mrb[0].mxu0
      %v4568 = vpop.f32.mrb[0].mxu0
      %v4569 = vadd.f32 0.0, %v4568
      %v4570 = vpop.f32.mrb[0].mxu0
      %4571 = vmatprep.mubr.bf16.mxu0 0
      %4572 = vmatmul.mubr.bf16.gmra.mrb[0].mxu0 %v4513
      %v4573 = vpop.f32.mrb[0].mxu0
      %v4574 = vadd.f32 0.0, %v4573
      %v4575 = vpop.f32.mrb[0].mxu0
      %v4576 = vpop.f32.mrb[0].mxu0
      %v4577 = vpop.f32.mrb[0].mxu0
      %4578 = vdwg.mxu0
      %v4579 = vadd.f32 %v4455, %v4550
      %v4580 = vadd.f32 %v4456, %v4553
      %v4581 = vadd.f32 %v4457, %v4558
      %v4582 = vadd.f32 %v4458, %v4561
      %v4583 = vadd.f32 %v4459, %v4566
      %v4584 = vadd.f32 %v4460, %v4569
      %v4585 = vadd.f32 %v4461, %v4574
      %v4586 = vld [vmem:[#allocation4 + $0x8] sm:$0x8]
      %v4587 = vld [vmem:[#allocation4 + $0xc] sm:$0xf]
      %v4588 = vld [vmem:[#allocation4 + $0x10] sm:$0xf]
      %v4589 = vld [vmem:[#allocation4 + $0x14] sm:$0xf]
      %v4590 = vld [vmem:[#allocation4 + $0x18] sm:$0xf]
      %v4591 = vld [vmem:[#allocation4 + $0x1c] sm:$0xf]
      %v4592 = vld [vmem:[#allocation4 + $0x20] sm:$0xf]
      %v4593 = vld [vmem:[%s7 + $0x60] sm:$0xf]
      %v4594 = vld [vmem:[%s7 + $0x64] sm:$0xf]
      %v4595 = vld [vmem:[%s7 + $0x68] sm:$0xf]
      %v4596 = vld [vmem:[%s7 + $0x6c] sm:$0xf]
      %v4604 = vunpack.c.l.b16 %v4586
      %v4605 = vunpack.c.l.b16 %v4587
      %v4606 = vunpack.c.l.b16 %v4588
      %v4607 = vunpack.c.l.b16 %v4589
      %v4608 = vunpack.c.l.b16 %v4590
      %v4609 = vunpack.c.l.b16 %v4591
      %v4610 = vunpack.c.l.b16 %v4592
      %v4611 = vpack.c.b16 %v4605, %v4604
      %v4612 = vpack.c.b16 %v4607, %v4606
      %v4613 = vpack.c.b16 %v4609, %v4608
      %v4614 = vpack.c.b16 %v4610, %v4610
      %v4615 = vrot.slane %v4611, 3
      %v4616 = vrot.slane %v4612, 3
      %v4617 = vsel %vm1787, %v4615, %v4616
      %v4618 = vrot.slane %v4613, 3
      %v4619 = vsel %vm1787, %v4616, %v4618
      %v4620 = vrot.slane %v4614, 3
      %v4621 = vsel %vm1787, %v4618, %v4620
      %v4626 = vunpack.c.l.b16 %v4593
      %v4627 = vunpack.c.l.b16 %v4594
      %v4628 = vunpack.c.l.b16 %v4595
      %v4629 = vunpack.c.l.b16 %v4596
      %v4630 = vpack.c.b16 %v4627, %v4626
      %v4631 = vpack.c.b16 %v4629, %v4628
      %v4635 = vsel %vm334, %v4617, 0
      %v4638 = vsel %vm334, %v4619, 0
      %v4641 = vsel %vm334, %v4621, 0
      %v4644 = vsel %vm334, %v4620, 0
      %4646 = vmatprep.subr.bf16.mxu0 0
      %4647 = vmatpush1.bf16.msra.mxu0 %v4630
      %4648 = vmatprep.subr.bf16.mxu0 0
      %4649 = vmatpush1.bf16.msra.mxu0 %v4631
      %4650 = vmatprep.subr.bf16.mxu0 0
      %4651 = vmatpush1.bf16.msra.mxu0 0
      %4652 = vmatprep.subr.bf16.mxu0 0
      %4653 = vmatpush1.bf16.msra.mxu0 0
      %4654 = vmatprep.subr.bf16.mxu0 0
      %4655 = vmatpush1.bf16.msra.mxu0 0
      %4656 = vmatprep.subr.bf16.mxu0 0
      %4657 = vmatpush1.bf16.msra.mxu0 0
      %4658 = vmatprep.subr.bf16.mxu0 0
      %4659 = vmatpush1.bf16.msra.mxu0 0
      %4660 = vmatprep.subr.bf16.mxu0 0
      %4661 = vmatpush1.bf16.msra.mxu0 0
      %4662 = vmatprep.subr.bf16.mxu0 0
      %4663 = vmatpush1.bf16.msra.mxu0 0
      %4664 = vmatprep.subr.bf16.mxu0 0
      %4665 = vmatpush1.bf16.msra.mxu0 0
      %4666 = vmatprep.subr.bf16.mxu0 0
      %4667 = vmatpush1.bf16.msra.mxu0 0
      %4668 = vmatprep.subr.bf16.mxu0 0
      %4669 = vmatpush1.bf16.msra.mxu0 0
      %4670 = vmatprep.subr.bf16.mxu0 0
      %4671 = vmatpush1.bf16.msra.mxu0 0
      %4672 = vmatprep.subr.bf16.mxu0 0
      %4673 = vmatpush1.bf16.msra.mxu0 0
      %4674 = vmatprep.subr.bf16.mxu0 0
      %4675 = vmatpush1.bf16.msra.mxu0 0
      %4676 = vmatprep.subr.bf16.mxu0 0
      %4677 = vmatpush1.bf16.msra.mxu0 0
      %4678 = vmatprep.mubr.bf16.mxu0 0
      %4679 = vmatmul.mubr.bf16.gmra.mrb[0].mxu0 %v4635
      %v4680 = vpop.f32.mrb[0].mxu0
      %v4681 = vadd.f32 0.0, %v4680
      %v4682 = vpop.f32.mrb[0].mxu0
      %v4683 = vpop.f32.mrb[0].mxu0
      %v4684 = vadd.f32 0.0, %v4683
      %v4685 = vpop.f32.mrb[0].mxu0
      %4686 = vmatprep.mubr.bf16.mxu0 0
      %4687 = vmatmul.mubr.bf16.gmra.mrb[0].mxu0 %v4638
      %v4688 = vpop.f32.mrb[0].mxu0
      %v4689 = vadd.f32 0.0, %v4688
      %v4690 = vpop.f32.mrb[0].mxu0
      %v4691 = vpop.f32.mrb[0].mxu0
      %v4692 = vadd.f32 0.0, %v4691
      %v4693 = vpop.f32.mrb[0].mxu0
      %4694 = vmatprep.mubr.bf16.mxu0 0
      %4695 = vmatmul.mubr.bf16.gmra.mrb[0].mxu0 %v4641
      %v4696 = vpop.f32.mrb[0].mxu0
      %v4697 = vadd.f32 0.0, %v4696
      %v4698 = vpop.f32.mrb[0].mxu0
      %v4699 = vpop.f32.mrb[0].mxu0
      %v4700 = vadd.f32 0.0, %v4699
      %v4701 = vpop.f32.mrb[0].mxu0
      %4702 = vmatprep.mubr.bf16.mxu0 0
      %4703 = vmatmul.mubr.bf16.gmra.mrb[0].mxu0 %v4644
      %v4704 = vpop.f32.mrb[0].mxu0
      %v4705 = vadd.f32 0.0, %v4704
      %v4706 = vpop.f32.mrb[0].mxu0
      %v4707 = vpop.f32.mrb[0].mxu0
      %v4708 = vpop.f32.mrb[0].mxu0
      %4709 = vdwg.mxu0
      %v4710 = vadd.f32 %v4579, %v4681
      %v4711 = vadd.f32 %v4580, %v4684
      %v4712 = vadd.f32 %v4581, %v4689
      %v4713 = vadd.f32 %v4582, %v4692
      %v4714 = vadd.f32 %v4583, %v4697
      %v4715 = vadd.f32 %v4584, %v4700
      %v4716 = vadd.f32 %v4585, %v4705
      %v4717 = vld [vmem:[%s7 + $0x70] sm:$0xf]
      %v4718 = vld [vmem:[%s7 + $0x74] sm:$0xf]
      %v4719 = vld [vmem:[%s7 + $0x78] sm:$0xf]
      %v4720 = vld [vmem:[%s7 + $0x7c] sm:$0xf]
      %v4722 = vshrl.u32 %v4611, 16
      %v4724 = vrot.slane %v4722, 3
      %v4725 = vshll.u32 %v4611, 16
      %v4727 = vrot.slane %v4725, 4
      %v4728 = vor.u32 %v4724, %v4727
      %v4730 = vshrl.u32 %v4612, 16
      %v4732 = vrot.slane %v4730, 3
      %v4733 = vshll.u32 %v4612, 16
      %v4735 = vrot.slane %v4733, 4
      %v4736 = vor.u32 %v4732, %v4735
      %v4737 = vsel %vm1939, %v4728, %v4736
      %v4739 = vshrl.u32 %v4613, 16
      %v4741 = vrot.slane %v4739, 3
      %v4742 = vshll.u32 %v4613, 16
      %v4744 = vrot.slane %v4742, 4
      %v4745 = vor.u32 %v4741, %v4744
      %v4746 = vsel %vm1939, %v4736, %v4745
      %v4748 = vshrl.u32 %v4614, 16
      %v4750 = vrot.slane %v4748, 3
      %v4751 = vshll.u32 %v4614, 16
      %v4753 = vrot.slane %v4751, 4
      %v4754 = vor.u32 %v4750, %v4753
      %v4755 = vsel %vm1939, %v4745, %v4754
      %v4760 = vunpack.c.l.b16 %v4717
      %v4761 = vunpack.c.l.b16 %v4718
      %v4762 = vunpack.c.l.b16 %v4719
      %v4763 = vunpack.c.l.b16 %v4720
      %v4764 = vpack.c.b16 %v4761, %v4760
      %v4765 = vpack.c.b16 %v4763, %v4762
      %v4769 = vsel %vm334, %v4737, 0
      %v4772 = vsel %vm334, %v4746, 0
      %v4775 = vsel %vm334, %v4755, 0
      %v4778 = vsel %vm334, %v4750, 0
      %4780 = vmatprep.subr.bf16.mxu0 0
      %4781 = vmatpush1.bf16.msra.mxu0 %v4764
      %4782 = vmatprep.subr.bf16.mxu0 0
      %4783 = vmatpush1.bf16.msra.mxu0 %v4765
      %4784 = vmatprep.subr.bf16.mxu0 0
      %4785 = vmatpush1.bf16.msra.mxu0 0
      %4786 = vmatprep.subr.bf16.mxu0 0
      %4787 = vmatpush1.bf16.msra.mxu0 0
      %4788 = vmatprep.subr.bf16.mxu0 0
      %4789 = vmatpush1.bf16.msra.mxu0 0
      %4790 = vmatprep.subr.bf16.mxu0 0
      %4791 = vmatpush1.bf16.msra.mxu0 0
      %4792 = vmatprep.subr.bf16.mxu0 0
      %4793 = vmatpush1.bf16.msra.mxu0 0
      %4794 = vmatprep.subr.bf16.mxu0 0
      %4795 = vmatpush1.bf16.msra.mxu0 0
      %4796 = vmatprep.subr.bf16.mxu0 0
      %4797 = vmatpush1.bf16.msra.mxu0 0
      %4798 = vmatprep.subr.bf16.mxu0 0
      %4799 = vmatpush1.bf16.msra.mxu0 0
      %4800 = vmatprep.subr.bf16.mxu0 0
      %4801 = vmatpush1.bf16.msra.mxu0 0
      %4802 = vmatprep.subr.bf16.mxu0 0
      %4803 = vmatpush1.bf16.msra.mxu0 0
      %4804 = vmatprep.subr.bf16.mxu0 0
      %4805 = vmatpush1.bf16.msra.mxu0 0
      %4806 = vmatprep.subr.bf16.mxu0 0
      %4807 = vmatpush1.bf16.msra.mxu0 0
      %4808 = vmatprep.subr.bf16.mxu0 0
      %4809 = vmatpush1.bf16.msra.mxu0 0
      %4810 = vmatprep.subr.bf16.mxu0 0
      %4811 = vmatpush1.bf16.msra.mxu0 0
      %4812 = vmatprep.mubr.bf16.mxu0 0
      %4813 = vmatmul.mubr.bf16.gmra.mrb[0].mxu0 %v4769
      %v4814 = vpop.f32.mrb[0].mxu0
      %v4815 = vadd.f32 0.0, %v4814
      %v4816 = vpop.f32.mrb[0].mxu0
      %v4817 = vpop.f32.mrb[0].mxu0
      %v4818 = vadd.f32 0.0, %v4817
      %v4819 = vpop.f32.mrb[0].mxu0
      %4820 = vmatprep.mubr.bf16.mxu0 0
      %4821 = vmatmul.mubr.bf16.gmra.mrb[0].mxu0 %v4772
      %v4822 = vpop.f32.mrb[0].mxu0
      %v4823 = vadd.f32 0.0, %v4822
      %v4824 = vpop.f32.mrb[0].mxu0
      %v4825 = vpop.f32.mrb[0].mxu0
      %v4826 = vadd.f32 0.0, %v4825
      %v4827 = vpop.f32.mrb[0].mxu0
      %4828 = vmatprep.mubr.bf16.mxu0 0
      %4829 = vmatmul.mubr.bf16.gmra.mrb[0].mxu0 %v4775
      %v4830 = vpop.f32.mrb[0].mxu0
      %v4831 = vadd.f32 0.0, %v4830
      %v4832 = vpop.f32.mrb[0].mxu0
      %v4833 = vpop.f32.mrb[0].mxu0
      %v4834 = vadd.f32 0.0, %v4833
      %v4835 = vpop.f32.mrb[0].mxu0
      %4836 = vmatprep.mubr.bf16.mxu0 0
      %4837 = vmatmul.mubr.bf16.gmra.mrb[0].mxu0 %v4778
      %v4838 = vpop.f32.mrb[0].mxu0
      %v4839 = vadd.f32 0.0, %v4838
      %v4840 = vpop.f32.mrb[0].mxu0
      %v4841 = vpop.f32.mrb[0].mxu0
      %v4842 = vpop.f32.mrb[0].mxu0
      %4843 = vdwg.mxu0
      %v4844 = vadd.f32 %v4710, %v4815
      %v4845 = vadd.f32 %v4711, %v4818
      %v4846 = vadd.f32 %v4712, %v4823
      %v4847 = vadd.f32 %v4713, %v4826
      %v4848 = vadd.f32 %v4714, %v4831
      %v4849 = vadd.f32 %v4715, %v4834
      %v4850 = vadd.f32 %v4716, %v4839
      %v4851 = vld [vmem:[#allocation4 + $0xc] sm:$0xf]
      %v4852 = vld [vmem:[#allocation4 + $0x10] sm:$0xf]
      %v4853 = vld [vmem:[#allocation4 + $0x14] sm:$0xf]
      %v4854 = vld [vmem:[#allocation4 + $0x18] sm:$0xf]
      %v4855 = vld [vmem:[#allocation4 + $0x1c] sm:$0xf]
      %v4856 = vld [vmem:[#allocation4 + $0x20] sm:$0xf]
      %v4857 = vld [vmem:[#allocation4 + $0x24] sm:$0x1]
      %v4858 = vld [vmem:[%s7 + $0x80] sm:$0xf]
      %v4859 = vld [vmem:[%s7 + $0x84] sm:$0xf]
      %v4860 = vld [vmem:[%s7 + $0x88] sm:$0xf]
      %v4861 = vld [vmem:[%s7 + $0x8c] sm:$0xf]
      %v4869 = vunpack.c.l.b16 %v4851
      %v4870 = vunpack.c.l.b16 %v4852
      %v4871 = vunpack.c.l.b16 %v4853
      %v4872 = vunpack.c.l.b16 %v4854
      %v4873 = vunpack.c.l.b16 %v4855
      %v4874 = vunpack.c.l.b16 %v4856
      %v4875 = vunpack.c.l.b16 %v4857
      %v4876 = vpack.c.b16 %v4870, %v4869
      %v4877 = vpack.c.b16 %v4872, %v4871
      %v4878 = vpack.c.b16 %v4874, %v4873
      %v4879 = vpack.c.b16 %v4875, %v4875
      %v4884 = vunpack.c.l.b16 %v4858
      %v4885 = vunpack.c.l.b16 %v4859
      %v4886 = vunpack.c.l.b16 %v4860
      %v4887 = vunpack.c.l.b16 %v4861
      %v4888 = vpack.c.b16 %v4885, %v4884
      %v4889 = vpack.c.b16 %v4887, %v4886
      %v4893 = vsel %vm334, %v4876, 0
      %v4896 = vsel %vm334, %v4877, 0
      %v4899 = vsel %vm334, %v4878, 0
      %v4902 = vsel %vm334, %v4879, 0
      %4904 = vmatprep.subr.bf16.mxu0 0
      %4905 = vmatpush1.bf16.msra.mxu0 %v4888
      %4906 = vmatprep.subr.bf16.mxu0 0
      %4907 = vmatpush1.bf16.msra.mxu0 %v4889
      %4908 = vmatprep.subr.bf16.mxu0 0
      %4909 = vmatpush1.bf16.msra.mxu0 0
      %4910 = vmatprep.subr.bf16.mxu0 0
      %4911 = vmatpush1.bf16.msra.mxu0 0
      %4912 = vmatprep.subr.bf16.mxu0 0
      %4913 = vmatpush1.bf16.msra.mxu0 0
      %4914 = vmatprep.subr.bf16.mxu0 0
      %4915 = vmatpush1.bf16.msra.mxu0 0
      %4916 = vmatprep.subr.bf16.mxu0 0
      %4917 = vmatpush1.bf16.msra.mxu0 0
      %4918 = vmatprep.subr.bf16.mxu0 0
      %4919 = vmatpush1.bf16.msra.mxu0 0
      %4920 = vmatprep.subr.bf16.mxu0 0
      %4921 = vmatpush1.bf16.msra.mxu0 0
      %4922 = vmatprep.subr.bf16.mxu0 0
      %4923 = vmatpush1.bf16.msra.mxu0 0
      %4924 = vmatprep.subr.bf16.mxu0 0
      %4925 = vmatpush1.bf16.msra.mxu0 0
      %4926 = vmatprep.subr.bf16.mxu0 0
      %4927 = vmatpush1.bf16.msra.mxu0 0
      %4928 = vmatprep.subr.bf16.mxu0 0
      %4929 = vmatpush1.bf16.msra.mxu0 0
      %4930 = vmatprep.subr.bf16.mxu0 0
      %4931 = vmatpush1.bf16.msra.mxu0 0
      %4932 = vmatprep.subr.bf16.mxu0 0
      %4933 = vmatpush1.bf16.msra.mxu0 0
      %4934 = vmatprep.subr.bf16.mxu0 0
      %4935 = vmatpush1.bf16.msra.mxu0 0
      %4936 = vmatprep.mubr.bf16.mxu0 0
      %4937 = vmatmul.mubr.bf16.gmra.mrb[0].mxu0 %v4893
      %v4938 = vpop.f32.mrb[0].mxu0
      %v4939 = vadd.f32 0.0, %v4938
      %v4940 = vpop.f32.mrb[0].mxu0
      %v4941 = vpop.f32.mrb[0].mxu0
      %v4942 = vadd.f32 0.0, %v4941
      %v4943 = vpop.f32.mrb[0].mxu0
      %4944 = vmatprep.mubr.bf16.mxu0 0
      %4945 = vmatmul.mubr.bf16.gmra.mrb[0].mxu0 %v4896
      %v4946 = vpop.f32.mrb[0].mxu0
      %v4947 = vadd.f32 0.0, %v4946
      %v4948 = vpop.f32.mrb[0].mxu0
      %v4949 = vpop.f32.mrb[0].mxu0
      %v4950 = vadd.f32 0.0, %v4949
      %v4951 = vpop.f32.mrb[0].mxu0
      %4952 = vmatprep.mubr.bf16.mxu0 0
      %4953 = vmatmul.mubr.bf16.gmra.mrb[0].mxu0 %v4899
      %v4954 = vpop.f32.mrb[0].mxu0
      %v4955 = vadd.f32 0.0, %v4954
      %v4956 = vpop.f32.mrb[0].mxu0
      %v4957 = vpop.f32.mrb[0].mxu0
      %v4958 = vadd.f32 0.0, %v4957
      %v4959 = vpop.f32.mrb[0].mxu0
      %4960 = vmatprep.mubr.bf16.mxu0 0
      %4961 = vmatmul.mubr.bf16.gmra.mrb[0].mxu0 %v4902
      %v4962 = vpop.f32.mrb[0].mxu0
      %v4963 = vadd.f32 0.0, %v4962
      %v4964 = vpop.f32.mrb[0].mxu0
      %v4965 = vpop.f32.mrb[0].mxu0
      %v4966 = vpop.f32.mrb[0].mxu0
      %4967 = vdwg.mxu0
      %v4968 = vadd.f32 %v4844, %v4939
      %v4969 = vadd.f32 %v4845, %v4942
      %v4970 = vadd.f32 %v4846, %v4947
      %v4971 = vadd.f32 %v4847, %v4950
      %v4972 = vadd.f32 %v4848, %v4955
      %v4973 = vadd.f32 %v4849, %v4958
      %v4974 = vadd.f32 %v4850, %v4963
      %v4975 = vld [vmem:[%s8] sm:$0x1]
      %v4977 = vlaneseq
      %v4978 = vshrl.u32 %v4977, 7
      %v4979 = vsub.s32 0, %v4978
      %v4980 = vrot.slane %v4975, %v4979
      %v4982 = vadd.f32 %v4968, %v4980
      %v4983 = vadd.f32 %v4969, %v4980
      %v4984 = vadd.f32 %v4970, %v4980
      %v4985 = vadd.f32 %v4971, %v4980
      %v4986 = vadd.f32 %v4972, %v4980
      %v4987 = vadd.f32 %v4973, %v4980
      %v4988 = vadd.f32 %v4974, %v4980
      %v4989 = vmax.f32 %v4982, 0.0
      %v4990 = vmax.f32 %v4983, 0.0
      %v4991 = vmax.f32 %v4984, 0.0
      %v4992 = vmax.f32 %v4985, 0.0
      %v4993 = vmax.f32 %v4986, 0.0
      %v4994 = vmax.f32 %v4987, 0.0
      %v4995 = vmax.f32 %v4988, 0.0
      %vm4996 = vcmask 258048
      %4997 = vst.msk [vmem:[#allocation5] sm:$0x1f] %vm4996, %v4989
      %vm4998 = vcmask 261123
      %4999 = vst.msk [vmem:[#allocation5 + $0x2] sm:$0xf8] %vm4998, %v4990
      %vm5000 = vcmask 261126
      %5001 = vst.msk [vmem:[#allocation5 + $0x4] sm:$0xc0] %vm5000, %v4991
      %vm5002 = vcmask 256000
      %5003 = vst.msk [vmem:[#allocation5 + $0xc] sm:$0x7] %vm5002, %v4992
      %vm5004 = vcmask 259073
      %5005 = vst.msk [vmem:[#allocation5 + $0xe] sm:$0x3e] %vm5004, %v4993
      %vm5006 = vcmask 261124
      %5007 = vst.msk [vmem:[#allocation5 + $0x10] sm:$0xf0] %vm5006, %v4994
      %vm5008 = vcmask 253952
      %5009 = vst.msk [vmem:[#allocation5 + $0x18] sm:$0x1] %vm5008, %v4995
      %v5010 = vld [vmem:[#allocation5] sm:$0xff]
      %v5011 = vld [vmem:[#allocation5 + $0x8] sm:$0xff]
      %v5012 = vld [vmem:[#allocation5 + $0x10] sm:$0xff]
      %v5013 = vld [vmem:[#allocation5 + $0x18] sm:$0xff]
      %5014 = vxpose.xlu0.b32.start [1/16] %v5010, 128
      %5015 = vxpose.xlu0.b32.cont [2/16] %v5011, 128
      %5016 = vxpose.xlu0.b32.cont [3/16] %v5012, 128
      %5017 = vxpose.xlu0.b32.cont [4/16] %v5013, 128
      %5018 = vxpose.xlu0.b32.cont [5/16] 0.0, 128
      %5019 = vxpose.xlu0.b32.cont [6/16] 0.0, 128
      %5020 = vxpose.xlu0.b32.cont [7/16] 0.0, 128
      %5021 = vxpose.xlu0.b32.cont [8/16] 0.0, 128
      %5022 = vxpose.xlu0.b32.cont [9/16] 0.0, 128
      %5023 = vxpose.xlu0.b32.cont [10/16] 0.0, 128
      %5024 = vxpose.xlu0.b32.cont [11/16] 0.0, 128
      %5025 = vxpose.xlu0.b32.cont [12/16] 0.0, 128
      %5026 = vxpose.xlu0.b32.cont [13/16] 0.0, 128
      %5027 = vxpose.xlu0.b32.cont [14/16] 0.0, 128
      %5028 = vxpose.xlu0.b32.cont [15/16] 0.0, 128
      %5029 = vxpose.xlu0.b32.end [16/16] 0.0, 128
      %v5030 = vpop.trf.xlu0
      %v5031 = vpop.trf.xlu0
      %v5032 = vpop.trf.xlu0
      %v5033 = vpop.trf.xlu0
      %v5034 = vpop.trf.xlu0
      %v5035 = vpop.trf.xlu0
      %v5036 = vpop.trf.xlu0
      %v5037 = vpop.trf.xlu0
      %v5038 = vpop.trf.xlu0
      %v5039 = vpop.trf.xlu0
      %v5040 = vpop.trf.xlu0
      %v5041 = vpop.trf.xlu0
      %v5042 = vpop.trf.xlu0
      %v5043 = vpop.trf.xlu0
      %v5044 = vpop.trf.xlu0
      %v5045 = vpop.trf.xlu0
      %vm5046 = vcmask 203776
      %5047 = vst.msk [vmem:[%s332] sm:$0xff] %vm5046, %v5030
      %5048 = vst.msk [vmem:[%s332 + $0x8] sm:$0xff] %vm5046, %v5031
      %5049 = vst.msk [vmem:[%s332 + $0x10] sm:$0xff] %vm5046, %v5032
      %5050 = vst.msk [vmem:[%s332 + $0x18] sm:$0xff] %vm5046, %v5033
      %p5051 = scmp.lt.s32.totalorder %s20, 1
      %s5052 = scalar_select %p5051, %s20, 1
      %s5053 = smul.addr %s5052, 4
      %s5054 = smul.addr %s5053, 8
      %s5055 = scalar_lea.vmem %s9, %s5054
      // Predicated region
      $region57: #{encoder_forward.1} parent=55 // pred_check
        %p5056 = pneg %p232
      $region58: #{encoder_forward.1} parent=55 // pred_check_branch
        %5058 = sbr.rel (%p5056) target = $region60
      $region59: #{encoder_forward.1} parent=55 // pred_region
        _
      $region60: #{encoder_forward.1} parent=55 // pred_fallthru
        _
    $region56: #{encoder_forward.1} parent=5 // pred_fallthru
      _
    %p5059 = scmp.le.s32.totalorder 2, %s15
    // Predicated region
    $region61: #{encoder_forward.1} parent=5 // pred_check
      %p5060 = pneg %p5059
    $region62: #{encoder_forward.1} parent=5 // pred_check_branch
      %5062 = sbr.rel (%p5060) target = $region64
    $region63: #{encoder_forward.1} parent=5 // pred_region
      %s5063 = ssub.s32 %s15, 2
      // Predicated region
      $region65: #{encoder_forward.1} parent=63 // pred_check
        %p5064 = pneg %p238
      $region66: #{encoder_forward.1} parent=63 // pred_check_branch
        %5066 = sbr.rel (%p5064) target = $region68
      $region67: #{encoder_forward.1} parent=63 // pred_region
        %p5067 = scmp.lt.s32.totalorder %s21, 1
        %s5068 = scalar_select %p5067, %s21, 1
        %s5069 = smul.addr %s5068, 4
        %s5070 = smul.addr %s5069, 8
        %s5071 = scalar_lea.vmem %s9, %s5070
      $region68: #{encoder_forward.1} parent=63 // pred_fallthru
        _
    $region64: #{encoder_forward.1} parent=5 // pred_fallthru
      _
  $region6: #{encoder_forward.1} parent=0 // loop_footer
    %s19 = sadd.s32 1, %s15
  $region7: #{encoder_forward.1} parent=0 // loop_footer_branch
    %14 = sbr.rel target = $region3
  $region8: #{encoder_forward.1} parent=0 // loop_exit
    _

</llo_original>
